<compile_context>
chip_gen: v7x
topology: tpu7x:2x2x1
jax: 0.10.0
libtpu: 0.0.40
codegen_flags: <defaults>
</compile_context>

<pallas_src>
import functools

import jax
import jax.numpy as jnp
from jax.experimental import pallas as pl
from jax.experimental.pallas import tpu as pltpu

EPS = 1e-5
LANE = 128
TN_MAX = 256                          # Cout tile (matches 2x256 MXU on v6e/v7x)
TM_DEFAULT = 512                      # >=512-row tiles ~ HBM roofline on v6e
VMEM_LIMIT = 48 * 1024 * 1024         # fits v7x (64 MiB); headroom on v5e/v6e


def _round_up(x, m):
    return (x + m - 1) // m * m


def _pad_axis(a, axis, target):
    if a.shape[axis] == target:
        return a
    cfg = [(0, 0)] * a.ndim
    cfg[axis] = (0, target - a.shape[axis])
    return jnp.pad(a, cfg)


def _pad_vec(v, c_pad):
    return _pad_axis(v.reshape(1, -1).astype(jnp.float32), 1, c_pad)


# ----------------------------------------------------------------------------
# Kernel A: tiled matmul(s) + per-channel sum / sumsq accumulation.
# Grid = (Cout tiles ["parallel"], M tiles ["arbitrary" reduction]).
# ----------------------------------------------------------------------------
def _stats_kernel_single(p_ref, w_ref, y_ref, sums_ref, acc_ref):
    mt = pl.program_id(1)

    @pl.when(mt == 0)
    def _():
        acc_ref[...] = jnp.zeros_like(acc_ref)

    y = jnp.dot(p_ref[...], w_ref[...], preferred_element_type=jnp.float32)
    y_ref[...] = y.astype(y_ref.dtype)                     # bf16 HBM writeback
    acc_ref[0:1, :] = acc_ref[0:1, :] + jnp.sum(y, axis=0, keepdims=True)
    acc_ref[1:2, :] = acc_ref[1:2, :] + jnp.sum(y * y, axis=0, keepdims=True)

    @pl.when(mt == pl.num_programs(1) - 1)
    def _():
        sums_ref[...] = acc_ref[...]


def _stats_kernel_dual(p_ref, w_ref, pp_ref, wp_ref,
                       fx_ref, sk_ref, sums_ref, acc_ref):
    mt = pl.program_id(1)

    @pl.when(mt == 0)
    def _():
        acc_ref[...] = jnp.zeros_like(acc_ref)

    fx = jnp.dot(p_ref[...], w_ref[...], preferred_element_type=jnp.float32)
    sk = jnp.dot(pp_ref[...], wp_ref[...], preferred_element_type=jnp.float32)
    fx_ref[...] = fx.astype(fx_ref.dtype)
    sk_ref[...] = sk.astype(sk_ref.dtype)
    acc_ref[0:1, :] = acc_ref[0:1, :] + jnp.sum(fx, axis=0, keepdims=True)
    acc_ref[1:2, :] = acc_ref[1:2, :] + jnp.sum(fx * fx, axis=0, keepdims=True)
    acc_ref[2:3, :] = acc_ref[2:3, :] + jnp.sum(sk, axis=0, keepdims=True)
    acc_ref[3:4, :] = acc_ref[3:4, :] + jnp.sum(sk * sk, axis=0, keepdims=True)

    @pl.when(mt == pl.num_programs(1) - 1)
    def _():
        sums_ref[...] = acc_ref[...]


def conv_bn_stats(p, w, tm, proj_p=None, proj_w=None):
    """p: (M, K) bf16, w: (K, Cpad) bf16.  Optional stride-2 projection matmul
    shares the same M tiling.  Returns (y[, sk], sums): y/sk are (Mpad, Cpad)
    bf16 conv outputs, sums is (n_stats, Cpad) f32 per-channel sums."""
    m, k = p.shape
    c = w.shape[1]
    mp = _round_up(m, tm)
    p = _pad_axis(p, 0, mp)
    tn = min(c, TN_MAX)
    grid = (c // tn, mp // tm)
    cp = pltpu.CompilerParams(
        dimension_semantics=("parallel", "arbitrary"),
        vmem_limit_bytes=VMEM_LIMIT)

    if proj_p is not None:
        kp = proj_p.shape[1]
        proj_p = _pad_axis(proj_p, 0, mp)
        n_stats = 4
        flops = 2 * mp * c * (k + kp)
        bytes_acc = ((c // tn) * mp * (k + kp) * 2 + (k + kp) * c * 2
                     + 2 * mp * c * 2 + n_stats * c * 4)
        return pl.pallas_call(
            _stats_kernel_dual,
            out_shape=(jax.ShapeDtypeStruct((mp, c), jnp.bfloat16),
                       jax.ShapeDtypeStruct((mp, c), jnp.bfloat16),
                       jax.ShapeDtypeStruct((n_stats, c), jnp.float32)),
            grid=grid,
            in_specs=[pl.BlockSpec((tm, k), lambda ct, mt: (mt, 0)),
                      pl.BlockSpec((k, tn), lambda ct, mt: (0, ct)),
                      pl.BlockSpec((tm, kp), lambda ct, mt: (mt, 0)),
                      pl.BlockSpec((kp, tn), lambda ct, mt: (0, ct))],
            out_specs=(pl.BlockSpec((tm, tn), lambda ct, mt: (mt, ct)),
                       pl.BlockSpec((tm, tn), lambda ct, mt: (mt, ct)),
                       pl.BlockSpec((n_stats, tn), lambda ct, mt: (0, ct))),
            scratch_shapes=[pltpu.VMEM((n_stats, tn), jnp.float32)],
            compiler_params=cp,
            cost_estimate=pl.CostEstimate(flops=flops, transcendentals=0,
                                          bytes_accessed=bytes_acc),
        )(p, w, proj_p, proj_w)

    n_stats = 2
    flops = 2 * mp * c * k
    bytes_acc = (c // tn) * mp * k * 2 + k * c * 2 + mp * c * 2 + n_stats * c * 4
    return pl.pallas_call(
        _stats_kernel_single,
        out_shape=(jax.ShapeDtypeStruct((mp, c), jnp.bfloat16),
                   jax.ShapeDtypeStruct((n_stats, c), jnp.float32)),
        grid=grid,
        in_specs=[pl.BlockSpec((tm, k), lambda ct, mt: (mt, 0)),
                  pl.BlockSpec((k, tn), lambda ct, mt: (0, ct))],
        out_specs=(pl.BlockSpec((tm, tn), lambda ct, mt: (mt, ct)),
                   pl.BlockSpec((n_stats, tn), lambda ct, mt: (0, ct))),
        scratch_shapes=[pltpu.VMEM((n_stats, tn), jnp.float32)],
        compiler_params=cp,
        cost_estimate=pl.CostEstimate(flops=flops, transcendentals=0,
                                      bytes_accessed=bytes_acc),
    )(p, w)


# ----------------------------------------------------------------------------
# Kernel B: BatchNorm normalize (+ optional projection-BN / identity skip)
# (+ optional ReLU), elementwise, tiled over M, "parallel" grid.
# ----------------------------------------------------------------------------
def _make_norm_kernel(inv_m, eps, add_skip, proj_bn, relu):
    def kernel(*refs):
        if proj_bn:
            y_ref, sk_ref, sums_ref, g_ref, be_ref, gp_ref, bep_ref, o_ref = refs
        elif add_skip:
            y_ref, sk_ref, sums_ref, g_ref, be_ref, o_ref = refs
            gp_ref = bep_ref = None
        else:
            y_ref, sums_ref, g_ref, be_ref, o_ref = refs
            sk_ref = gp_ref = bep_ref = None

        sums = sums_ref[...]
        # Per-channel scale/shift computed once per tile -> one FMA per element.
        mean = sums[0:1, :] * inv_m
        var = jnp.maximum(sums[1:2, :] * inv_m - mean * mean, 0.0)
        scale = g_ref[...] * jax.lax.rsqrt(var + eps)
        shift = be_ref[...] - mean * scale
        y = y_ref[...].astype(jnp.float32) * scale + shift

        if proj_bn:
            mean_p = sums[2:3, :] * inv_m
            var_p = jnp.maximum(sums[3:4, :] * inv_m - mean_p * mean_p, 0.0)
            scale_p = gp_ref[...] * jax.lax.rsqrt(var_p + eps)
            shift_p = bep_ref[...] - mean_p * scale_p
            y = y + sk_ref[...].astype(jnp.float32) * scale_p + shift_p
        elif add_skip:
            y = y + sk_ref[...].astype(jnp.float32)

        if relu:
            y = jnp.maximum(y, 0.0)
        o_ref[...] = y.astype(o_ref.dtype)

    return kernel


def bn_norm(y, sums, gamma, beta, m_true, tm, *, skip=None,
            proj_gamma=None, proj_beta=None, relu=False, out_dtype=jnp.float32):
    mp, c = y.shape
    grid = (mp // tm,)
    add_skip = skip is not None
    proj_bn = proj_gamma is not None
    assert not proj_bn or add_skip
    n_stats = sums.shape[0]

    inputs = [y]
    in_specs = [pl.BlockSpec((tm, c), lambda i: (i, 0))]
    if add_skip:
        inputs.append(skip)
        in_specs.append(pl.BlockSpec((tm, c), lambda i: (i, 0)))
    inputs += [sums, gamma, beta]
    in_specs += [pl.BlockSpec((n_stats, c), lambda i: (0, 0)),
                 pl.BlockSpec((1, c), lambda i: (0, 0)),
                 pl.BlockSpec((1, c), lambda i: (0, 0))]
    if proj_bn:
        inputs += [proj_gamma, proj_beta]
        in_specs += [pl.BlockSpec((1, c), lambda i: (0, 0)),
                     pl.BlockSpec((1, c), lambda i: (0, 0))]

    kernel = _make_norm_kernel(1.0 / float(m_true), EPS, add_skip, proj_bn, relu)
    out_bytes = 2 if out_dtype == jnp.bfloat16 else 4
    bytes_acc = ((1 + int(add_skip)) * mp * c * 2 + mp * c * out_bytes
                 + (n_stats + 2 + 2 * int(proj_bn)) * c * 4)
    return pl.pallas_call(
        kernel,
        out_shape=jax.ShapeDtypeStruct((mp, c), out_dtype),
        grid=grid,
        in_specs=in_specs,
        out_specs=pl.BlockSpec((tm, c), lambda i: (i, 0)),
        compiler_params=pltpu.CompilerParams(
            dimension_semantics=("parallel",),
            vmem_limit_bytes=VMEM_LIMIT),
        cost_estimate=pl.CostEstimate(flops=(4 + 4 * int(add_skip)) * mp * c,
                                      transcendentals=(1 + int(proj_bn)) * c,
                                      bytes_accessed=bytes_acc),
    )(*inputs)


# ----------------------------------------------------------------------------
# JAX glue: im2col patch extraction (NHWC, bf16 in -> bf16 patches) and
# weight flattening / lane padding.
# ----------------------------------------------------------------------------
def im2col(x_nhwc, kh, kw, stride, padding):
    n, h, w, c = x_nhwc.shape
    xp = jnp.pad(x_nhwc, ((0, 0), (padding, padding), (padding, padding), (0, 0)))
    h_out = (h + 2 * padding - kh) // stride + 1
    w_out = (w + 2 * padding - kw) // stride + 1
    cols = []
    for dh in range(kh):
        for dw in range(kw):
            patch = xp[:,
                       dh:dh + stride * (h_out - 1) + 1:stride,
                       dw:dw + stride * (w_out - 1) + 1:stride,
                       :]
            cols.append(patch)
    patches = jnp.concatenate(cols, axis=-1)          # (N, Ho, Wo, KH*KW*Cin)
    return patches.reshape(n * h_out * w_out, kh * kw * c), (n, h_out, w_out)


def flatten_weight(w_oihw, c_pad):
    """PyTorch OIHW -> (KH*KW*Cin, Cout_pad) bf16, matching im2col column order."""
    cout, cin, kh, kw = w_oihw.shape
    w2d = jnp.transpose(w_oihw, (2, 3, 1, 0)).reshape(kh * kw * cin, cout)
    return _pad_axis(w2d, 1, c_pad).astype(jnp.bfloat16)


# ----------------------------------------------------------------------------
# ResidualBlock forward (matches the PyTorch module semantics, training-mode BN)
# ----------------------------------------------------------------------------
def residual_block_forward(x_nchw, params, stride, tm=TM_DEFAULT):
    x = jnp.transpose(x_nchw, (0, 2, 3, 1)).astype(jnp.float32)   # NCHW -> NHWC
    x_bf = x.astype(jnp.bfloat16)        # cast BEFORE im2col: bf16 patch matrices
    n, h, w, cin = x.shape
    cmid = params["w1"].shape[0]
    c_pad = _round_up(cmid, LANE)        # lane-dense stores (see review re C=64)

    g1, be1 = _pad_vec(params["g1"], c_pad), _pad_vec(params["be1"], c_pad)
    g2, be2 = _pad_vec(params["g2"], c_pad), _pad_vec(params["be2"], c_pad)

    # --- Fx stage 1: conv3x3 s1 p1 -> BN -> ReLU (a1 kept in bf16) ---
    p1, (_, h1, w1) = im2col(x_bf, 3, 3, 1, 1)
    m1 = p1.shape[0]
    tm1 = min(tm, _round_up(m1, 128))
    y1, sums1 = conv_bn_stats(p1, flatten_weight(params["w1"], c_pad), tm1)
    a1 = bn_norm(y1, sums1, g1, be1, m1, tm1, relu=True, out_dtype=jnp.bfloat16)
    a1 = a1[:m1, :cmid].reshape(n, h1, w1, cmid)

    # --- Fx stage 2 (conv3x3 stride p1 + BN), fused with skip branch + ReLU ---
    p2, (_, h2, w2) = im2col(a1, 3, 3, stride, 1)
    m2 = p2.shape[0]
    tm2 = min(tm, _round_up(m2, 128))
    w2_2d = flatten_weight(params["w2"], c_pad)

    if stride == 2:
        pp, _ = im2col(x_bf, 1, 1, 2, 0)              # 1x1 s2 projection patches
        fx, sk, sums = conv_bn_stats(
            p2, w2_2d, tm2,
            proj_p=pp, proj_w=flatten_weight(params["wp"], c_pad))
        out = bn_norm(fx, sums, g2, be2, m2, tm2, skip=sk,
                      proj_gamma=_pad_vec(params["gp"], c_pad),
                      proj_beta=_pad_vec(params["bep"], c_pad),
                      relu=True, out_dtype=jnp.float32)
    else:
        assert cin == cmid, "identity skip requires in_channels == channels"
        fx, sums = conv_bn_stats(p2, w2_2d, tm2)
        skip = _pad_axis(_pad_axis(x_bf.reshape(m2, cin), 1, c_pad),
                         0, fx.shape[0])
        out = bn_norm(fx, sums, g2, be2, m2, tm2, skip=skip,
                      relu=True, out_dtype=jnp.float32)

    out = out[:m2, :cmid].reshape(n, h2, w2, cmid)
    return jnp.transpose(out, (0, 3, 1, 2))           # NHWC -> NCHW


# ----------------------------------------------------------------------------
# Pure-JAX reference (bf16 matmul inputs / f32 accum to match MXU numerics)
# ----------------------------------------------------------------------------
def _ref_conv(x, w_oihw, b, stride, padding):
    w_hwio = jnp.transpose(w_oihw, (2, 3, 1, 0))
    y = jax.lax.conv_general_dilated(
        x.astype(jnp.bfloat16), w_hwio.astype(jnp.bfloat16),
        (stride, stride), [(padding, padding), (padding, padding)],
        dimension_numbers=("NHWC", "HWIO", "NHWC"),
        preferred_element_type=jnp.float32)
    return y + b


def _ref_bn(y, gamma, beta):
    mu = jnp.mean(y, axis=(0, 1, 2), keepdims=True)
    var = jnp.mean(jnp.square(y - mu), axis=(0, 1, 2), keepdims=True)
    return (y - mu) * jax.lax.rsqrt(var + EPS) * gamma + beta


def reference_forward(x_nchw, params, stride):
    x = jnp.transpose(x_nchw, (0, 2, 3, 1)).astype(jnp.float32)
    y = _ref_conv(x, params["w1"], params["b1"], 1, 1)
    y = jnp.maximum(_ref_bn(y, params["g1"], params["be1"]), 0.0)
    fx = _ref_conv(y, params["w2"], params["b2"], stride, 1)
    fx = _ref_bn(fx, params["g2"], params["be2"])
    if stride == 2:
        sk = _ref_conv(x, params["wp"], params["bp"], 2, 0)
        sk = _ref_bn(sk, params["gp"], params["bep"])
    else:
        sk = x
    out = jnp.maximum(sk + fx, 0.0)
    return jnp.transpose(out, (0, 3, 1, 2))


# ----------------------------------------------------------------------------
def init_params(key, in_channels, channels):
    ks = jax.random.split(key, 12)
    f32 = jnp.float32
    return {
        "w1": 0.1 * jax.random.normal(ks[0], (channels, in_channels, 3, 3), f32),
        "b1": 0.05 * jax.random.normal(ks[1], (channels,), f32),
        "g1": 1.0 + 0.1 * jax.random.normal(ks[2], (channels,), f32),
        "be1": 0.05 * jax.random.normal(ks[3], (channels,), f32),
        "w2": 0.1 * jax.random.normal(ks[4], (channels, channels, 3, 3), f32),
        "b2": 0.05 * jax.random.normal(ks[5], (channels,), f32),
        "g2": 1.0 + 0.1 * jax.random.normal(ks[6], (channels,), f32),
        "be2": 0.05 * jax.random.normal(ks[7], (channels,), f32),
        "wp": 0.1 * jax.random.normal(ks[8], (channels, in_channels, 1, 1), f32),
        "bp": 0.05 * jax.random.normal(ks[9], (channels,), f32),
        "gp": 1.0 + 0.1 * jax.random.normal(ks[10], (channels,), f32),
        "bep": 0.05 * jax.random.normal(ks[11], (channels,), f32),
    }


if __name__ == "__main__":
    key = jax.random.PRNGKey(0)
    k_x, k_p, k_p2 = jax.random.split(key, 3)

    # Tolerance note: intermediates (patches, y, a1, skip) are intentionally
    # stored in bf16 for HBM-bandwidth reasons, so we allow ~2-3e-2 vs the
    # f32-intermediate reference; real bugs produce O(1) errors.
    RTOL, ATOL = 2e-2, 3e-2

    # --- Test 1: stride-2 block with 1x1 projection skip (downsampling) ---
    N, CIN, H, W = 2, 4, 16, 16
    CMID = 8
    x = jax.random.normal(k_x, (N, CIN, H, W), jnp.float32)   # PyTorch NCHW input
    params = init_params(k_p, CIN, CMID)
    fwd2 = jax.jit(functools.partial(residual_block_forward, stride=2))
    out2 = jax.block_until_ready(fwd2(x, params))
    ref2 = reference_forward(x, params, 2)
    assert out2.shape == (N, CMID, H // 2, W // 2), out2.shape
    assert jnp.allclose(out2, ref2, rtol=RTOL, atol=ATOL), \
        float(jnp.max(jnp.abs(out2 - ref2)))

    # --- Test 2: stride-1 block with identity skip ---
    x1 = jax.random.normal(k_x, (N, CMID, H, W), jnp.float32)
    params1 = init_params(k_p2, CMID, CMID)
    fwd1 = jax.jit(functools.partial(residual_block_forward, stride=1))
    out1 = jax.block_until_ready(fwd1(x1, params1))
    ref1 = reference_forward(x1, params1, 1)
    assert out1.shape == (N, CMID, H, W), out1.shape
    assert jnp.allclose(out1, ref1, rtol=RTOL, atol=ATOL), \
        float(jnp.max(jnp.abs(out1 - ref1)))

    print("KERNEL_OK")
</pallas_src>

<mosaic_0001>
module attributes {stable_mosaic.version = 11 : i64} {
  func.func @_stats_kernel_single(%arg0: i32, %arg1: i32, %arg2: memref<512x36xbf16, #tpu.memory_space<vmem>>, %arg3: memref<36x128xbf16, #tpu.memory_space<vmem>>, %arg4: memref<512x128xbf16, #tpu.memory_space<vmem>>, %arg5: memref<2x128xf32, #tpu.memory_space<vmem>>, %arg6: memref<2x128xf32, #tpu.memory_space<vmem>>) attributes {dimension_semantics = [#tpu.dimension_semantics<parallel>, #tpu.dimension_semantics<arbitrary>], iteration_bounds = array<i64: 1, 1>, scalar_prefetch = 0 : i64, scratch_operands = 1 : i64, tpu.core_type = #tpu.core_type<tc>, window_params = [{transform_indices = @transform_0, window_bounds = array<i64: 512, 36>}, {transform_indices = @transform_1, window_bounds = array<i64: 36, 128>}, {transform_indices = @transform_2, window_bounds = array<i64: 512, 128>}, {transform_indices = @transform_3, window_bounds = array<i64: 2, 128>}]} {
    %c0_i32 = arith.constant 0 : i32
    %0 = arith.cmpi eq, %arg1, %c0_i32 : i32
    %1 = arith.extui %0 : i1 to i32
    %c0_i32_0 = arith.constant 0 : i32
    %2 = arith.cmpi ne, %1, %c0_i32_0 : i32
    scf.if %2 {
      %cst_17 = arith.constant 0.000000e+00 : f32
      %22 = vector.broadcast %cst_17 : f32 to vector<2x128xf32>
      %c0_18 = arith.constant 0 : index
      %c0_19 = arith.constant 0 : index
      %23 = vector.load %arg6[%c0_18, %c0_19] : memref<2x128xf32, #tpu.memory_space<vmem>>, vector<2x128xf32>
      tpu.vector_store %arg6[%c0_18, %c0_19], %22 {strides = array<i32>} : memref<2x128xf32, #tpu.memory_space<vmem>>, vector<2x128xf32>,
    } else {
    }
    %c0 = arith.constant 0 : index
    %c0_1 = arith.constant 0 : index
    %3 = vector.load %arg2[%c0, %c0_1] : memref<512x36xbf16, #tpu.memory_space<vmem>>, vector<512x36xbf16>
    %c0_2 = arith.constant 0 : index
    %c0_3 = arith.constant 0 : index
    %4 = vector.load %arg3[%c0_2, %c0_3] : memref<36x128xbf16, #tpu.memory_space<vmem>>, vector<36x128xbf16>
    %cst = arith.constant dense<0.000000e+00> : vector<512x128xf32>
    %5 = tpu.matmul %3, %4, %cst {dimension_numbers = #tpu.dot_dimension_numbers<[1], [0], [0], [1], [0, 0, 1, 1], [], []>} : vector<512x36xbf16>, vector<36x128xbf16>, vector<512x128xf32> -> vector<512x128xf32>
    %6 = arith.truncf %5 : vector<512x128xf32> to vector<512x128xbf16>
    %c0_4 = arith.constant 0 : index
    %c0_5 = arith.constant 0 : index
    %7 = vector.load %arg4[%c0_4, %c0_5] : memref<512x128xbf16, #tpu.memory_space<vmem>>, vector<512x128xbf16>
    tpu.vector_store %arg4[%c0_4, %c0_5], %6 {strides = array<i32>} : memref<512x128xbf16, #tpu.memory_space<vmem>>, vector<512x128xbf16>,
    %c0_6 = arith.constant 0 : index
    %c0_7 = arith.constant 0 : index
    %8 = vector.load %arg6[%c0_6, %c0_7] : memref<2x128xf32, #tpu.memory_space<vmem>>, vector<1x128xf32>
    %cst_8 = arith.constant dense<0.000000e+00> : vector<128xf32>
    %9 = vector.multi_reduction <add>, %5, %cst_8 [0] : vector<512x128xf32> to vector<128xf32>
    %10 = vector.shape_cast %9 : vector<128xf32> to vector<1x128xf32>
    %11 = arith.addf %8, %10 : vector<1x128xf32>
    %c0_9 = arith.constant 0 : index
    %c0_10 = arith.constant 0 : index
    %12 = vector.load %arg6[%c0_9, %c0_10] : memref<2x128xf32, #tpu.memory_space<vmem>>, vector<1x128xf32>
    tpu.vector_store %arg6[%c0_9, %c0_10], %11 {strides = array<i32>} : memref<2x128xf32, #tpu.memory_space<vmem>>, vector<1x128xf32>,
    %c1 = arith.constant 1 : index
    %c0_11 = arith.constant 0 : index
    %13 = vector.load %arg6[%c1, %c0_11] : memref<2x128xf32, #tpu.memory_space<vmem>>, vector<1x128xf32>
    %14 = arith.mulf %5, %5 : vector<512x128xf32>
    %cst_12 = arith.constant dense<0.000000e+00> : vector<128xf32>
    %15 = vector.multi_reduction <add>, %14, %cst_12 [0] : vector<512x128xf32> to vector<128xf32>
    %16 = vector.shape_cast %15 : vector<128xf32> to vector<1x128xf32>
    %17 = arith.addf %13, %16 : vector<1x128xf32>
    %c1_13 = arith.constant 1 : index
    %c0_14 = arith.constant 0 : index
    %18 = vector.load %arg6[%c1_13, %c0_14] : memref<2x128xf32, #tpu.memory_space<vmem>>, vector<1x128xf32>
    tpu.vector_store %arg6[%c1_13, %c0_14], %17 {strides = array<i32>} : memref<2x128xf32, #tpu.memory_space<vmem>>, vector<1x128xf32>,
    %c0_i32_15 = arith.constant 0 : i32
    %19 = arith.cmpi eq, %arg1, %c0_i32_15 : i32
    %20 = arith.extui %19 : i1 to i32
    %c0_i32_16 = arith.constant 0 : i32
    %21 = arith.cmpi ne, %20, %c0_i32_16 : i32
    scf.if %21 {
      %c0_17 = arith.constant 0 : index
      %c0_18 = arith.constant 0 : index
      %22 = vector.load %arg6[%c0_17, %c0_18] : memref<2x128xf32, #tpu.memory_space<vmem>>, vector<2x128xf32>
      %c0_19 = arith.constant 0 : index
      %c0_20 = arith.constant 0 : index
      %23 = vector.load %arg5[%c0_19, %c0_20] : memref<2x128xf32, #tpu.memory_space<vmem>>, vector<2x128xf32>
      tpu.vector_store %arg5[%c0_19, %c0_20], %22 {strides = array<i32>} : memref<2x128xf32, #tpu.memory_space<vmem>>, vector<2x128xf32>,
    } else {
    }
    return
  }
  func.func @transform_0(%arg0: i32, %arg1: i32) -> (i32, i32) {
    %c0_i32 = arith.constant 0 : i32
    %c0_i32_0 = arith.constant 0 : i32
    return %arg1, %c0_i32 : i32, i32
  }
  func.func @transform_1(%arg0: i32, %arg1: i32) -> (i32, i32) {
    %c0_i32 = arith.constant 0 : i32
    %c0_i32_0 = arith.constant 0 : i32
    return %c0_i32, %arg0 : i32, i32
  }
  func.func @transform_2(%arg0: i32, %arg1: i32) -> (i32, i32) {
    %c0_i32 = arith.constant 0 : i32
    return %arg1, %arg0 : i32, i32
  }
  func.func @transform_3(%arg0: i32, %arg1: i32) -> (i32, i32) {
    %c0_i32 = arith.constant 0 : i32
    %c0_i32_0 = arith.constant 0 : i32
    return %c0_i32, %arg0 : i32, i32
  }
}

module attributes {stable_mosaic.version = 11 : i64} {
  func.func @kernel(%arg0: i32, %arg1: memref<512x128xbf16, #tpu.memory_space<vmem>>, %arg2: memref<2x128xf32, #tpu.memory_space<vmem>>, %arg3: memref<1x128xf32, #tpu.memory_space<vmem>>, %arg4: memref<1x128xf32, #tpu.memory_space<vmem>>, %arg5: memref<512x128xbf16, #tpu.memory_space<vmem>>) attributes {dimension_semantics = [#tpu.dimension_semantics<parallel>], iteration_bounds = array<i64: 1>, scalar_prefetch = 0 : i64, scratch_operands = 0 : i64, tpu.core_type = #tpu.core_type<tc>, window_params = [{transform_indices = @transform_0, window_bounds = array<i64: 512, 128>}, {pipeline_mode = #tpu.pipeline_mode<synchronous>, transform_indices = @transform_1, window_bounds = array<i64: 2, 128>}, {pipeline_mode = #tpu.pipeline_mode<synchronous>, transform_indices = @transform_2, window_bounds = array<i64: 1, 128>}, {pipeline_mode = #tpu.pipeline_mode<synchronous>, transform_indices = @transform_3, window_bounds = array<i64: 1, 128>}, {transform_indices = @transform_4, window_bounds = array<i64: 512, 128>}]} {
    %c0 = arith.constant 0 : index
    %c0_0 = arith.constant 0 : index
    %0 = vector.load %arg2[%c0, %c0_0] : memref<2x128xf32, #tpu.memory_space<vmem>>, vector<2x128xf32>
    %1 = vector.extract_strided_slice %0 {offsets = [0, 0], sizes = [1, 128], strides = [1, 1]} : vector<2x128xf32> to vector<1x128xf32>
    %cst = arith.constant 0.001953125 : f32
    %2 = vector.broadcast %cst : f32 to vector<1x128xf32>
    %3 = arith.mulf %1, %2 : vector<1x128xf32>
    %4 = vector.extract_strided_slice %0 {offsets = [1, 0], sizes = [1, 128], strides = [1, 1]} : vector<2x128xf32> to vector<1x128xf32>
    %cst_1 = arith.constant 0.001953125 : f32
    %5 = vector.broadcast %cst_1 : f32 to vector<1x128xf32>
    %6 = arith.mulf %4, %5 : vector<1x128xf32>
    %7 = arith.mulf %3, %3 : vector<1x128xf32>
    %8 = arith.subf %6, %7 : vector<1x128xf32>
    %cst_2 = arith.constant 0.000000e+00 : f32
    %9 = vector.broadcast %cst_2 : f32 to vector<1x128xf32>
    %10 = arith.maximumf %8, %9 : vector<1x128xf32>
    %c0_3 = arith.constant 0 : index
    %c0_4 = arith.constant 0 : index
    %11 = vector.load %arg3[%c0_3, %c0_4] : memref<1x128xf32, #tpu.memory_space<vmem>>, vector<1x128xf32>
    %cst_5 = arith.constant 9.99999974E-6 : f32
    %12 = vector.broadcast %cst_5 : f32 to vector<1x128xf32>
    %13 = arith.addf %10, %12 : vector<1x128xf32>
    %14 = math.rsqrt %13 : vector<1x128xf32>
    %15 = arith.mulf %11, %14 : vector<1x128xf32>
    %c0_6 = arith.constant 0 : index
    %c0_7 = arith.constant 0 : index
    %16 = vector.load %arg4[%c0_6, %c0_7] : memref<1x128xf32, #tpu.memory_space<vmem>>, vector<1x128xf32>
    %17 = arith.mulf %3, %15 : vector<1x128xf32>
    %18 = arith.subf %16, %17 : vector<1x128xf32>
    %c0_8 = arith.constant 0 : index
    %c0_9 = arith.constant 0 : index
    %19 = vector.load %arg1[%c0_8, %c0_9] : memref<512x128xbf16, #tpu.memory_space<vmem>>, vector<512x128xbf16>
    %20 = arith.extf %19 : vector<512x128xbf16> to vector<512x128xf32>
    %21 = vector.broadcast %15 : vector<1x128xf32> to vector<512x128xf32>
    %22 = arith.mulf %20, %21 : vector<512x128xf32>
    %23 = vector.broadcast %18 : vector<1x128xf32> to vector<512x128xf32>
    %24 = arith.addf %22, %23 : vector<512x128xf32>
    %cst_10 = arith.constant 0.000000e+00 : f32
    %25 = vector.broadcast %cst_10 : f32 to vector<512x128xf32>
    %26 = arith.maximumf %24, %25 : vector<512x128xf32>
    %27 = arith.truncf %26 : vector<512x128xf32> to vector<512x128xbf16>
    %c0_11 = arith.constant 0 : index
    %c0_12 = arith.constant 0 : index
    %28 = vector.load %arg5[%c0_11, %c0_12] : memref<512x128xbf16, #tpu.memory_space<vmem>>, vector<512x128xbf16>
    tpu.vector_store %arg5[%c0_11, %c0_12], %27 {strides = array<i32>} : memref<512x128xbf16, #tpu.memory_space<vmem>>, vector<512x128xbf16>,
    return
  }
  func.func @transform_0(%arg0: i32) -> (i32, i32) {
    %c0_i32 = arith.constant 0 : i32
    %c0_i32_0 = arith.constant 0 : i32
    return %arg0, %c0_i32 : i32, i32
  }
  func.func @transform_1(%arg0: i32) -> (i32, i32) {
    %c0_i32 = arith.constant 0 : i32
    %c0_i32_0 = arith.constant 0 : i32
    %c0_i32_1 = arith.constant 0 : i32
    return %c0_i32, %c0_i32_0 : i32, i32
  }
  func.func @transform_2(%arg0: i32) -> (i32, i32) {
    %c0_i32 = arith.constant 0 : i32
    %c0_i32_0 = arith.constant 0 : i32
    %c0_i32_1 = arith.constant 0 : i32
    return %c0_i32, %c0_i32_0 : i32, i32
  }
  func.func @transform_3(%arg0: i32) -> (i32, i32) {
    %c0_i32 = arith.constant 0 : i32
    %c0_i32_0 = arith.constant 0 : i32
    %c0_i32_1 = arith.constant 0 : i32
    return %c0_i32, %c0_i32_0 : i32, i32
  }
  func.func @transform_4(%arg0: i32) -> (i32, i32) {
    %c0_i32 = arith.constant 0 : i32
    %c0_i32_0 = arith.constant 0 : i32
    return %arg0, %c0_i32 : i32, i32
  }
}

module attributes {stable_mosaic.version = 11 : i64} {
  func.func @kernel(%arg0: i32, %arg1: memref<128x128xbf16, #tpu.memory_space<vmem>>, %arg2: memref<128x128xbf16, #tpu.memory_space<vmem>>, %arg3: memref<4x128xf32, #tpu.memory_space<vmem>>, %arg4: memref<1x128xf32, #tpu.memory_space<vmem>>, %arg5: memref<1x128xf32, #tpu.memory_space<vmem>>, %arg6: memref<1x128xf32, #tpu.memory_space<vmem>>, %arg7: memref<1x128xf32, #tpu.memory_space<vmem>>, %arg8: memref<128x128xf32, #tpu.memory_space<vmem>>) attributes {dimension_semantics = [#tpu.dimension_semantics<parallel>], iteration_bounds = array<i64: 1>, scalar_prefetch = 0 : i64, scratch_operands = 0 : i64, tpu.core_type = #tpu.core_type<tc>, window_params = [{transform_indices = @transform_0, window_bounds = array<i64: 128, 128>}, {transform_indices = @transform_1, window_bounds = array<i64: 128, 128>}, {pipeline_mode = #tpu.pipeline_mode<synchronous>, transform_indices = @transform_2, window_bounds = array<i64: 4, 128>}, {pipeline_mode = #tpu.pipeline_mode<synchronous>, transform_indices = @transform_3, window_bounds = array<i64: 1, 128>}, {pipeline_mode = #tpu.pipeline_mode<synchronous>, transform_indices = @transform_4, window_bounds = array<i64: 1, 128>}, {pipeline_mode = #tpu.pipeline_mode<synchronous>, transform_indices = @transform_5, window_bounds = array<i64: 1, 128>}, {pipeline_mode = #tpu.pipeline_mode<synchronous>, transform_indices = @transform_6, window_bounds = array<i64: 1, 128>}, {transform_indices = @transform_7, window_bounds = array<i64: 128, 128>}]} {
    %c0 = arith.constant 0 : index
    %c0_0 = arith.constant 0 : index
    %0 = vector.load %arg3[%c0, %c0_0] : memref<4x128xf32, #tpu.memory_space<vmem>>, vector<4x128xf32>
    %1 = vector.extract_strided_slice %0 {offsets = [0, 0], sizes = [1, 128], strides = [1, 1]} : vector<4x128xf32> to vector<1x128xf32>
    %cst = arith.constant 7.812500e-03 : f32
    %2 = vector.broadcast %cst : f32 to vector<1x128xf32>
    %3 = arith.mulf %1, %2 : vector<1x128xf32>
    %4 = vector.extract_strided_slice %0 {offsets = [1, 0], sizes = [1, 128], strides = [1, 1]} : vector<4x128xf32> to vector<1x128xf32>
    %cst_1 = arith.constant 7.812500e-03 : f32
    %5 = vector.broadcast %cst_1 : f32 to vector<1x128xf32>
    %6 = arith.mulf %4, %5 : vector<1x128xf32>
    %7 = arith.mulf %3, %3 : vector<1x128xf32>
    %8 = arith.subf %6, %7 : vector<1x128xf32>
    %cst_2 = arith.constant 0.000000e+00 : f32
    %9 = vector.broadcast %cst_2 : f32 to vector<1x128xf32>
    %10 = arith.maximumf %8, %9 : vector<1x128xf32>
    %c0_3 = arith.constant 0 : index
    %c0_4 = arith.constant 0 : index
    %11 = vector.load %arg4[%c0_3, %c0_4] : memref<1x128xf32, #tpu.memory_space<vmem>>, vector<1x128xf32>
    %cst_5 = arith.constant 9.99999974E-6 : f32
    %12 = vector.broadcast %cst_5 : f32 to vector<1x128xf32>
    %13 = arith.addf %10, %12 : vector<1x128xf32>
    %14 = math.rsqrt %13 : vector<1x128xf32>
    %15 = arith.mulf %11, %14 : vector<1x128xf32>
    %c0_6 = arith.constant 0 : index
    %c0_7 = arith.constant 0 : index
    %16 = vector.load %arg5[%c0_6, %c0_7] : memref<1x128xf32, #tpu.memory_space<vmem>>, vector<1x128xf32>
    %17 = arith.mulf %3, %15 : vector<1x128xf32>
    %18 = arith.subf %16, %17 : vector<1x128xf32>
    %c0_8 = arith.constant 0 : index
    %c0_9 = arith.constant 0 : index
    %19 = vector.load %arg1[%c0_8, %c0_9] : memref<128x128xbf16, #tpu.memory_space<vmem>>, vector<128x128xbf16>
    %20 = arith.extf %19 : vector<128x128xbf16> to vector<128x128xf32>
    %21 = vector.broadcast %15 : vector<1x128xf32> to vector<128x128xf32>
    %22 = arith.mulf %20, %21 : vector<128x128xf32>
    %23 = vector.broadcast %18 : vector<1x128xf32> to vector<128x128xf32>
    %24 = arith.addf %22, %23 : vector<128x128xf32>
    %25 = vector.extract_strided_slice %0 {offsets = [2, 0], sizes = [1, 128], strides = [1, 1]} : vector<4x128xf32> to vector<1x128xf32>
    %cst_10 = arith.constant 7.812500e-03 : f32
    %26 = vector.broadcast %cst_10 : f32 to vector<1x128xf32>
    %27 = arith.mulf %25, %26 : vector<1x128xf32>
    %28 = vector.extract_strided_slice %0 {offsets = [3, 0], sizes = [1, 128], strides = [1, 1]} : vector<4x128xf32> to vector<1x128xf32>
    %cst_11 = arith.constant 7.812500e-03 : f32
    %29 = vector.broadcast %cst_11 : f32 to vector<1x128xf32>
    %30 = arith.mulf %28, %29 : vector<1x128xf32>
    %31 = arith.mulf %27, %27 : vector<1x128xf32>
    %32 = arith.subf %30, %31 : vector<1x128xf32>
    %cst_12 = arith.constant 0.000000e+00 : f32
    %33 = vector.broadcast %cst_12 : f32 to vector<1x128xf32>
    %34 = arith.maximumf %32, %33 : vector<1x128xf32>
    %c0_13 = arith.constant 0 : index
    %c0_14 = arith.constant 0 : index
    %35 = vector.load %arg6[%c0_13, %c0_14] : memref<1x128xf32, #tpu.memory_space<vmem>>, vector<1x128xf32>
    %cst_15 = arith.constant 9.99999974E-6 : f32
    %36 = vector.broadcast %cst_15 : f32 to vector<1x128xf32>
    %37 = arith.addf %34, %36 : vector<1x128xf32>
    %38 = math.rsqrt %37 : vector<1x128xf32>
    %39 = arith.mulf %35, %38 : vector<1x128xf32>
    %c0_16 = arith.constant 0 : index
    %c0_17 = arith.constant 0 : index
    %40 = vector.load %arg7[%c0_16, %c0_17] : memref<1x128xf32, #tpu.memory_space<vmem>>, vector<1x128xf32>
    %41 = arith.mulf %27, %39 : vector<1x128xf32>
    %42 = arith.subf %40, %41 : vector<1x128xf32>
    %c0_18 = arith.constant 0 : index
    %c0_19 = arith.constant 0 : index
    %43 = vector.load %arg2[%c0_18, %c0_19] : memref<128x128xbf16, #tpu.memory_space<vmem>>, vector<128x128xbf16>
    %44 = arith.extf %43 : vector<128x128xbf16> to vector<128x128xf32>
    %45 = vector.broadcast %39 : vector<1x128xf32> to vector<128x128xf32>
    %46 = arith.mulf %44, %45 : vector<128x128xf32>
    %47 = arith.addf %24, %46 : vector<128x128xf32>
    %48 = vector.broadcast %42 : vector<1x128xf32> to vector<128x128xf32>
    %49 = arith.addf %47, %48 : vector<128x128xf32>
    %cst_20 = arith.constant 0.000000e+00 : f32
    %50 = vector.broadcast %cst_20 : f32 to vector<128x128xf32>
    %51 = arith.maximumf %49, %50 : vector<128x128xf32>
    %c0_21 = arith.constant 0 : index
    %c0_22 = arith.constant 0 : index
    %52 = vector.load %arg8[%c0_21, %c0_22] : memref<128x128xf32, #tpu.memory_space<vmem>>, vector<128x128xf32>
    tpu.vector_store %arg8[%c0_21, %c0_22], %51 {strides = array<i32>} : memref<128x128xf32, #tpu.memory_space<vmem>>, vector<128x128xf32>,
    return
  }
  func.func @transform_0(%arg0: i32) -> (i32, i32) {
    %c0_i32 = arith.constant 0 : i32
    %c0_i32_0 = arith.constant 0 : i32
    return %arg0, %c0_i32 : i32, i32
  }
  func.func @transform_1(%arg0: i32) -> (i32, i32) {
    %c0_i32 = arith.constant 0 : i32
    %c0_i32_0 = arith.constant 0 : i32
    return %arg0, %c0_i32 : i32, i32
  }
  func.func @transform_2(%arg0: i32) -> (i32, i32) {
    %c0_i32 = arith.constant 0 : i32
    %c0_i32_0 = arith.constant 0 : i32
    %c0_i32_1 = arith.constant 0 : i32
    return %c0_i32, %c0_i32_0 : i32, i32
  }
  func.func @transform_3(%arg0: i32) -> (i32, i32) {
    %c0_i32 = arith.constant 0 : i32
    %c0_i32_0 = arith.constant 0 : i32
    %c0_i32_1 = arith.constant 0 : i32
    return %c0_i32, %c0_i32_0 : i32, i32
  }
  func.func @transform_4(%arg0: i32) -> (i32, i32) {
    %c0_i32 = arith.constant 0 : i32
    %c0_i32_0 = arith.constant 0 : i32
    %c0_i32_1 = arith.constant 0 : i32
    return %c0_i32, %c0_i32_0 : i32, i32
  }
  func.func @transform_5(%arg0: i32) -> (i32, i32) {
    %c0_i32 = arith.constant 0 : i32
    %c0_i32_0 = arith.constant 0 : i32
    %c0_i32_1 = arith.constant 0 : i32
    return %c0_i32, %c0_i32_0 : i32, i32
  }
  func.func @transform_6(%arg0: i32) -> (i32, i32) {
    %c0_i32 = arith.constant 0 : i32
    %c0_i32_0 = arith.constant 0 : i32
    %c0_i32_1 = arith.constant 0 : i32
    return %c0_i32, %c0_i32_0 : i32, i32
  }
  func.func @transform_7(%arg0: i32) -> (i32, i32) {
    %c0_i32 = arith.constant 0 : i32
    %c0_i32_0 = arith.constant 0 : i32
    return %arg0, %c0_i32 : i32, i32
  }
}

module attributes {stable_mosaic.version = 11 : i64} {
  func.func @_stats_kernel_dual(%arg0: i32, %arg1: i32, %arg2: memref<128x72xbf16, #tpu.memory_space<vmem>>, %arg3: memref<72x128xbf16, #tpu.memory_space<vmem>>, %arg4: memref<128x4xbf16, #tpu.memory_space<vmem>>, %arg5: memref<4x128xbf16, #tpu.memory_space<vmem>>, %arg6: memref<128x128xbf16, #tpu.memory_space<vmem>>, %arg7: memref<128x128xbf16, #tpu.memory_space<vmem>>, %arg8: memref<4x128xf32, #tpu.memory_space<vmem>>, %arg9: memref<4x128xf32, #tpu.memory_space<vmem>>) attributes {dimension_semantics = [#tpu.dimension_semantics<parallel>, #tpu.dimension_semantics<arbitrary>], iteration_bounds = array<i64: 1, 1>, scalar_prefetch = 0 : i64, scratch_operands = 1 : i64, tpu.core_type = #tpu.core_type<tc>, window_params = [{transform_indices = @transform_0, window_bounds = array<i64: 128, 72>}, {transform_indices = @transform_1, window_bounds = array<i64: 72, 128>}, {transform_indices = @transform_2, window_bounds = array<i64: 128, 4>}, {transform_indices = @transform_3, window_bounds = array<i64: 4, 128>}, {transform_indices = @transform_4, window_bounds = array<i64: 128, 128>}, {transform_indices = @transform_5, window_bounds = array<i64: 128, 128>}, {transform_indices = @transform_6, window_bounds = array<i64: 4, 128>}]} {
    %c0_i32 = arith.constant 0 : i32
    %0 = arith.cmpi eq, %arg1, %c0_i32 : i32
    %1 = arith.extui %0 : i1 to i32
    %c0_i32_0 = arith.constant 0 : i32
    %2 = arith.cmpi ne, %1, %c0_i32_0 : i32
    scf.if %2 {
      %cst_32 = arith.constant 0.000000e+00 : f32
      %38 = vector.broadcast %cst_32 : f32 to vector<4x128xf32>
      %c0_33 = arith.constant 0 : index
      %c0_34 = arith.constant 0 : index
      %39 = vector.load %arg9[%c0_33, %c0_34] : memref<4x128xf32, #tpu.memory_space<vmem>>, vector<4x128xf32>
      tpu.vector_store %arg9[%c0_33, %c0_34], %38 {strides = array<i32>} : memref<4x128xf32, #tpu.memory_space<vmem>>, vector<4x128xf32>,
    } else {
    }
    %c0 = arith.constant 0 : index
    %c0_1 = arith.constant 0 : index
    %3 = vector.load %arg2[%c0, %c0_1] : memref<128x72xbf16, #tpu.memory_space<vmem>>, vector<128x72xbf16>
    %c0_2 = arith.constant 0 : index
    %c0_3 = arith.constant 0 : index
    %4 = vector.load %arg3[%c0_2, %c0_3] : memref<72x128xbf16, #tpu.memory_space<vmem>>, vector<72x128xbf16>
    %cst = arith.constant dense<0.000000e+00> : vector<128x128xf32>
    %5 = tpu.matmul %3, %4, %cst {dimension_numbers = #tpu.dot_dimension_numbers<[1], [0], [0], [1], [0, 0, 1, 1], [], []>} : vector<128x72xbf16>, vector<72x128xbf16>, vector<128x128xf32> -> vector<128x128xf32>
    %c0_4 = arith.constant 0 : index
    %c0_5 = arith.constant 0 : index
    %6 = vector.load %arg4[%c0_4, %c0_5] : memref<128x4xbf16, #tpu.memory_space<vmem>>, vector<128x4xbf16>
    %c0_6 = arith.constant 0 : index
    %c0_7 = arith.constant 0 : index
    %7 = vector.load %arg5[%c0_6, %c0_7] : memref<4x128xbf16, #tpu.memory_space<vmem>>, vector<4x128xbf16>
    %cst_8 = arith.constant dense<0.000000e+00> : vector<128x128xf32>
    %8 = tpu.matmul %6, %7, %cst_8 {dimension_numbers = #tpu.dot_dimension_numbers<[1], [0], [0], [1], [0, 0, 1, 1], [], []>} : vector<128x4xbf16>, vector<4x128xbf16>, vector<128x128xf32> -> vector<128x128xf32>
    %9 = arith.truncf %5 : vector<128x128xf32> to vector<128x128xbf16>
    %c0_9 = arith.constant 0 : index
    %c0_10 = arith.constant 0 : index
    %10 = vector.load %arg6[%c0_9, %c0_10] : memref<128x128xbf16, #tpu.memory_space<vmem>>, vector<128x128xbf16>
    tpu.vector_store %arg6[%c0_9, %c0_10], %9 {strides = array<i32>} : memref<128x128xbf16, #tpu.memory_space<vmem>>, vector<128x128xbf16>,
    %11 = arith.truncf %8 : vector<128x128xf32> to vector<128x128xbf16>
    %c0_11 = arith.constant 0 : index
    %c0_12 = arith.constant 0 : index
    %12 = vector.load %arg7[%c0_11, %c0_12] : memref<128x128xbf16, #tpu.memory_space<vmem>>, vector<128x128xbf16>
    tpu.vector_store %arg7[%c0_11, %c0_12], %11 {strides = array<i32>} : memref<128x128xbf16, #tpu.memory_space<vmem>>, vector<128x128xbf16>,
    %c0_13 = arith.constant 0 : index
    %c0_14 = arith.constant 0 : index
    %13 = vector.load %arg9[%c0_13, %c0_14] : memref<4x128xf32, #tpu.memory_space<vmem>>, vector<1x128xf32>
    %cst_15 = arith.constant dense<0.000000e+00> : vector<128xf32>
    %14 = vector.multi_reduction <add>, %5, %cst_15 [0] : vector<128x128xf32> to vector<128xf32>
    %15 = vector.shape_cast %14 : vector<128xf32> to vector<1x128xf32>
    %16 = arith.addf %13, %15 : vector<1x128xf32>
    %c0_16 = arith.constant 0 : index
    %c0_17 = arith.constant 0 : index
    %17 = vector.load %arg9[%c0_16, %c0_17] : memref<4x128xf32, #tpu.memory_space<vmem>>, vector<1x128xf32>
    tpu.vector_store %arg9[%c0_16, %c0_17], %16 {strides = array<i32>} : memref<4x128xf32, #tpu.memory_space<vmem>>, vector<1x128xf32>,
    %c1 = arith.constant 1 : index
    %c0_18 = arith.constant 0 : index
    %18 = vector.load %arg9[%c1, %c0_18] : memref<4x128xf32, #tpu.memory_space<vmem>>, vector<1x128xf32>
    %19 = arith.mulf %5, %5 : vector<128x128xf32>
    %cst_19 = arith.constant dense<0.000000e+00> : vector<128xf32>
    %20 = vector.multi_reduction <add>, %19, %cst_19 [0] : vector<128x128xf32> to vector<128xf32>
    %21 = vector.shape_cast %20 : vector<128xf32> to vector<1x128xf32>
    %22 = arith.addf %18, %21 : vector<1x128xf32>
    %c1_20 = arith.constant 1 : index
    %c0_21 = arith.constant 0 : index
    %23 = vector.load %arg9[%c1_20, %c0_21] : memref<4x128xf32, #tpu.memory_space<vmem>>, vector<1x128xf32>
    tpu.vector_store %arg9[%c1_20, %c0_21], %22 {strides = array<i32>} : memref<4x128xf32, #tpu.memory_space<vmem>>, vector<1x128xf32>,
    %c2 = arith.constant 2 : index
    %c0_22 = arith.constant 0 : index
    %24 = vector.load %arg9[%c2, %c0_22] : memref<4x128xf32, #tpu.memory_space<vmem>>, vector<1x128xf32>
    %cst_23 = arith.constant dense<0.000000e+00> : vector<128xf32>
    %25 = vector.multi_reduction <add>, %8, %cst_23 [0] : vector<128x128xf32> to vector<128xf32>
    %26 = vector.shape_cast %25 : vector<128xf32> to vector<1x128xf32>
    %27 = arith.addf %24, %26 : vector<1x128xf32>
    %c2_24 = arith.constant 2 : index
    %c0_25 = arith.constant 0 : index
    %28 = vector.load %arg9[%c2_24, %c0_25] : memref<4x128xf32, #tpu.memory_space<vmem>>, vector<1x128xf32>
    tpu.vector_store %arg9[%c2_24, %c0_25], %27 {strides = array<i32>} : memref<4x128xf32, #tpu.memory_space<vmem>>, vector<1x128xf32>,
    %c3 = arith.constant 3 : index
    %c0_26 = arith.constant 0 : index
    %29 = vector.load %arg9[%c3, %c0_26] : memref<4x128xf32, #tpu.memory_space<vmem>>, vector<1x128xf32>
    %30 = arith.mulf %8, %8 : vector<128x128xf32>
    %cst_27 = arith.constant dense<0.000000e+00> : vector<128xf32>
    %31 = vector.multi_reduction <add>, %30, %cst_27 [0] : vector<128x128xf32> to vector<128xf32>
    %32 = vector.shape_cast %31 : vector<128xf32> to vector<1x128xf32>
    %33 = arith.addf %29, %32 : vector<1x128xf32>
    %c3_28 = arith.constant 3 : index
    %c0_29 = arith.constant 0 : index
    %34 = vector.load %arg9[%c3_28, %c0_29] : memref<4x128xf32, #tpu.memory_space<vmem>>, vector<1x128xf32>
    tpu.vector_store %arg9[%c3_28, %c0_29], %33 {strides = array<i32>} : memref<4x128xf32, #tpu.memory_space<vmem>>, vector<1x128xf32>,
    %c0_i32_30 = arith.constant 0 : i32
    %35 = arith.cmpi eq, %arg1, %c0_i32_30 : i32
    %36 = arith.extui %35 : i1 to i32
    %c0_i32_31 = arith.constant 0 : i32
    %37 = arith.cmpi ne, %36, %c0_i32_31 : i32
    scf.if %37 {
      %c0_32 = arith.constant 0 : index
      %c0_33 = arith.constant 0 : index
      %38 = vector.load %arg9[%c0_32, %c0_33] : memref<4x128xf32, #tpu.memory_space<vmem>>, vector<4x128xf32>
      %c0_34 = arith.constant 0 : index
      %c0_35 = arith.constant 0 : index
      %39 = vector.load %arg8[%c0_34, %c0_35] : memref<4x128xf32, #tpu.memory_space<vmem>>, vector<4x128xf32>
      tpu.vector_store %arg8[%c0_34, %c0_35], %38 {strides = array<i32>} : memref<4x128xf32, #tpu.memory_space<vmem>>, vector<4x128xf32>,
    } else {
    }
    return
  }
  func.func @transform_0(%arg0: i32, %arg1: i32) -> (i32, i32) {
    %c0_i32 = arith.constant 0 : i32
    %c0_i32_0 = arith.constant 0 : i32
    return %arg1, %c0_i32 : i32, i32
  }
  func.func @transform_1(%arg0: i32, %arg1: i32) -> (i32, i32) {
    %c0_i32 = arith.constant 0 : i32
    %c0_i32_0 = arith.constant 0 : i32
    return %c0_i32, %arg0 : i32, i32
  }
  func.func @transform_2(%arg0: i32, %arg1: i32) -> (i32, i32) {
    %c0_i32 = arith.constant 0 : i32
    %c0_i32_0 = arith.constant 0 : i32
    return %arg1, %c0_i32 : i32, i32
  }
  func.func @transform_3(%arg0: i32, %arg1: i32) -> (i32, i32) {
    %c0_i32 = arith.constant 0 : i32
    %c0_i32_0 = arith.constant 0 : i32
    return %c0_i32, %arg0 : i32, i32
  }
  func.func @transform_4(%arg0: i32, %arg1: i32) -> (i32, i32) {
    %c0_i32 = arith.constant 0 : i32
    return %arg1, %arg0 : i32, i32
  }
  func.func @transform_5(%arg0: i32, %arg1: i32) -> (i32, i32) {
    %c0_i32 = arith.constant 0 : i32
    return %arg1, %arg0 : i32, i32
  }
  func.func @transform_6(%arg0: i32, %arg1: i32) -> (i32, i32) {
    %c0_i32 = arith.constant 0 : i32
    %c0_i32_0 = arith.constant 0 : i32
    return %c0_i32, %arg0 : i32, i32
  }
}

</mosaic_0001>

<llo_original>
// kernel: residual_block_forward.5
$region0: #{residual_block_forward.5}
  #allocation0 [shape = 'u32[]', space=smem, size = 0x4, offset = 0x4, fixed_abs, tag = 'smem constant byte address 0x4 - core index']
  #allocation1 [shape = 'u32[144,128]{1,0:T(1,128)}', space=vmem, size = 0x12000, scoped, tag = 'internal scratch']
  %s0 = inlined_call_operand.vmem [shape: bf16[512,128], index: 0, kind: input, shape index: {}]
  %s1 = inlined_call_operand.vmem [shape: f32[2,128], index: 1, kind: input, shape index: {}]
  %s2 = inlined_call_operand.vmem [shape: f32[1,128], index: 2, kind: input, shape index: {}]
  %s3 = inlined_call_operand.vmem [shape: f32[1,128], index: 3, kind: input, shape index: {}]
  %s4 = inlined_call_operand.vmem [shape: bf16[512,128], index: 4, kind: output, shape index: {}]
  %s5 = sld [smem:[#allocation0]]
  $region26: #{residual_block_forward.5} parent=0
    _
  %s7 = ssub.s32 1, %s5
  %s8 = scalar_select 0, %s7, %s5
  // Predicated region
  $region2: #{residual_block_forward.5} parent=0 // pred_check
    _
  $region3: #{residual_block_forward.5} parent=0 // pred_check_branch
    %10 = sbr.rel (0) target = $region5
  $region4: #{residual_block_forward.5} parent=0 // pred_region
    _
  $region5: #{residual_block_forward.5} parent=0 // pred_fallthru
    _
  // Predicated region
  $region6: #{residual_block_forward.5} parent=0 // pred_check
    _
  $region7: #{residual_block_forward.5} parent=0 // pred_check_branch
    %12 = sbr.rel (0) target = $region9
  $region8: #{residual_block_forward.5} parent=0 // pred_region
    _
  $region9: #{residual_block_forward.5} parent=0 // pred_fallthru
    _
  // Predicated region
  $region10: #{residual_block_forward.5} parent=0 // pred_check
    _
  $region11: #{residual_block_forward.5} parent=0 // pred_check_branch
    %14 = sbr.rel (0) target = $region13
  $region12: #{residual_block_forward.5} parent=0 // pred_region
    _
  $region13: #{residual_block_forward.5} parent=0 // pred_fallthru
    _
  // Predicated region
  $region14: #{residual_block_forward.5} parent=0 // pred_check
    _
  $region15: #{residual_block_forward.5} parent=0 // pred_check_branch
    %16 = sbr.rel (0) target = $region17
  $region16: #{residual_block_forward.5} parent=0 // pred_region
    _
  $region17: #{residual_block_forward.5} parent=0 // pred_fallthru
    _
  %v17 = vld [vmem:[%s1] sm:$0x3]
  %v18 = vmul.f32 %v17, 0.001953125
  %v19 = vmul.f32 %v18, %v18
  %v21 = vrot.slane %v19, 7
  %v23 = vsub.f32 %v18, %v21
  %v24 = vmax.f32 %v23, 0.0
  %v25 = vld [vmem:[%s2] sm:$0x1]
  %v26 = vadd.f32 %v24, 1e-05
  %v27 = vrsqrt.pop %v26
  %v30 = vunpack.c.l.s4 1966171168
  %v31 = vunpack.c.0.s8 %v30
  %v32 = vlaneseq
  %v33 = vshrl.u32 %v32, 7
  %v34 = vsub.s32 %v31, %v33
  %v35 = vrot.slane %v27, %v34
  %v36 = vcombine.high %v35, %v35
  %v38 = vunpack.c.l.s4 1966171168
  %v39 = vunpack.c.0.s8 %v38
  %v40 = vlaneseq
  %v41 = vshrl.u32 %v40, 7
  %v42 = vsub.s32 %v39, %v41
  %v43 = vrot.slane %v36, %v42
  %v45 = vmul.f32 %v25, %v43
  %v46 = vld [vmem:[%s3] sm:$0x1]
  %v47 = vmul.f32 %v18, %v45
  %v48 = vsub.f32 %v46, %v47
  %v49 = vld [vmem:[%s0] sm:$0xf]
  %v50 = vld [vmem:[%s0 + $0x4] sm:$0xf]
  %v51 = vld [vmem:[%s0 + $0x8] sm:$0xf]
  %v52 = vld [vmem:[%s0 + $0xc] sm:$0xf]
  %v53 = vld [vmem:[%s0 + $0x10] sm:$0xf]
  %v54 = vld [vmem:[%s0 + $0x14] sm:$0xf]
  %v55 = vld [vmem:[%s0 + $0x18] sm:$0xf]
  %v56 = vld [vmem:[%s0 + $0x1c] sm:$0xf]
  %v57 = vld [vmem:[%s0 + $0x20] sm:$0xf]
  %v58 = vld [vmem:[%s0 + $0x24] sm:$0xf]
  %v59 = vld [vmem:[%s0 + $0x28] sm:$0xf]
  %v60 = vld [vmem:[%s0 + $0x2c] sm:$0xf]
  %v61 = vld [vmem:[%s0 + $0x30] sm:$0xf]
  %v62 = vld [vmem:[%s0 + $0x34] sm:$0xf]
  %v63 = vld [vmem:[%s0 + $0x38] sm:$0xf]
  %v64 = vld [vmem:[%s0 + $0x3c] sm:$0xf]
  %v65 = vld [vmem:[%s0 + $0x40] sm:$0xf]
  %v66 = vld [vmem:[%s0 + $0x44] sm:$0xf]
  %v67 = vld [vmem:[%s0 + $0x48] sm:$0xf]
  %v68 = vld [vmem:[%s0 + $0x4c] sm:$0xf]
  %v69 = vld [vmem:[%s0 + $0x50] sm:$0xf]
  %v70 = vld [vmem:[%s0 + $0x54] sm:$0xf]
  %v71 = vld [vmem:[%s0 + $0x58] sm:$0xf]
  %v72 = vld [vmem:[%s0 + $0x5c] sm:$0xf]
  %v73 = vld [vmem:[%s0 + $0x60] sm:$0xf]
  %v74 = vld [vmem:[%s0 + $0x64] sm:$0xf]
  %v75 = vld [vmem:[%s0 + $0x68] sm:$0xf]
  %v76 = vld [vmem:[%s0 + $0x6c] sm:$0xf]
  %v77 = vld [vmem:[%s0 + $0x70] sm:$0xf]
  %v78 = vld [vmem:[%s0 + $0x74] sm:$0xf]
  %v79 = vld [vmem:[%s0 + $0x78] sm:$0xf]
  %v80 = vld [vmem:[%s0 + $0x7c] sm:$0xf]
  %v81 = vld [vmem:[%s0 + $0x80] sm:$0xf]
  %v82 = vld [vmem:[%s0 + $0x84] sm:$0xf]
  %v83 = vld [vmem:[%s0 + $0x88] sm:$0xf]
  %v84 = vld [vmem:[%s0 + $0x8c] sm:$0xf]
  %v85 = vld [vmem:[%s0 + $0x90] sm:$0xf]
  %v86 = vld [vmem:[%s0 + $0x94] sm:$0xf]
  %v87 = vld [vmem:[%s0 + $0x98] sm:$0xf]
  %v88 = vld [vmem:[%s0 + $0x9c] sm:$0xf]
  %v89 = vld [vmem:[%s0 + $0xa0] sm:$0xf]
  %v90 = vld [vmem:[%s0 + $0xa4] sm:$0xf]
  %v91 = vld [vmem:[%s0 + $0xa8] sm:$0xf]
  %v92 = vld [vmem:[%s0 + $0xac] sm:$0xf]
  %v93 = vld [vmem:[%s0 + $0xb0] sm:$0xf]
  %v94 = vld [vmem:[%s0 + $0xb4] sm:$0xf]
  %v95 = vld [vmem:[%s0 + $0xb8] sm:$0xf]
  %v96 = vld [vmem:[%s0 + $0xbc] sm:$0xf]
  %v97 = vld [vmem:[%s0 + $0xc0] sm:$0xf]
  %v98 = vld [vmem:[%s0 + $0xc4] sm:$0xf]
  %v99 = vld [vmem:[%s0 + $0xc8] sm:$0xf]
  %v100 = vld [vmem:[%s0 + $0xcc] sm:$0xf]
  %v101 = vld [vmem:[%s0 + $0xd0] sm:$0xf]
  %v102 = vld [vmem:[%s0 + $0xd4] sm:$0xf]
  %v103 = vld [vmem:[%s0 + $0xd8] sm:$0xf]
  %v104 = vld [vmem:[%s0 + $0xdc] sm:$0xf]
  %v105 = vld [vmem:[%s0 + $0xe0] sm:$0xf]
  %v106 = vld [vmem:[%s0 + $0xe4] sm:$0xf]
  %v107 = vld [vmem:[%s0 + $0xe8] sm:$0xf]
  %v108 = vld [vmem:[%s0 + $0xec] sm:$0xf]
  %v109 = vld [vmem:[%s0 + $0xf0] sm:$0xf]
  %v110 = vld [vmem:[%s0 + $0xf4] sm:$0xf]
  %v111 = vld [vmem:[%s0 + $0xf8] sm:$0xf]
  %v112 = vld [vmem:[%s0 + $0xfc] sm:$0xf]
  %v113 = vunpack.c.l.bf16 %v49
  %v114 = vunpack.c.l.bf16 %v50
  %v115 = vunpack.c.l.bf16 %v51
  %v116 = vunpack.c.l.bf16 %v52
  %v117 = vunpack.c.l.bf16 %v53
  %v118 = vunpack.c.l.bf16 %v54
  %v119 = vunpack.c.l.bf16 %v55
  %v120 = vunpack.c.l.bf16 %v56
  %v121 = vunpack.c.l.bf16 %v57
  %v122 = vunpack.c.l.bf16 %v58
  %v123 = vunpack.c.l.bf16 %v59
  %v124 = vunpack.c.l.bf16 %v60
  %v125 = vunpack.c.l.bf16 %v61
  %v126 = vunpack.c.l.bf16 %v62
  %v127 = vunpack.c.l.bf16 %v63
  %v128 = vunpack.c.l.bf16 %v64
  %v129 = vunpack.c.l.bf16 %v65
  %v130 = vunpack.c.l.bf16 %v66
  %v131 = vunpack.c.l.bf16 %v67
  %v132 = vunpack.c.l.bf16 %v68
  %v133 = vunpack.c.l.bf16 %v69
  %v134 = vunpack.c.l.bf16 %v70
  %v135 = vunpack.c.l.bf16 %v71
  %v136 = vunpack.c.l.bf16 %v72
  %v137 = vunpack.c.l.bf16 %v73
  %v138 = vunpack.c.l.bf16 %v74
  %v139 = vunpack.c.l.bf16 %v75
  %v140 = vunpack.c.l.bf16 %v76
  %v141 = vunpack.c.l.bf16 %v77
  %v142 = vunpack.c.l.bf16 %v78
  %v143 = vunpack.c.l.bf16 %v79
  %v144 = vunpack.c.l.bf16 %v80
  %v145 = vunpack.c.l.bf16 %v81
  %v146 = vunpack.c.l.bf16 %v82
  %v147 = vunpack.c.l.bf16 %v83
  %v148 = vunpack.c.l.bf16 %v84
  %v149 = vunpack.c.l.bf16 %v85
  %v150 = vunpack.c.l.bf16 %v86
  %v151 = vunpack.c.l.bf16 %v87
  %v152 = vunpack.c.l.bf16 %v88
  %v153 = vunpack.c.l.bf16 %v89
  %v154 = vunpack.c.l.bf16 %v90
  %v155 = vunpack.c.l.bf16 %v91
  %v156 = vunpack.c.l.bf16 %v92
  %v157 = vunpack.c.l.bf16 %v93
  %v158 = vunpack.c.l.bf16 %v94
  %v159 = vunpack.c.l.bf16 %v95
  %v160 = vunpack.c.l.bf16 %v96
  %v161 = vunpack.c.l.bf16 %v97
  %v162 = vunpack.c.l.bf16 %v98
  %v163 = vunpack.c.l.bf16 %v99
  %v164 = vunpack.c.l.bf16 %v100
  %v165 = vunpack.c.l.bf16 %v101
  %v166 = vunpack.c.l.bf16 %v102
  %v167 = vunpack.c.l.bf16 %v103
  %v168 = vunpack.c.l.bf16 %v104
  %v169 = vunpack.c.l.bf16 %v105
  %v170 = vunpack.c.l.bf16 %v106
  %v171 = vunpack.c.l.bf16 %v107
  %v172 = vunpack.c.l.bf16 %v108
  %v173 = vunpack.c.l.bf16 %v109
  %v174 = vunpack.c.l.bf16 %v110
  %v175 = vunpack.c.l.bf16 %v111
  %v176 = vunpack.c.l.bf16 %v112
  %v178 = vlaneseq
  %v179 = vshrl.u32 %v178, 7
  %v180 = vsub.s32 0, %v179
  %v181 = vrot.slane %v45, %v180
  %v183 = vmul.f32 %v113, %v181
  %v184 = vmul.f32 %v114, %v181
  %v185 = vmul.f32 %v115, %v181
  %v186 = vmul.f32 %v116, %v181
  %v187 = vmul.f32 %v117, %v181
  %v188 = vmul.f32 %v118, %v181
  %v189 = vmul.f32 %v119, %v181
  %v190 = vmul.f32 %v120, %v181
  %v191 = vmul.f32 %v121, %v181
  %v192 = vmul.f32 %v122, %v181
  %v193 = vmul.f32 %v123, %v181
  %v194 = vmul.f32 %v124, %v181
  %v195 = vmul.f32 %v125, %v181
  %v196 = vmul.f32 %v126, %v181
  %v197 = vmul.f32 %v127, %v181
  %v198 = vmul.f32 %v128, %v181
  %v199 = vmul.f32 %v129, %v181
  %v200 = vmul.f32 %v130, %v181
  %v201 = vmul.f32 %v131, %v181
  %v202 = vmul.f32 %v132, %v181
  %v203 = vmul.f32 %v133, %v181
  %v204 = vmul.f32 %v134, %v181
  %v205 = vmul.f32 %v135, %v181
  %v206 = vmul.f32 %v136, %v181
  %v207 = vmul.f32 %v137, %v181
  %v208 = vmul.f32 %v138, %v181
  %v209 = vmul.f32 %v139, %v181
  %v210 = vmul.f32 %v140, %v181
  %v211 = vmul.f32 %v141, %v181
  %v212 = vmul.f32 %v142, %v181
  %v213 = vmul.f32 %v143, %v181
  %v214 = vmul.f32 %v144, %v181
  %v215 = vmul.f32 %v145, %v181
  %v216 = vmul.f32 %v146, %v181
  %v217 = vmul.f32 %v147, %v181
  %v218 = vmul.f32 %v148, %v181
  %v219 = vmul.f32 %v149, %v181
  %v220 = vmul.f32 %v150, %v181
  %v221 = vmul.f32 %v151, %v181
  %v222 = vmul.f32 %v152, %v181
  %v223 = vmul.f32 %v153, %v181
  %v224 = vmul.f32 %v154, %v181
  %v225 = vmul.f32 %v155, %v181
  %v226 = vmul.f32 %v156, %v181
  %v227 = vmul.f32 %v157, %v181
  %v228 = vmul.f32 %v158, %v181
  %v229 = vmul.f32 %v159, %v181
  %v230 = vmul.f32 %v160, %v181
  %v231 = vmul.f32 %v161, %v181
  %v232 = vmul.f32 %v162, %v181
  %v233 = vmul.f32 %v163, %v181
  %v234 = vmul.f32 %v164, %v181
  %v235 = vmul.f32 %v165, %v181
  %v236 = vmul.f32 %v166, %v181
  %v237 = vmul.f32 %v167, %v181
  %v238 = vmul.f32 %v168, %v181
  %v239 = vmul.f32 %v169, %v181
  %v240 = vmul.f32 %v170, %v181
  %v241 = vmul.f32 %v171, %v181
  %v242 = vmul.f32 %v172, %v181
  %v243 = vmul.f32 %v173, %v181
  %v244 = vmul.f32 %v174, %v181
  %v245 = vmul.f32 %v175, %v181
  %v246 = vmul.f32 %v176, %v181
  %v248 = vlaneseq
  %v249 = vshrl.u32 %v248, 7
  %v250 = vsub.s32 0, %v249
  %v251 = vrot.slane %v48, %v250
  %v253 = vadd.f32 %v183, %v251
  %v254 = vadd.f32 %v184, %v251
  %v255 = vadd.f32 %v185, %v251
  %v256 = vadd.f32 %v186, %v251
  %v257 = vadd.f32 %v187, %v251
  %v258 = vadd.f32 %v188, %v251
  %v259 = vadd.f32 %v189, %v251
  %v260 = vadd.f32 %v190, %v251
  %v261 = vadd.f32 %v191, %v251
  %v262 = vadd.f32 %v192, %v251
  %v263 = vadd.f32 %v193, %v251
  %v264 = vadd.f32 %v194, %v251
  %v265 = vadd.f32 %v195, %v251
  %v266 = vadd.f32 %v196, %v251
  %v267 = vadd.f32 %v197, %v251
  %v268 = vadd.f32 %v198, %v251
  %v269 = vadd.f32 %v199, %v251
  %v270 = vadd.f32 %v200, %v251
  %v271 = vadd.f32 %v201, %v251
  %v272 = vadd.f32 %v202, %v251
  %v273 = vadd.f32 %v203, %v251
  %v274 = vadd.f32 %v204, %v251
  %v275 = vadd.f32 %v205, %v251
  %v276 = vadd.f32 %v206, %v251
  %v277 = vadd.f32 %v207, %v251
  %v278 = vadd.f32 %v208, %v251
  %v279 = vadd.f32 %v209, %v251
  %v280 = vadd.f32 %v210, %v251
  %v281 = vadd.f32 %v211, %v251
  %v282 = vadd.f32 %v212, %v251
  %v283 = vadd.f32 %v213, %v251
  %v284 = vadd.f32 %v214, %v251
  %v285 = vadd.f32 %v215, %v251
  %v286 = vadd.f32 %v216, %v251
  %v287 = vadd.f32 %v217, %v251
  %v288 = vadd.f32 %v218, %v251
  %v289 = vadd.f32 %v219, %v251
  %v290 = vadd.f32 %v220, %v251
  %v291 = vadd.f32 %v221, %v251
  %v292 = vadd.f32 %v222, %v251
  %v293 = vadd.f32 %v223, %v251
  %v294 = vadd.f32 %v224, %v251
  %v295 = vadd.f32 %v225, %v251
  %v296 = vadd.f32 %v226, %v251
  %v297 = vadd.f32 %v227, %v251
  %v298 = vadd.f32 %v228, %v251
  %v299 = vadd.f32 %v229, %v251
  %v300 = vadd.f32 %v230, %v251
  %v301 = vadd.f32 %v231, %v251
  %v302 = vadd.f32 %v232, %v251
  %v303 = vadd.f32 %v233, %v251
  %v304 = vadd.f32 %v234, %v251
  %v305 = vadd.f32 %v235, %v251
  %v306 = vadd.f32 %v236, %v251
  %v307 = vadd.f32 %v237, %v251
  %v308 = vadd.f32 %v238, %v251
  %v309 = vadd.f32 %v239, %v251
  %v310 = vadd.f32 %v240, %v251
  %v311 = vadd.f32 %v241, %v251
  %v312 = vadd.f32 %v242, %v251
  %v313 = vadd.f32 %v243, %v251
  %v314 = vadd.f32 %v244, %v251
  %v315 = vadd.f32 %v245, %v251
  %v316 = vadd.f32 %v246, %v251
  %v317 = vmax.f32 %v253, 0.0
  %v318 = vmax.f32 %v254, 0.0
  %v319 = vmax.f32 %v255, 0.0
  %v320 = vmax.f32 %v256, 0.0
  %v321 = vmax.f32 %v257, 0.0
  %v322 = vmax.f32 %v258, 0.0
  %v323 = vmax.f32 %v259, 0.0
  %v324 = vmax.f32 %v260, 0.0
  %v325 = vmax.f32 %v261, 0.0
  %v326 = vmax.f32 %v262, 0.0
  %v327 = vmax.f32 %v263, 0.0
  %v328 = vmax.f32 %v264, 0.0
  %v329 = vmax.f32 %v265, 0.0
  %v330 = vmax.f32 %v266, 0.0
  %v331 = vmax.f32 %v267, 0.0
  %v332 = vmax.f32 %v268, 0.0
  %v333 = vmax.f32 %v269, 0.0
  %v334 = vmax.f32 %v270, 0.0
  %v335 = vmax.f32 %v271, 0.0
  %v336 = vmax.f32 %v272, 0.0
  %v337 = vmax.f32 %v273, 0.0
  %v338 = vmax.f32 %v274, 0.0
  %v339 = vmax.f32 %v275, 0.0
  %v340 = vmax.f32 %v276, 0.0
  %v341 = vmax.f32 %v277, 0.0
  %v342 = vmax.f32 %v278, 0.0
  %v343 = vmax.f32 %v279, 0.0
  %v344 = vmax.f32 %v280, 0.0
  %v345 = vmax.f32 %v281, 0.0
  %v346 = vmax.f32 %v282, 0.0
  %v347 = vmax.f32 %v283, 0.0
  %v348 = vmax.f32 %v284, 0.0
  %v349 = vmax.f32 %v285, 0.0
  %v350 = vmax.f32 %v286, 0.0
  %v351 = vmax.f32 %v287, 0.0
  %v352 = vmax.f32 %v288, 0.0
  %v353 = vmax.f32 %v289, 0.0
  %v354 = vmax.f32 %v290, 0.0
  %v355 = vmax.f32 %v291, 0.0
  %v356 = vmax.f32 %v292, 0.0
  %v357 = vmax.f32 %v293, 0.0
  %v358 = vmax.f32 %v294, 0.0
  %v359 = vmax.f32 %v295, 0.0
  %v360 = vmax.f32 %v296, 0.0
  %v361 = vmax.f32 %v297, 0.0
  %v362 = vmax.f32 %v298, 0.0
  %v363 = vmax.f32 %v299, 0.0
  %v364 = vmax.f32 %v300, 0.0
  %v365 = vmax.f32 %v301, 0.0
  %v366 = vmax.f32 %v302, 0.0
  %v367 = vmax.f32 %v303, 0.0
  %v368 = vmax.f32 %v304, 0.0
  %v369 = vmax.f32 %v305, 0.0
  %v370 = vmax.f32 %v306, 0.0
  %v371 = vmax.f32 %v307, 0.0
  %v372 = vmax.f32 %v308, 0.0
  %v373 = vmax.f32 %v309, 0.0
  %v374 = vmax.f32 %v310, 0.0
  %v375 = vmax.f32 %v311, 0.0
  %v376 = vmax.f32 %v312, 0.0
  %v377 = vmax.f32 %v313, 0.0
  %v378 = vmax.f32 %v314, 0.0
  %v379 = vmax.f32 %v315, 0.0
  %v380 = vmax.f32 %v316, 0.0
  %v381 = vpack.c.bf16 %v318, %v317
  %v382 = vpack.c.bf16 %v320, %v319
  %v383 = vpack.c.bf16 %v322, %v321
  %v384 = vpack.c.bf16 %v324, %v323
  %v385 = vpack.c.bf16 %v326, %v325
  %v386 = vpack.c.bf16 %v328, %v327
  %v387 = vpack.c.bf16 %v330, %v329
  %v388 = vpack.c.bf16 %v332, %v331
  %v389 = vpack.c.bf16 %v334, %v333
  %v390 = vpack.c.bf16 %v336, %v335
  %v391 = vpack.c.bf16 %v338, %v337
  %v392 = vpack.c.bf16 %v340, %v339
  %v393 = vpack.c.bf16 %v342, %v341
  %v394 = vpack.c.bf16 %v344, %v343
  %v395 = vpack.c.bf16 %v346, %v345
  %v396 = vpack.c.bf16 %v348, %v347
  %v397 = vpack.c.bf16 %v350, %v349
  %v398 = vpack.c.bf16 %v352, %v351
  %v399 = vpack.c.bf16 %v354, %v353
  %v400 = vpack.c.bf16 %v356, %v355
  %v401 = vpack.c.bf16 %v358, %v357
  %v402 = vpack.c.bf16 %v360, %v359
  %v403 = vpack.c.bf16 %v362, %v361
  %v404 = vpack.c.bf16 %v364, %v363
  %v405 = vpack.c.bf16 %v366, %v365
  %v406 = vpack.c.bf16 %v368, %v367
  %v407 = vpack.c.bf16 %v370, %v369
  %v408 = vpack.c.bf16 %v372, %v371
  %v409 = vpack.c.bf16 %v374, %v373
  %v410 = vpack.c.bf16 %v376, %v375
  %v411 = vpack.c.bf16 %v378, %v377
  %v412 = vpack.c.bf16 %v380, %v379
  %v445 = vunpack.c.l.b16 %v381
  %v446 = vunpack.c.h.b16 %v381
  %v447 = vunpack.c.l.b16 %v382
  %v448 = vunpack.c.h.b16 %v382
  %v449 = vunpack.c.l.b16 %v383
  %v450 = vunpack.c.h.b16 %v383
  %v451 = vunpack.c.l.b16 %v384
  %v452 = vunpack.c.h.b16 %v384
  %v453 = vunpack.c.l.b16 %v385
  %v454 = vunpack.c.h.b16 %v385
  %v455 = vunpack.c.l.b16 %v386
  %v456 = vunpack.c.h.b16 %v386
  %v457 = vunpack.c.l.b16 %v387
  %v458 = vunpack.c.h.b16 %v387
  %v459 = vunpack.c.l.b16 %v388
  %v460 = vunpack.c.h.b16 %v388
  %v461 = vunpack.c.l.b16 %v389
  %v462 = vunpack.c.h.b16 %v389
  %v463 = vunpack.c.l.b16 %v390
  %v464 = vunpack.c.h.b16 %v390
  %v465 = vunpack.c.l.b16 %v391
  %v466 = vunpack.c.h.b16 %v391
  %v467 = vunpack.c.l.b16 %v392
  %v468 = vunpack.c.h.b16 %v392
  %v469 = vunpack.c.l.b16 %v393
  %v470 = vunpack.c.h.b16 %v393
  %v471 = vunpack.c.l.b16 %v394
  %v472 = vunpack.c.h.b16 %v394
  %v473 = vunpack.c.l.b16 %v395
  %v474 = vunpack.c.h.b16 %v395
  %v475 = vunpack.c.l.b16 %v396
  %v476 = vunpack.c.h.b16 %v396
  %v477 = vunpack.c.l.b16 %v397
  %v478 = vunpack.c.h.b16 %v397
  %v479 = vunpack.c.l.b16 %v398
  %v480 = vunpack.c.h.b16 %v398
  %v481 = vunpack.c.l.b16 %v399
  %v482 = vunpack.c.h.b16 %v399
  %v483 = vunpack.c.l.b16 %v400
  %v484 = vunpack.c.h.b16 %v400
  %v485 = vunpack.c.l.b16 %v401
  %v486 = vunpack.c.h.b16 %v401
  %v487 = vunpack.c.l.b16 %v402
  %v488 = vunpack.c.h.b16 %v402
  %v489 = vunpack.c.l.b16 %v403
  %v490 = vunpack.c.h.b16 %v403
  %v491 = vunpack.c.l.b16 %v404
  %v492 = vunpack.c.h.b16 %v404
  %v493 = vunpack.c.l.b16 %v405
  %v494 = vunpack.c.h.b16 %v405
  %v495 = vunpack.c.l.b16 %v406
  %v496 = vunpack.c.h.b16 %v406
  %v497 = vunpack.c.l.b16 %v407
  %v498 = vunpack.c.h.b16 %v407
  %v499 = vunpack.c.l.b16 %v408
  %v500 = vunpack.c.h.b16 %v408
  %v501 = vunpack.c.l.b16 %v409
  %v502 = vunpack.c.h.b16 %v409
  %v503 = vunpack.c.l.b16 %v410
  %v504 = vunpack.c.h.b16 %v410
  %v505 = vunpack.c.l.b16 %v411
  %v506 = vunpack.c.h.b16 %v411
  %v507 = vunpack.c.l.b16 %v412
  %v508 = vunpack.c.h.b16 %v412
  %v509 = vpack.c.b16 %v445, %v445
  %v510 = vpack.c.b16 %v446, %v446
  %v511 = vpack.c.b16 %v447, %v447
  %v512 = vpack.c.b16 %v448, %v448
  %v513 = vpack.c.b16 %v449, %v449
  %v514 = vpack.c.b16 %v450, %v450
  %v515 = vpack.c.b16 %v451, %v451
  %v516 = vpack.c.b16 %v452, %v452
  %v517 = vpack.c.b16 %v453, %v453
  %v518 = vpack.c.b16 %v454, %v454
  %v519 = vpack.c.b16 %v455, %v455
  %v520 = vpack.c.b16 %v456, %v456
  %v521 = vpack.c.b16 %v457, %v457
  %v522 = vpack.c.b16 %v458, %v458
  %v523 = vpack.c.b16 %v459, %v459
  %v524 = vpack.c.b16 %v460, %v460
  %v525 = vpack.c.b16 %v461, %v461
  %v526 = vpack.c.b16 %v462, %v462
  %v527 = vpack.c.b16 %v463, %v463
  %v528 = vpack.c.b16 %v464, %v464
  %v529 = vpack.c.b16 %v465, %v465
  %v530 = vpack.c.b16 %v466, %v466
  %v531 = vpack.c.b16 %v467, %v467
  %v532 = vpack.c.b16 %v468, %v468
  %v533 = vpack.c.b16 %v469, %v469
  %v534 = vpack.c.b16 %v470, %v470
  %v535 = vpack.c.b16 %v471, %v471
  %v536 = vpack.c.b16 %v472, %v472
  %v537 = vpack.c.b16 %v473, %v473
  %v538 = vpack.c.b16 %v474, %v474
  %v539 = vpack.c.b16 %v475, %v475
  %v540 = vpack.c.b16 %v476, %v476
  %v541 = vpack.c.b16 %v477, %v477
  %v542 = vpack.c.b16 %v478, %v478
  %v543 = vpack.c.b16 %v479, %v479
  %v544 = vpack.c.b16 %v480, %v480
  %v545 = vpack.c.b16 %v481, %v481
  %v546 = vpack.c.b16 %v482, %v482
  %v547 = vpack.c.b16 %v483, %v483
  %v548 = vpack.c.b16 %v484, %v484
  %v549 = vpack.c.b16 %v485, %v485
  %v550 = vpack.c.b16 %v486, %v486
  %v551 = vpack.c.b16 %v487, %v487
  %v552 = vpack.c.b16 %v488, %v488
  %v553 = vpack.c.b16 %v489, %v489
  %v554 = vpack.c.b16 %v490, %v490
  %v555 = vpack.c.b16 %v491, %v491
  %v556 = vpack.c.b16 %v492, %v492
  %v557 = vpack.c.b16 %v493, %v493
  %v558 = vpack.c.b16 %v494, %v494
  %v559 = vpack.c.b16 %v495, %v495
  %v560 = vpack.c.b16 %v496, %v496
  %v561 = vpack.c.b16 %v497, %v497
  %v562 = vpack.c.b16 %v498, %v498
  %v563 = vpack.c.b16 %v499, %v499
  %v564 = vpack.c.b16 %v500, %v500
  %v565 = vpack.c.b16 %v501, %v501
  %v566 = vpack.c.b16 %v502, %v502
  %v567 = vpack.c.b16 %v503, %v503
  %v568 = vpack.c.b16 %v504, %v504
  %v569 = vpack.c.b16 %v505, %v505
  %v570 = vpack.c.b16 %v506, %v506
  %v571 = vpack.c.b16 %v507, %v507
  %v572 = vpack.c.b16 %v508, %v508
  %637 = vst [vmem:[%s4] sm:$0xf] %v509
  %638 = vst [vmem:[%s4 + $0x4] sm:$0xf] %v510
  %639 = vst [vmem:[%s4 + $0x8] sm:$0xf] %v511
  %640 = vst [vmem:[%s4 + $0xc] sm:$0xf] %v512
  %641 = vst [vmem:[%s4 + $0x10] sm:$0xf] %v513
  %642 = vst [vmem:[%s4 + $0x14] sm:$0xf] %v514
  %643 = vst [vmem:[%s4 + $0x18] sm:$0xf] %v515
  %644 = vst [vmem:[%s4 + $0x1c] sm:$0xf] %v516
  %645 = vst [vmem:[%s4 + $0x20] sm:$0xf] %v517
  %646 = vst [vmem:[%s4 + $0x24] sm:$0xf] %v518
  %647 = vst [vmem:[%s4 + $0x28] sm:$0xf] %v519
  %648 = vst [vmem:[%s4 + $0x2c] sm:$0xf] %v520
  %649 = vst [vmem:[%s4 + $0x30] sm:$0xf] %v521
  %650 = vst [vmem:[%s4 + $0x34] sm:$0xf] %v522
  %651 = vst [vmem:[%s4 + $0x38] sm:$0xf] %v523
  %652 = vst [vmem:[%s4 + $0x3c] sm:$0xf] %v524
  %653 = vst [vmem:[%s4 + $0x40] sm:$0xf] %v525
  %654 = vst [vmem:[%s4 + $0x44] sm:$0xf] %v526
  %655 = vst [vmem:[%s4 + $0x48] sm:$0xf] %v527
  %656 = vst [vmem:[%s4 + $0x4c] sm:$0xf] %v528
  %657 = vst [vmem:[%s4 + $0x50] sm:$0xf] %v529
  %658 = vst [vmem:[%s4 + $0x54] sm:$0xf] %v530
  %659 = vst [vmem:[%s4 + $0x58] sm:$0xf] %v531
  %660 = vst [vmem:[%s4 + $0x5c] sm:$0xf] %v532
  %661 = vst [vmem:[%s4 + $0x60] sm:$0xf] %v533
  %662 = vst [vmem:[%s4 + $0x64] sm:$0xf] %v534
  %663 = vst [vmem:[%s4 + $0x68] sm:$0xf] %v535
  %664 = vst [vmem:[%s4 + $0x6c] sm:$0xf] %v536
  %665 = vst [vmem:[%s4 + $0x70] sm:$0xf] %v537
  %666 = vst [vmem:[%s4 + $0x74] sm:$0xf] %v538
  %667 = vst [vmem:[%s4 + $0x78] sm:$0xf] %v539
  %668 = vst [vmem:[%s4 + $0x7c] sm:$0xf] %v540
  %669 = vst [vmem:[%s4 + $0x80] sm:$0xf] %v541
  %670 = vst [vmem:[%s4 + $0x84] sm:$0xf] %v542
  %671 = vst [vmem:[%s4 + $0x88] sm:$0xf] %v543
  %672 = vst [vmem:[%s4 + $0x8c] sm:$0xf] %v544
  %673 = vst [vmem:[%s4 + $0x90] sm:$0xf] %v545
  %674 = vst [vmem:[%s4 + $0x94] sm:$0xf] %v546
  %675 = vst [vmem:[%s4 + $0x98] sm:$0xf] %v547
  %676 = vst [vmem:[%s4 + $0x9c] sm:$0xf] %v548
  %677 = vst [vmem:[%s4 + $0xa0] sm:$0xf] %v549
  %678 = vst [vmem:[%s4 + $0xa4] sm:$0xf] %v550
  %679 = vst [vmem:[%s4 + $0xa8] sm:$0xf] %v551
  %680 = vst [vmem:[%s4 + $0xac] sm:$0xf] %v552
  %681 = vst [vmem:[%s4 + $0xb0] sm:$0xf] %v553
  %682 = vst [vmem:[%s4 + $0xb4] sm:$0xf] %v554
  %683 = vst [vmem:[%s4 + $0xb8] sm:$0xf] %v555
  %684 = vst [vmem:[%s4 + $0xbc] sm:$0xf] %v556
  %685 = vst [vmem:[%s4 + $0xc0] sm:$0xf] %v557
  %686 = vst [vmem:[%s4 + $0xc4] sm:$0xf] %v558
  %687 = vst [vmem:[%s4 + $0xc8] sm:$0xf] %v559
  %688 = vst [vmem:[%s4 + $0xcc] sm:$0xf] %v560
  %689 = vst [vmem:[%s4 + $0xd0] sm:$0xf] %v561
  %690 = vst [vmem:[%s4 + $0xd4] sm:$0xf] %v562
  %691 = vst [vmem:[%s4 + $0xd8] sm:$0xf] %v563
  %692 = vst [vmem:[%s4 + $0xdc] sm:$0xf] %v564
  %693 = vst [vmem:[%s4 + $0xe0] sm:$0xf] %v565
  %694 = vst [vmem:[%s4 + $0xe4] sm:$0xf] %v566
  %695 = vst [vmem:[%s4 + $0xe8] sm:$0xf] %v567
  %696 = vst [vmem:[%s4 + $0xec] sm:$0xf] %v568
  %697 = vst [vmem:[%s4 + $0xf0] sm:$0xf] %v569
  %698 = vst [vmem:[%s4 + $0xf4] sm:$0xf] %v570
  %699 = vst [vmem:[%s4 + $0xf8] sm:$0xf] %v571
  %700 = vst [vmem:[%s4 + $0xfc] sm:$0xf] %v572
  // Predicated region
  $region18: #{residual_block_forward.5} parent=0 // pred_check
    _
  $region19: #{residual_block_forward.5} parent=0 // pred_check_branch
    %702 = sbr.rel (0) target = $region21
  $region20: #{residual_block_forward.5} parent=0 // pred_region
    _
  $region21: #{residual_block_forward.5} parent=0 // pred_fallthru
    _
  // Predicated region
  $region22: #{residual_block_forward.5} parent=0 // pred_check
    _
  $region23: #{residual_block_forward.5} parent=0 // pred_check_branch
    %704 = sbr.rel (0) target = $region25
  $region24: #{residual_block_forward.5} parent=0 // pred_region
    _
  $region25: #{residual_block_forward.5} parent=0 // pred_fallthru
    _

// kernel: residual_block_forward.4
$region0: #{residual_block_forward.4}
  #allocation0 [shape = 'u32[]', space=smem, size = 0x4, offset = 0x4, fixed_abs, tag = 'smem constant byte address 0x4 - core index']
  #allocation1 [shape = 'u32[144,128]{1,0:T(1,128)}', space=vmem, size = 0x12000, scoped, tag = 'internal scratch']
  #allocation2 [shape = 'f32[2,128]{1,0:T(2,128)}', space=vmem, size = 0x400, scoped, tag = 'scratch operand']
  %s0 = inlined_call_operand.vmem [shape: bf16[512,36], index: 0, kind: input, shape index: {}]
  %s1 = inlined_call_operand.vmem [shape: bf16[36,128], index: 1, kind: input, shape index: {}]
  %s2 = inlined_call_operand.vmem [shape: bf16[512,128], index: 2, kind: output, shape index: {0}]
  %s3 = inlined_call_operand.vmem [shape: f32[2,128], index: 3, kind: output, shape index: {1}]
  %4 = xla_tuple %s2, %s3
  %s5 = sld [smem:[#allocation0]]
  $region34: #{residual_block_forward.4} parent=0
    _
  %s7 = ssub.s32 1, %s5
  %s8 = scalar_select 0, %s7, %s5
  // Predicated region
  $region2: #{residual_block_forward.4} parent=0 // pred_check
    _
  $region3: #{residual_block_forward.4} parent=0 // pred_check_branch
    %10 = sbr.rel (0) target = $region5
  $region4: #{residual_block_forward.4} parent=0 // pred_region
    _
  $region5: #{residual_block_forward.4} parent=0 // pred_fallthru
    _
  // Predicated region
  $region6: #{residual_block_forward.4} parent=0 // pred_check
    _
  $region7: #{residual_block_forward.4} parent=0 // pred_check_branch
    %12 = sbr.rel (0) target = $region9
  $region8: #{residual_block_forward.4} parent=0 // pred_region
    _
  $region9: #{residual_block_forward.4} parent=0 // pred_fallthru
    _
  %p14 = scmp.eq.s32.totalorder 0, 0
  // Predicated region
  $region10: #{residual_block_forward.4} parent=0 // pred_check
    %p15 = pneg %p14
  $region11: #{residual_block_forward.4} parent=0 // pred_check_branch
    %17 = sbr.rel (%p15) target = $region13
  $region12: #{residual_block_forward.4} parent=0 // pred_region
    %18 = vst [vmem:[#allocation2] sm:$0x3] 0.0
  $region13: #{residual_block_forward.4} parent=0 // pred_fallthru
    _
  %v19 = vld [vmem:[%s0] sm:$0xf]
  %v20 = vld [vmem:[%s0 + $0x4] sm:$0xf]
  %v21 = vld [vmem:[%s0 + $0x8] sm:$0xf]
  %v22 = vld [vmem:[%s0 + $0xc] sm:$0xf]
  %v23 = vld [vmem:[%s0 + $0x10] sm:$0xf]
  %v24 = vld [vmem:[%s0 + $0x14] sm:$0xf]
  %v25 = vld [vmem:[%s0 + $0x18] sm:$0xf]
  %v26 = vld [vmem:[%s0 + $0x1c] sm:$0xf]
  %v27 = vld [vmem:[%s0 + $0x20] sm:$0xf]
  %v28 = vld [vmem:[%s0 + $0x24] sm:$0xf]
  %v29 = vld [vmem:[%s0 + $0x28] sm:$0xf]
  %v30 = vld [vmem:[%s0 + $0x2c] sm:$0xf]
  %v31 = vld [vmem:[%s0 + $0x30] sm:$0xf]
  %v32 = vld [vmem:[%s0 + $0x34] sm:$0xf]
  %v33 = vld [vmem:[%s0 + $0x38] sm:$0xf]
  %v34 = vld [vmem:[%s0 + $0x3c] sm:$0xf]
  %v35 = vld [vmem:[%s0 + $0x40] sm:$0xf]
  %v36 = vld [vmem:[%s0 + $0x44] sm:$0xf]
  %v37 = vld [vmem:[%s0 + $0x48] sm:$0xf]
  %v38 = vld [vmem:[%s0 + $0x4c] sm:$0xf]
  %v39 = vld [vmem:[%s0 + $0x50] sm:$0xf]
  %v40 = vld [vmem:[%s0 + $0x54] sm:$0xf]
  %v41 = vld [vmem:[%s0 + $0x58] sm:$0xf]
  %v42 = vld [vmem:[%s0 + $0x5c] sm:$0xf]
  %v43 = vld [vmem:[%s0 + $0x60] sm:$0xf]
  %v44 = vld [vmem:[%s0 + $0x64] sm:$0xf]
  %v45 = vld [vmem:[%s0 + $0x68] sm:$0xf]
  %v46 = vld [vmem:[%s0 + $0x6c] sm:$0xf]
  %v47 = vld [vmem:[%s0 + $0x70] sm:$0xf]
  %v48 = vld [vmem:[%s0 + $0x74] sm:$0xf]
  %v49 = vld [vmem:[%s0 + $0x78] sm:$0xf]
  %v50 = vld [vmem:[%s0 + $0x7c] sm:$0xf]
  %v51 = vld [vmem:[%s0 + $0x80] sm:$0xf]
  %v52 = vld [vmem:[%s0 + $0x84] sm:$0xf]
  %v53 = vld [vmem:[%s0 + $0x88] sm:$0xf]
  %v54 = vld [vmem:[%s0 + $0x8c] sm:$0xf]
  %v55 = vld [vmem:[%s0 + $0x90] sm:$0xf]
  %v56 = vld [vmem:[%s0 + $0x94] sm:$0xf]
  %v57 = vld [vmem:[%s0 + $0x98] sm:$0xf]
  %v58 = vld [vmem:[%s0 + $0x9c] sm:$0xf]
  %v59 = vld [vmem:[%s0 + $0xa0] sm:$0xf]
  %v60 = vld [vmem:[%s0 + $0xa4] sm:$0xf]
  %v61 = vld [vmem:[%s0 + $0xa8] sm:$0xf]
  %v62 = vld [vmem:[%s0 + $0xac] sm:$0xf]
  %v63 = vld [vmem:[%s0 + $0xb0] sm:$0xf]
  %v64 = vld [vmem:[%s0 + $0xb4] sm:$0xf]
  %v65 = vld [vmem:[%s0 + $0xb8] sm:$0xf]
  %v66 = vld [vmem:[%s0 + $0xbc] sm:$0xf]
  %v67 = vld [vmem:[%s0 + $0xc0] sm:$0xf]
  %v68 = vld [vmem:[%s0 + $0xc4] sm:$0xf]
  %v69 = vld [vmem:[%s0 + $0xc8] sm:$0xf]
  %v70 = vld [vmem:[%s0 + $0xcc] sm:$0xf]
  %v71 = vld [vmem:[%s0 + $0xd0] sm:$0xf]
  %v72 = vld [vmem:[%s0 + $0xd4] sm:$0xf]
  %v73 = vld [vmem:[%s0 + $0xd8] sm:$0xf]
  %v74 = vld [vmem:[%s0 + $0xdc] sm:$0xf]
  %v75 = vld [vmem:[%s0 + $0xe0] sm:$0xf]
  %v76 = vld [vmem:[%s0 + $0xe4] sm:$0xf]
  %v77 = vld [vmem:[%s0 + $0xe8] sm:$0xf]
  %v78 = vld [vmem:[%s0 + $0xec] sm:$0xf]
  %v79 = vld [vmem:[%s0 + $0xf0] sm:$0xf]
  %v80 = vld [vmem:[%s0 + $0xf4] sm:$0xf]
  %v81 = vld [vmem:[%s0 + $0xf8] sm:$0xf]
  %v82 = vld [vmem:[%s0 + $0xfc] sm:$0xf]
  %v83 = vld [vmem:[%s1] sm:$0xf]
  %v84 = vld [vmem:[%s1 + $0x4] sm:$0xf]
  %v85 = vld [vmem:[%s1 + $0x8] sm:$0xf]
  %v86 = vld [vmem:[%s1 + $0xc] sm:$0xf]
  %v87 = vld [vmem:[%s1 + $0x10] sm:$0x3]
  %v152 = vunpack.c.l.b16 %v19
  %v153 = vunpack.c.l.b16 %v20
  %v154 = vunpack.c.l.b16 %v21
  %v155 = vunpack.c.l.b16 %v22
  %v156 = vunpack.c.l.b16 %v23
  %v157 = vunpack.c.l.b16 %v24
  %v158 = vunpack.c.l.b16 %v25
  %v159 = vunpack.c.l.b16 %v26
  %v160 = vunpack.c.l.b16 %v27
  %v161 = vunpack.c.l.b16 %v28
  %v162 = vunpack.c.l.b16 %v29
  %v163 = vunpack.c.l.b16 %v30
  %v164 = vunpack.c.l.b16 %v31
  %v165 = vunpack.c.l.b16 %v32
  %v166 = vunpack.c.l.b16 %v33
  %v167 = vunpack.c.l.b16 %v34
  %v168 = vunpack.c.l.b16 %v35
  %v169 = vunpack.c.l.b16 %v36
  %v170 = vunpack.c.l.b16 %v37
  %v171 = vunpack.c.l.b16 %v38
  %v172 = vunpack.c.l.b16 %v39
  %v173 = vunpack.c.l.b16 %v40
  %v174 = vunpack.c.l.b16 %v41
  %v175 = vunpack.c.l.b16 %v42
  %v176 = vunpack.c.l.b16 %v43
  %v177 = vunpack.c.l.b16 %v44
  %v178 = vunpack.c.l.b16 %v45
  %v179 = vunpack.c.l.b16 %v46
  %v180 = vunpack.c.l.b16 %v47
  %v181 = vunpack.c.l.b16 %v48
  %v182 = vunpack.c.l.b16 %v49
  %v183 = vunpack.c.l.b16 %v50
  %v184 = vunpack.c.l.b16 %v51
  %v185 = vunpack.c.l.b16 %v52
  %v186 = vunpack.c.l.b16 %v53
  %v187 = vunpack.c.l.b16 %v54
  %v188 = vunpack.c.l.b16 %v55
  %v189 = vunpack.c.l.b16 %v56
  %v190 = vunpack.c.l.b16 %v57
  %v191 = vunpack.c.l.b16 %v58
  %v192 = vunpack.c.l.b16 %v59
  %v193 = vunpack.c.l.b16 %v60
  %v194 = vunpack.c.l.b16 %v61
  %v195 = vunpack.c.l.b16 %v62
  %v196 = vunpack.c.l.b16 %v63
  %v197 = vunpack.c.l.b16 %v64
  %v198 = vunpack.c.l.b16 %v65
  %v199 = vunpack.c.l.b16 %v66
  %v200 = vunpack.c.l.b16 %v67
  %v201 = vunpack.c.l.b16 %v68
  %v202 = vunpack.c.l.b16 %v69
  %v203 = vunpack.c.l.b16 %v70
  %v204 = vunpack.c.l.b16 %v71
  %v205 = vunpack.c.l.b16 %v72
  %v206 = vunpack.c.l.b16 %v73
  %v207 = vunpack.c.l.b16 %v74
  %v208 = vunpack.c.l.b16 %v75
  %v209 = vunpack.c.l.b16 %v76
  %v210 = vunpack.c.l.b16 %v77
  %v211 = vunpack.c.l.b16 %v78
  %v212 = vunpack.c.l.b16 %v79
  %v213 = vunpack.c.l.b16 %v80
  %v214 = vunpack.c.l.b16 %v81
  %v215 = vunpack.c.l.b16 %v82
  %v216 = vpack.c.b16 %v153, %v152
  %v217 = vpack.c.b16 %v155, %v154
  %v218 = vpack.c.b16 %v157, %v156
  %v219 = vpack.c.b16 %v159, %v158
  %v220 = vpack.c.b16 %v161, %v160
  %v221 = vpack.c.b16 %v163, %v162
  %v222 = vpack.c.b16 %v165, %v164
  %v223 = vpack.c.b16 %v167, %v166
  %v224 = vpack.c.b16 %v169, %v168
  %v225 = vpack.c.b16 %v171, %v170
  %v226 = vpack.c.b16 %v173, %v172
  %v227 = vpack.c.b16 %v175, %v174
  %v228 = vpack.c.b16 %v177, %v176
  %v229 = vpack.c.b16 %v179, %v178
  %v230 = vpack.c.b16 %v181, %v180
  %v231 = vpack.c.b16 %v183, %v182
  %v232 = vpack.c.b16 %v185, %v184
  %v233 = vpack.c.b16 %v187, %v186
  %v234 = vpack.c.b16 %v189, %v188
  %v235 = vpack.c.b16 %v191, %v190
  %v236 = vpack.c.b16 %v193, %v192
  %v237 = vpack.c.b16 %v195, %v194
  %v238 = vpack.c.b16 %v197, %v196
  %v239 = vpack.c.b16 %v199, %v198
  %v240 = vpack.c.b16 %v201, %v200
  %v241 = vpack.c.b16 %v203, %v202
  %v242 = vpack.c.b16 %v205, %v204
  %v243 = vpack.c.b16 %v207, %v206
  %v244 = vpack.c.b16 %v209, %v208
  %v245 = vpack.c.b16 %v211, %v210
  %v246 = vpack.c.b16 %v213, %v212
  %v247 = vpack.c.b16 %v215, %v214
  %v253 = vunpack.c.l.b16 %v83
  %v254 = vunpack.c.l.b16 %v84
  %v255 = vunpack.c.l.b16 %v85
  %v256 = vunpack.c.l.b16 %v86
  %v257 = vunpack.c.l.b16 %v87
  %v258 = vpack.c.b16 %v254, %v253
  %v259 = vpack.c.b16 %v256, %v255
  %v260 = vpack.c.b16 %v257, %v257
  %vm263 = vcmask 293888
  %v265 = vsel %vm263, %v216, 0
  %v268 = vsel %vm263, %v217, 0
  %v271 = vsel %vm263, %v218, 0
  %v274 = vsel %vm263, %v219, 0
  %v277 = vsel %vm263, %v220, 0
  %v280 = vsel %vm263, %v221, 0
  %v283 = vsel %vm263, %v222, 0
  %v286 = vsel %vm263, %v223, 0
  %v289 = vsel %vm263, %v224, 0
  %v292 = vsel %vm263, %v225, 0
  %v295 = vsel %vm263, %v226, 0
  %v298 = vsel %vm263, %v227, 0
  %v301 = vsel %vm263, %v228, 0
  %v304 = vsel %vm263, %v229, 0
  %v307 = vsel %vm263, %v230, 0
  %v310 = vsel %vm263, %v231, 0
  %v313 = vsel %vm263, %v232, 0
  %v316 = vsel %vm263, %v233, 0
  %v319 = vsel %vm263, %v234, 0
  %v322 = vsel %vm263, %v235, 0
  %v325 = vsel %vm263, %v236, 0
  %v328 = vsel %vm263, %v237, 0
  %v331 = vsel %vm263, %v238, 0
  %v334 = vsel %vm263, %v239, 0
  %v337 = vsel %vm263, %v240, 0
  %v340 = vsel %vm263, %v241, 0
  %v343 = vsel %vm263, %v242, 0
  %v346 = vsel %vm263, %v243, 0
  %v349 = vsel %vm263, %v244, 0
  %v352 = vsel %vm263, %v245, 0
  %v355 = vsel %vm263, %v246, 0
  %v358 = vsel %vm263, %v247, 0
  %vm360 = vcmask 1041408
  %v362 = vsel %vm360, %v260, 0
  %364 = vmatprep.subr.bf16.mxu0 0
  %365 = vmatpush1.bf16.msra.mxu0 %v258
  %366 = vmatprep.subr.bf16.mxu0 0
  %367 = vmatpush1.bf16.msra.mxu0 %v259
  %368 = vmatprep.subr.bf16.mxu0 0
  %369 = vmatpush1.bf16.msra.mxu0 %v362
  %370 = vmatprep.subr.bf16.mxu0 0
  %371 = vmatpush1.bf16.msra.mxu0 0
  %372 = vmatprep.subr.bf16.mxu0 0
  %373 = vmatpush1.bf16.msra.mxu0 0
  %374 = vmatprep.subr.bf16.mxu0 0
  %375 = vmatpush1.bf16.msra.mxu0 0
  %376 = vmatprep.subr.bf16.mxu0 0
  %377 = vmatpush1.bf16.msra.mxu0 0
  %378 = vmatprep.subr.bf16.mxu0 0
  %379 = vmatpush1.bf16.msra.mxu0 0
  %380 = vmatprep.subr.bf16.mxu0 0
  %381 = vmatpush1.bf16.msra.mxu0 0
  %382 = vmatprep.subr.bf16.mxu0 0
  %383 = vmatpush1.bf16.msra.mxu0 0
  %384 = vmatprep.subr.bf16.mxu0 0
  %385 = vmatpush1.bf16.msra.mxu0 0
  %386 = vmatprep.subr.bf16.mxu0 0
  %387 = vmatpush1.bf16.msra.mxu0 0
  %388 = vmatprep.subr.bf16.mxu0 0
  %389 = vmatpush1.bf16.msra.mxu0 0
  %390 = vmatprep.subr.bf16.mxu0 0
  %391 = vmatpush1.bf16.msra.mxu0 0
  %392 = vmatprep.subr.bf16.mxu0 0
  %393 = vmatpush1.bf16.msra.mxu0 0
  %394 = vmatprep.subr.bf16.mxu0 0
  %395 = vmatpush1.bf16.msra.mxu0 0
  %396 = vmatprep.mubr.bf16.mxu0 0
  %397 = vmatmul.mubr.bf16.gmra.mrb[0].mxu0 %v265
  %v398 = vpop.f32.mrb[0].mxu0
  %v399 = vadd.f32 0.0, %v398
  %v400 = vpop.f32.mrb[0].mxu0
  %v401 = vpop.f32.mrb[0].mxu0
  %v402 = vadd.f32 0.0, %v401
  %v403 = vpop.f32.mrb[0].mxu0
  %404 = vmatprep.mubr.bf16.mxu0 0
  %405 = vmatmul.mubr.bf16.gmra.mrb[0].mxu0 %v268
  %v406 = vpop.f32.mrb[0].mxu0
  %v407 = vadd.f32 0.0, %v406
  %v408 = vpop.f32.mrb[0].mxu0
  %v409 = vpop.f32.mrb[0].mxu0
  %v410 = vadd.f32 0.0, %v409
  %v411 = vpop.f32.mrb[0].mxu0
  %412 = vmatprep.mubr.bf16.mxu0 0
  %413 = vmatmul.mubr.bf16.gmra.mrb[0].mxu0 %v271
  %v414 = vpop.f32.mrb[0].mxu0
  %v415 = vadd.f32 0.0, %v414
  %v416 = vpop.f32.mrb[0].mxu0
  %v417 = vpop.f32.mrb[0].mxu0
  %v418 = vadd.f32 0.0, %v417
  %v419 = vpop.f32.mrb[0].mxu0
  %420 = vmatprep.mubr.bf16.mxu0 0
  %421 = vmatmul.mubr.bf16.gmra.mrb[0].mxu0 %v274
  %v422 = vpop.f32.mrb[0].mxu0
  %v423 = vadd.f32 0.0, %v422
  %v424 = vpop.f32.mrb[0].mxu0
  %v425 = vpop.f32.mrb[0].mxu0
  %v426 = vadd.f32 0.0, %v425
  %v427 = vpop.f32.mrb[0].mxu0
  %428 = vmatprep.mubr.bf16.mxu0 0
  %429 = vmatmul.mubr.bf16.gmra.mrb[0].mxu0 %v277
  %v430 = vpop.f32.mrb[0].mxu0
  %v431 = vadd.f32 0.0, %v430
  %v432 = vpop.f32.mrb[0].mxu0
  %v433 = vpop.f32.mrb[0].mxu0
  %v434 = vadd.f32 0.0, %v433
  %v435 = vpop.f32.mrb[0].mxu0
  %436 = vmatprep.mubr.bf16.mxu0 0
  %437 = vmatmul.mubr.bf16.gmra.mrb[0].mxu0 %v280
  %v438 = vpop.f32.mrb[0].mxu0
  %v439 = vadd.f32 0.0, %v438
  %v440 = vpop.f32.mrb[0].mxu0
  %v441 = vpop.f32.mrb[0].mxu0
  %v442 = vadd.f32 0.0, %v441
  %v443 = vpop.f32.mrb[0].mxu0
  %444 = vmatprep.mubr.bf16.mxu0 0
  %445 = vmatmul.mubr.bf16.gmra.mrb[0].mxu0 %v283
  %v446 = vpop.f32.mrb[0].mxu0
  %v447 = vadd.f32 0.0, %v446
  %v448 = vpop.f32.mrb[0].mxu0
  %v449 = vpop.f32.mrb[0].mxu0
  %v450 = vadd.f32 0.0, %v449
  %v451 = vpop.f32.mrb[0].mxu0
  %452 = vmatprep.mubr.bf16.mxu0 0
  %453 = vmatmul.mubr.bf16.gmra.mrb[0].mxu0 %v286
  %v454 = vpop.f32.mrb[0].mxu0
  %v455 = vadd.f32 0.0, %v454
  %v456 = vpop.f32.mrb[0].mxu0
  %v457 = vpop.f32.mrb[0].mxu0
  %v458 = vadd.f32 0.0, %v457
  %v459 = vpop.f32.mrb[0].mxu0
  %460 = vmatprep.mubr.bf16.mxu0 0
  %461 = vmatmul.mubr.bf16.gmra.mrb[0].mxu0 %v289
  %v462 = vpop.f32.mrb[0].mxu0
  %v463 = vadd.f32 0.0, %v462
  %v464 = vpop.f32.mrb[0].mxu0
  %v465 = vpop.f32.mrb[0].mxu0
  %v466 = vadd.f32 0.0, %v465
  %v467 = vpop.f32.mrb[0].mxu0
  %468 = vmatprep.mubr.bf16.mxu0 0
  %469 = vmatmul.mubr.bf16.gmra.mrb[0].mxu0 %v292
  %v470 = vpop.f32.mrb[0].mxu0
  %v471 = vadd.f32 0.0, %v470
  %v472 = vpop.f32.mrb[0].mxu0
  %v473 = vpop.f32.mrb[0].mxu0
  %v474 = vadd.f32 0.0, %v473
  %v475 = vpop.f32.mrb[0].mxu0
  %476 = vmatprep.mubr.bf16.mxu0 0
  %477 = vmatmul.mubr.bf16.gmra.mrb[0].mxu0 %v295
  %v478 = vpop.f32.mrb[0].mxu0
  %v479 = vadd.f32 0.0, %v478
  %v480 = vpop.f32.mrb[0].mxu0
  %v481 = vpop.f32.mrb[0].mxu0
  %v482 = vadd.f32 0.0, %v481
  %v483 = vpop.f32.mrb[0].mxu0
  %484 = vmatprep.mubr.bf16.mxu0 0
  %485 = vmatmul.mubr.bf16.gmra.mrb[0].mxu0 %v298
  %v486 = vpop.f32.mrb[0].mxu0
  %v487 = vadd.f32 0.0, %v486
  %v488 = vpop.f32.mrb[0].mxu0
  %v489 = vpop.f32.mrb[0].mxu0
  %v490 = vadd.f32 0.0, %v489
  %v491 = vpop.f32.mrb[0].mxu0
  %492 = vmatprep.mubr.bf16.mxu0 0
  %493 = vmatmul.mubr.bf16.gmra.mrb[0].mxu0 %v301
  %v494 = vpop.f32.mrb[0].mxu0
  %v495 = vadd.f32 0.0, %v494
  %v496 = vpop.f32.mrb[0].mxu0
  %v497 = vpop.f32.mrb[0].mxu0
  %v498 = vadd.f32 0.0, %v497
  %v499 = vpop.f32.mrb[0].mxu0
  %500 = vmatprep.mubr.bf16.mxu0 0
  %501 = vmatmul.mubr.bf16.gmra.mrb[0].mxu0 %v304
  %v502 = vpop.f32.mrb[0].mxu0
  %v503 = vadd.f32 0.0, %v502
  %v504 = vpop.f32.mrb[0].mxu0
  %v505 = vpop.f32.mrb[0].mxu0
  %v506 = vadd.f32 0.0, %v505
  %v507 = vpop.f32.mrb[0].mxu0
  %508 = vmatprep.mubr.bf16.mxu0 0
  %509 = vmatmul.mubr.bf16.gmra.mrb[0].mxu0 %v307
  %v510 = vpop.f32.mrb[0].mxu0
  %v511 = vadd.f32 0.0, %v510
  %v512 = vpop.f32.mrb[0].mxu0
  %v513 = vpop.f32.mrb[0].mxu0
  %v514 = vadd.f32 0.0, %v513
  %v515 = vpop.f32.mrb[0].mxu0
  %516 = vmatprep.mubr.bf16.mxu0 0
  %517 = vmatmul.mubr.bf16.gmra.mrb[0].mxu0 %v310
  %v518 = vpop.f32.mrb[0].mxu0
  %v519 = vadd.f32 0.0, %v518
  %v520 = vpop.f32.mrb[0].mxu0
  %v521 = vpop.f32.mrb[0].mxu0
  %v522 = vadd.f32 0.0, %v521
  %v523 = vpop.f32.mrb[0].mxu0
  %524 = vmatprep.mubr.bf16.mxu0 0
  %525 = vmatmul.mubr.bf16.gmra.mrb[0].mxu0 %v313
  %v526 = vpop.f32.mrb[0].mxu0
  %v527 = vadd.f32 0.0, %v526
  %v528 = vpop.f32.mrb[0].mxu0
  %v529 = vpop.f32.mrb[0].mxu0
  %v530 = vadd.f32 0.0, %v529
  %v531 = vpop.f32.mrb[0].mxu0
  %532 = vmatprep.mubr.bf16.mxu0 0
  %533 = vmatmul.mubr.bf16.gmra.mrb[0].mxu0 %v316
  %v534 = vpop.f32.mrb[0].mxu0
  %v535 = vadd.f32 0.0, %v534
  %v536 = vpop.f32.mrb[0].mxu0
  %v537 = vpop.f32.mrb[0].mxu0
  %v538 = vadd.f32 0.0, %v537
  %v539 = vpop.f32.mrb[0].mxu0
  %540 = vmatprep.mubr.bf16.mxu0 0
  %541 = vmatmul.mubr.bf16.gmra.mrb[0].mxu0 %v319
  %v542 = vpop.f32.mrb[0].mxu0
  %v543 = vadd.f32 0.0, %v542
  %v544 = vpop.f32.mrb[0].mxu0
  %v545 = vpop.f32.mrb[0].mxu0
  %v546 = vadd.f32 0.0, %v545
  %v547 = vpop.f32.mrb[0].mxu0
  %548 = vmatprep.mubr.bf16.mxu0 0
  %549 = vmatmul.mubr.bf16.gmra.mrb[0].mxu0 %v322
  %v550 = vpop.f32.mrb[0].mxu0
  %v551 = vadd.f32 0.0, %v550
  %v552 = vpop.f32.mrb[0].mxu0
  %v553 = vpop.f32.mrb[0].mxu0
  %v554 = vadd.f32 0.0, %v553
  %v555 = vpop.f32.mrb[0].mxu0
  %556 = vmatprep.mubr.bf16.mxu0 0
  %557 = vmatmul.mubr.bf16.gmra.mrb[0].mxu0 %v325
  %v558 = vpop.f32.mrb[0].mxu0
  %v559 = vadd.f32 0.0, %v558
  %v560 = vpop.f32.mrb[0].mxu0
  %v561 = vpop.f32.mrb[0].mxu0
  %v562 = vadd.f32 0.0, %v561
  %v563 = vpop.f32.mrb[0].mxu0
  %564 = vmatprep.mubr.bf16.mxu0 0
  %565 = vmatmul.mubr.bf16.gmra.mrb[0].mxu0 %v328
  %v566 = vpop.f32.mrb[0].mxu0
  %v567 = vadd.f32 0.0, %v566
  %v568 = vpop.f32.mrb[0].mxu0
  %v569 = vpop.f32.mrb[0].mxu0
  %v570 = vadd.f32 0.0, %v569
  %v571 = vpop.f32.mrb[0].mxu0
  %572 = vmatprep.mubr.bf16.mxu0 0
  %573 = vmatmul.mubr.bf16.gmra.mrb[0].mxu0 %v331
  %v574 = vpop.f32.mrb[0].mxu0
  %v575 = vadd.f32 0.0, %v574
  %v576 = vpop.f32.mrb[0].mxu0
  %v577 = vpop.f32.mrb[0].mxu0
  %v578 = vadd.f32 0.0, %v577
  %v579 = vpop.f32.mrb[0].mxu0
  %580 = vmatprep.mubr.bf16.mxu0 0
  %581 = vmatmul.mubr.bf16.gmra.mrb[0].mxu0 %v334
  %v582 = vpop.f32.mrb[0].mxu0
  %v583 = vadd.f32 0.0, %v582
  %v584 = vpop.f32.mrb[0].mxu0
  %v585 = vpop.f32.mrb[0].mxu0
  %v586 = vadd.f32 0.0, %v585
  %v587 = vpop.f32.mrb[0].mxu0
  %588 = vmatprep.mubr.bf16.mxu0 0
  %589 = vmatmul.mubr.bf16.gmra.mrb[0].mxu0 %v337
  %v590 = vpop.f32.mrb[0].mxu0
  %v591 = vadd.f32 0.0, %v590
  %v592 = vpop.f32.mrb[0].mxu0
  %v593 = vpop.f32.mrb[0].mxu0
  %v594 = vadd.f32 0.0, %v593
  %v595 = vpop.f32.mrb[0].mxu0
  %596 = vmatprep.mubr.bf16.mxu0 0
  %597 = vmatmul.mubr.bf16.gmra.mrb[0].mxu0 %v340
  %v598 = vpop.f32.mrb[0].mxu0
  %v599 = vadd.f32 0.0, %v598
  %v600 = vpop.f32.mrb[0].mxu0
  %v601 = vpop.f32.mrb[0].mxu0
  %v602 = vadd.f32 0.0, %v601
  %v603 = vpop.f32.mrb[0].mxu0
  %604 = vmatprep.mubr.bf16.mxu0 0
  %605 = vmatmul.mubr.bf16.gmra.mrb[0].mxu0 %v343
  %v606 = vpop.f32.mrb[0].mxu0
  %v607 = vadd.f32 0.0, %v606
  %v608 = vpop.f32.mrb[0].mxu0
  %v609 = vpop.f32.mrb[0].mxu0
  %v610 = vadd.f32 0.0, %v609
  %v611 = vpop.f32.mrb[0].mxu0
  %612 = vmatprep.mubr.bf16.mxu0 0
  %613 = vmatmul.mubr.bf16.gmra.mrb[0].mxu0 %v346
  %v614 = vpop.f32.mrb[0].mxu0
  %v615 = vadd.f32 0.0, %v614
  %v616 = vpop.f32.mrb[0].mxu0
  %v617 = vpop.f32.mrb[0].mxu0
  %v618 = vadd.f32 0.0, %v617
  %v619 = vpop.f32.mrb[0].mxu0
  %620 = vmatprep.mubr.bf16.mxu0 0
  %621 = vmatmul.mubr.bf16.gmra.mrb[0].mxu0 %v349
  %v622 = vpop.f32.mrb[0].mxu0
  %v623 = vadd.f32 0.0, %v622
  %v624 = vpop.f32.mrb[0].mxu0
  %v625 = vpop.f32.mrb[0].mxu0
  %v626 = vadd.f32 0.0, %v625
  %v627 = vpop.f32.mrb[0].mxu0
  %628 = vmatprep.mubr.bf16.mxu0 0
  %629 = vmatmul.mubr.bf16.gmra.mrb[0].mxu0 %v352
  %v630 = vpop.f32.mrb[0].mxu0
  %v631 = vadd.f32 0.0, %v630
  %v632 = vpop.f32.mrb[0].mxu0
  %v633 = vpop.f32.mrb[0].mxu0
  %v634 = vadd.f32 0.0, %v633
  %v635 = vpop.f32.mrb[0].mxu0
  %636 = vmatprep.mubr.bf16.mxu0 0
  %637 = vmatmul.mubr.bf16.gmra.mrb[0].mxu0 %v355
  %v638 = vpop.f32.mrb[0].mxu0
  %v639 = vadd.f32 0.0, %v638
  %v640 = vpop.f32.mrb[0].mxu0
  %v641 = vpop.f32.mrb[0].mxu0
  %v642 = vadd.f32 0.0, %v641
  %v643 = vpop.f32.mrb[0].mxu0
  %644 = vmatprep.mubr.bf16.mxu0 0
  %645 = vmatmul.mubr.bf16.gmra.mrb[0].mxu0 %v358
  %v646 = vpop.f32.mrb[0].mxu0
  %v647 = vadd.f32 0.0, %v646
  %v648 = vpop.f32.mrb[0].mxu0
  %v649 = vpop.f32.mrb[0].mxu0
  %v650 = vadd.f32 0.0, %v649
  %v651 = vpop.f32.mrb[0].mxu0
  %652 = vdwg.mxu0
  %v653 = vpack.c.bf16 %v402, %v399
  %v654 = vpack.c.bf16 %v410, %v407
  %v655 = vpack.c.bf16 %v418, %v415
  %v656 = vpack.c.bf16 %v426, %v423
  %v657 = vpack.c.bf16 %v434, %v431
  %v658 = vpack.c.bf16 %v442, %v439
  %v659 = vpack.c.bf16 %v450, %v447
  %v660 = vpack.c.bf16 %v458, %v455
  %v661 = vpack.c.bf16 %v466, %v463
  %v662 = vpack.c.bf16 %v474, %v471
  %v663 = vpack.c.bf16 %v482, %v479
  %v664 = vpack.c.bf16 %v490, %v487
  %v665 = vpack.c.bf16 %v498, %v495
  %v666 = vpack.c.bf16 %v506, %v503
  %v667 = vpack.c.bf16 %v514, %v511
  %v668 = vpack.c.bf16 %v522, %v519
  %v669 = vpack.c.bf16 %v530, %v527
  %v670 = vpack.c.bf16 %v538, %v535
  %v671 = vpack.c.bf16 %v546, %v543
  %v672 = vpack.c.bf16 %v554, %v551
  %v673 = vpack.c.bf16 %v562, %v559
  %v674 = vpack.c.bf16 %v570, %v567
  %v675 = vpack.c.bf16 %v578, %v575
  %v676 = vpack.c.bf16 %v586, %v583
  %v677 = vpack.c.bf16 %v594, %v591
  %v678 = vpack.c.bf16 %v602, %v599
  %v679 = vpack.c.bf16 %v610, %v607
  %v680 = vpack.c.bf16 %v618, %v615
  %v681 = vpack.c.bf16 %v626, %v623
  %v682 = vpack.c.bf16 %v634, %v631
  %v683 = vpack.c.bf16 %v642, %v639
  %v684 = vpack.c.bf16 %v650, %v647
  %v717 = vunpack.c.l.b16 %v653
  %v718 = vunpack.c.h.b16 %v653
  %v719 = vunpack.c.l.b16 %v654
  %v720 = vunpack.c.h.b16 %v654
  %v721 = vunpack.c.l.b16 %v655
  %v722 = vunpack.c.h.b16 %v655
  %v723 = vunpack.c.l.b16 %v656
  %v724 = vunpack.c.h.b16 %v656
  %v725 = vunpack.c.l.b16 %v657
  %v726 = vunpack.c.h.b16 %v657
  %v727 = vunpack.c.l.b16 %v658
  %v728 = vunpack.c.h.b16 %v658
  %v729 = vunpack.c.l.b16 %v659
  %v730 = vunpack.c.h.b16 %v659
  %v731 = vunpack.c.l.b16 %v660
  %v732 = vunpack.c.h.b16 %v660
  %v733 = vunpack.c.l.b16 %v661
  %v734 = vunpack.c.h.b16 %v661
  %v735 = vunpack.c.l.b16 %v662
  %v736 = vunpack.c.h.b16 %v662
  %v737 = vunpack.c.l.b16 %v663
  %v738 = vunpack.c.h.b16 %v663
  %v739 = vunpack.c.l.b16 %v664
  %v740 = vunpack.c.h.b16 %v664
  %v741 = vunpack.c.l.b16 %v665
  %v742 = vunpack.c.h.b16 %v665
  %v743 = vunpack.c.l.b16 %v666
  %v744 = vunpack.c.h.b16 %v666
  %v745 = vunpack.c.l.b16 %v667
  %v746 = vunpack.c.h.b16 %v667
  %v747 = vunpack.c.l.b16 %v668
  %v748 = vunpack.c.h.b16 %v668
  %v749 = vunpack.c.l.b16 %v669
  %v750 = vunpack.c.h.b16 %v669
  %v751 = vunpack.c.l.b16 %v670
  %v752 = vunpack.c.h.b16 %v670
  %v753 = vunpack.c.l.b16 %v671
  %v754 = vunpack.c.h.b16 %v671
  %v755 = vunpack.c.l.b16 %v672
  %v756 = vunpack.c.h.b16 %v672
  %v757 = vunpack.c.l.b16 %v673
  %v758 = vunpack.c.h.b16 %v673
  %v759 = vunpack.c.l.b16 %v674
  %v760 = vunpack.c.h.b16 %v674
  %v761 = vunpack.c.l.b16 %v675
  %v762 = vunpack.c.h.b16 %v675
  %v763 = vunpack.c.l.b16 %v676
  %v764 = vunpack.c.h.b16 %v676
  %v765 = vunpack.c.l.b16 %v677
  %v766 = vunpack.c.h.b16 %v677
  %v767 = vunpack.c.l.b16 %v678
  %v768 = vunpack.c.h.b16 %v678
  %v769 = vunpack.c.l.b16 %v679
  %v770 = vunpack.c.h.b16 %v679
  %v771 = vunpack.c.l.b16 %v680
  %v772 = vunpack.c.h.b16 %v680
  %v773 = vunpack.c.l.b16 %v681
  %v774 = vunpack.c.h.b16 %v681
  %v775 = vunpack.c.l.b16 %v682
  %v776 = vunpack.c.h.b16 %v682
  %v777 = vunpack.c.l.b16 %v683
  %v778 = vunpack.c.h.b16 %v683
  %v779 = vunpack.c.l.b16 %v684
  %v780 = vunpack.c.h.b16 %v684
  %v781 = vpack.c.b16 %v717, %v717
  %v782 = vpack.c.b16 %v718, %v718
  %v783 = vpack.c.b16 %v719, %v719
  %v784 = vpack.c.b16 %v720, %v720
  %v785 = vpack.c.b16 %v721, %v721
  %v786 = vpack.c.b16 %v722, %v722
  %v787 = vpack.c.b16 %v723, %v723
  %v788 = vpack.c.b16 %v724, %v724
  %v789 = vpack.c.b16 %v725, %v725
  %v790 = vpack.c.b16 %v726, %v726
  %v791 = vpack.c.b16 %v727, %v727
  %v792 = vpack.c.b16 %v728, %v728
  %v793 = vpack.c.b16 %v729, %v729
  %v794 = vpack.c.b16 %v730, %v730
  %v795 = vpack.c.b16 %v731, %v731
  %v796 = vpack.c.b16 %v732, %v732
  %v797 = vpack.c.b16 %v733, %v733
  %v798 = vpack.c.b16 %v734, %v734
  %v799 = vpack.c.b16 %v735, %v735
  %v800 = vpack.c.b16 %v736, %v736
  %v801 = vpack.c.b16 %v737, %v737
  %v802 = vpack.c.b16 %v738, %v738
  %v803 = vpack.c.b16 %v739, %v739
  %v804 = vpack.c.b16 %v740, %v740
  %v805 = vpack.c.b16 %v741, %v741
  %v806 = vpack.c.b16 %v742, %v742
  %v807 = vpack.c.b16 %v743, %v743
  %v808 = vpack.c.b16 %v744, %v744
  %v809 = vpack.c.b16 %v745, %v745
  %v810 = vpack.c.b16 %v746, %v746
  %v811 = vpack.c.b16 %v747, %v747
  %v812 = vpack.c.b16 %v748, %v748
  %v813 = vpack.c.b16 %v749, %v749
  %v814 = vpack.c.b16 %v750, %v750
  %v815 = vpack.c.b16 %v751, %v751
  %v816 = vpack.c.b16 %v752, %v752
  %v817 = vpack.c.b16 %v753, %v753
  %v818 = vpack.c.b16 %v754, %v754
  %v819 = vpack.c.b16 %v755, %v755
  %v820 = vpack.c.b16 %v756, %v756
  %v821 = vpack.c.b16 %v757, %v757
  %v822 = vpack.c.b16 %v758, %v758
  %v823 = vpack.c.b16 %v759, %v759
  %v824 = vpack.c.b16 %v760, %v760
  %v825 = vpack.c.b16 %v761, %v761
  %v826 = vpack.c.b16 %v762, %v762
  %v827 = vpack.c.b16 %v763, %v763
  %v828 = vpack.c.b16 %v764, %v764
  %v829 = vpack.c.b16 %v765, %v765
  %v830 = vpack.c.b16 %v766, %v766
  %v831 = vpack.c.b16 %v767, %v767
  %v832 = vpack.c.b16 %v768, %v768
  %v833 = vpack.c.b16 %v769, %v769
  %v834 = vpack.c.b16 %v770, %v770
  %v835 = vpack.c.b16 %v771, %v771
  %v836 = vpack.c.b16 %v772, %v772
  %v837 = vpack.c.b16 %v773, %v773
  %v838 = vpack.c.b16 %v774, %v774
  %v839 = vpack.c.b16 %v775, %v775
  %v840 = vpack.c.b16 %v776, %v776
  %v841 = vpack.c.b16 %v777, %v777
  %v842 = vpack.c.b16 %v778, %v778
  %v843 = vpack.c.b16 %v779, %v779
  %v844 = vpack.c.b16 %v780, %v780
  %909 = vst [vmem:[%s2] sm:$0xf] %v781
  %910 = vst [vmem:[%s2 + $0x4] sm:$0xf] %v782
  %911 = vst [vmem:[%s2 + $0x8] sm:$0xf] %v783
  %912 = vst [vmem:[%s2 + $0xc] sm:$0xf] %v784
  %913 = vst [vmem:[%s2 + $0x10] sm:$0xf] %v785
  %914 = vst [vmem:[%s2 + $0x14] sm:$0xf] %v786
  %915 = vst [vmem:[%s2 + $0x18] sm:$0xf] %v787
  %916 = vst [vmem:[%s2 + $0x1c] sm:$0xf] %v788
  %917 = vst [vmem:[%s2 + $0x20] sm:$0xf] %v789
  %918 = vst [vmem:[%s2 + $0x24] sm:$0xf] %v790
  %919 = vst [vmem:[%s2 + $0x28] sm:$0xf] %v791
  %920 = vst [vmem:[%s2 + $0x2c] sm:$0xf] %v792
  %921 = vst [vmem:[%s2 + $0x30] sm:$0xf] %v793
  %922 = vst [vmem:[%s2 + $0x34] sm:$0xf] %v794
  %923 = vst [vmem:[%s2 + $0x38] sm:$0xf] %v795
  %924 = vst [vmem:[%s2 + $0x3c] sm:$0xf] %v796
  %925 = vst [vmem:[%s2 + $0x40] sm:$0xf] %v797
  %926 = vst [vmem:[%s2 + $0x44] sm:$0xf] %v798
  %927 = vst [vmem:[%s2 + $0x48] sm:$0xf] %v799
  %928 = vst [vmem:[%s2 + $0x4c] sm:$0xf] %v800
  %929 = vst [vmem:[%s2 + $0x50] sm:$0xf] %v801
  %930 = vst [vmem:[%s2 + $0x54] sm:$0xf] %v802
  %931 = vst [vmem:[%s2 + $0x58] sm:$0xf] %v803
  %932 = vst [vmem:[%s2 + $0x5c] sm:$0xf] %v804
  %933 = vst [vmem:[%s2 + $0x60] sm:$0xf] %v805
  %934 = vst [vmem:[%s2 + $0x64] sm:$0xf] %v806
  %935 = vst [vmem:[%s2 + $0x68] sm:$0xf] %v807
  %936 = vst [vmem:[%s2 + $0x6c] sm:$0xf] %v808
  %937 = vst [vmem:[%s2 + $0x70] sm:$0xf] %v809
  %938 = vst [vmem:[%s2 + $0x74] sm:$0xf] %v810
  %939 = vst [vmem:[%s2 + $0x78] sm:$0xf] %v811
  %940 = vst [vmem:[%s2 + $0x7c] sm:$0xf] %v812
  %941 = vst [vmem:[%s2 + $0x80] sm:$0xf] %v813
  %942 = vst [vmem:[%s2 + $0x84] sm:$0xf] %v814
  %943 = vst [vmem:[%s2 + $0x88] sm:$0xf] %v815
  %944 = vst [vmem:[%s2 + $0x8c] sm:$0xf] %v816
  %945 = vst [vmem:[%s2 + $0x90] sm:$0xf] %v817
  %946 = vst [vmem:[%s2 + $0x94] sm:$0xf] %v818
  %947 = vst [vmem:[%s2 + $0x98] sm:$0xf] %v819
  %948 = vst [vmem:[%s2 + $0x9c] sm:$0xf] %v820
  %949 = vst [vmem:[%s2 + $0xa0] sm:$0xf] %v821
  %950 = vst [vmem:[%s2 + $0xa4] sm:$0xf] %v822
  %951 = vst [vmem:[%s2 + $0xa8] sm:$0xf] %v823
  %952 = vst [vmem:[%s2 + $0xac] sm:$0xf] %v824
  %953 = vst [vmem:[%s2 + $0xb0] sm:$0xf] %v825
  %954 = vst [vmem:[%s2 + $0xb4] sm:$0xf] %v826
  %955 = vst [vmem:[%s2 + $0xb8] sm:$0xf] %v827
  %956 = vst [vmem:[%s2 + $0xbc] sm:$0xf] %v828
  %957 = vst [vmem:[%s2 + $0xc0] sm:$0xf] %v829
  %958 = vst [vmem:[%s2 + $0xc4] sm:$0xf] %v830
  %959 = vst [vmem:[%s2 + $0xc8] sm:$0xf] %v831
  %960 = vst [vmem:[%s2 + $0xcc] sm:$0xf] %v832
  %961 = vst [vmem:[%s2 + $0xd0] sm:$0xf] %v833
  %962 = vst [vmem:[%s2 + $0xd4] sm:$0xf] %v834
  %963 = vst [vmem:[%s2 + $0xd8] sm:$0xf] %v835
  %964 = vst [vmem:[%s2 + $0xdc] sm:$0xf] %v836
  %965 = vst [vmem:[%s2 + $0xe0] sm:$0xf] %v837
  %966 = vst [vmem:[%s2 + $0xe4] sm:$0xf] %v838
  %967 = vst [vmem:[%s2 + $0xe8] sm:$0xf] %v839
  %968 = vst [vmem:[%s2 + $0xec] sm:$0xf] %v840
  %969 = vst [vmem:[%s2 + $0xf0] sm:$0xf] %v841
  %970 = vst [vmem:[%s2 + $0xf4] sm:$0xf] %v842
  %971 = vst [vmem:[%s2 + $0xf8] sm:$0xf] %v843
  %972 = vst [vmem:[%s2 + $0xfc] sm:$0xf] %v844
  %v973 = vld [vmem:[#allocation2] sm:$0x1]
  %v974 = vadd.f32 %v399, %v402
  %v975 = vadd.f32 %v974, %v407
  %v976 = vadd.f32 %v975, %v410
  %v977 = vadd.f32 %v976, %v415
  %v978 = vadd.f32 %v977, %v418
  %v979 = vadd.f32 %v978, %v423
  %v980 = vadd.f32 %v979, %v426
  %v981 = vadd.f32 %v980, %v431
  %v982 = vadd.f32 %v981, %v434
  %v983 = vadd.f32 %v982, %v439
  %v984 = vadd.f32 %v983, %v442
  %v985 = vadd.f32 %v984, %v447
  %v986 = vadd.f32 %v985, %v450
  %v987 = vadd.f32 %v986, %v455
  %v988 = vadd.f32 %v987, %v458
  %v989 = vadd.f32 %v988, %v463
  %v990 = vadd.f32 %v989, %v466
  %v991 = vadd.f32 %v990, %v471
  %v992 = vadd.f32 %v991, %v474
  %v993 = vadd.f32 %v992, %v479
  %v994 = vadd.f32 %v993, %v482
  %v995 = vadd.f32 %v994, %v487
  %v996 = vadd.f32 %v995, %v490
  %v997 = vadd.f32 %v996, %v495
  %v998 = vadd.f32 %v997, %v498
  %v999 = vadd.f32 %v998, %v503
  %v1000 = vadd.f32 %v999, %v506
  %v1001 = vadd.f32 %v1000, %v511
  %v1002 = vadd.f32 %v1001, %v514
  %v1003 = vadd.f32 %v1002, %v519
  %v1004 = vadd.f32 %v1003, %v522
  %v1005 = vadd.f32 %v1004, %v527
  %v1006 = vadd.f32 %v1005, %v530
  %v1007 = vadd.f32 %v1006, %v535
  %v1008 = vadd.f32 %v1007, %v538
  %v1009 = vadd.f32 %v1008, %v543
  %v1010 = vadd.f32 %v1009, %v546
  %v1011 = vadd.f32 %v1010, %v551
  %v1012 = vadd.f32 %v1011, %v554
  %v1013 = vadd.f32 %v1012, %v559
  %v1014 = vadd.f32 %v1013, %v562
  %v1015 = vadd.f32 %v1014, %v567
  %v1016 = vadd.f32 %v1015, %v570
  %v1017 = vadd.f32 %v1016, %v575
  %v1018 = vadd.f32 %v1017, %v578
  %v1019 = vadd.f32 %v1018, %v583
  %v1020 = vadd.f32 %v1019, %v586
  %v1021 = vadd.f32 %v1020, %v591
  %v1022 = vadd.f32 %v1021, %v594
  %v1023 = vadd.f32 %v1022, %v599
  %v1024 = vadd.f32 %v1023, %v602
  %v1025 = vadd.f32 %v1024, %v607
  %v1026 = vadd.f32 %v1025, %v610
  %v1027 = vadd.f32 %v1026, %v615
  %v1028 = vadd.f32 %v1027, %v618
  %v1029 = vadd.f32 %v1028, %v623
  %v1030 = vadd.f32 %v1029, %v626
  %v1031 = vadd.f32 %v1030, %v631
  %v1032 = vadd.f32 %v1031, %v634
  %v1033 = vadd.f32 %v1032, %v639
  %v1034 = vadd.f32 %v1033, %v642
  %v1035 = vadd.f32 %v1034, %v647
  %v1036 = vadd.f32 %v1035, %v650
  %v1037 = vrot.slane %v1036, 4
  %v1038 = vadd.f32 %v1036, %v1037
  %v1039 = vrot.slane %v1038, 2
  %v1040 = vadd.f32 %v1038, %v1039
  %v1041 = vrot.slane %v1040, 1
  %v1042 = vadd.f32 %v1040, %v1041
  %v1043 = vadd.f32 %v973, %v1042
  %1044 = vst [vmem:[#allocation2] sm:$0x1] %v1043
  %v1045 = vld [vmem:[#allocation2 + $0x1] sm:$0x1]
  %v1046 = vmul.f32 %v399, %v399
  %v1047 = vmul.f32 %v402, %v402
  %v1048 = vmul.f32 %v407, %v407
  %v1049 = vmul.f32 %v410, %v410
  %v1050 = vmul.f32 %v415, %v415
  %v1051 = vmul.f32 %v418, %v418
  %v1052 = vmul.f32 %v423, %v423
  %v1053 = vmul.f32 %v426, %v426
  %v1054 = vmul.f32 %v431, %v431
  %v1055 = vmul.f32 %v434, %v434
  %v1056 = vmul.f32 %v439, %v439
  %v1057 = vmul.f32 %v442, %v442
  %v1058 = vmul.f32 %v447, %v447
  %v1059 = vmul.f32 %v450, %v450
  %v1060 = vmul.f32 %v455, %v455
  %v1061 = vmul.f32 %v458, %v458
  %v1062 = vmul.f32 %v463, %v463
  %v1063 = vmul.f32 %v466, %v466
  %v1064 = vmul.f32 %v471, %v471
  %v1065 = vmul.f32 %v474, %v474
  %v1066 = vmul.f32 %v479, %v479
  %v1067 = vmul.f32 %v482, %v482
  %v1068 = vmul.f32 %v487, %v487
  %v1069 = vmul.f32 %v490, %v490
  %v1070 = vmul.f32 %v495, %v495
  %v1071 = vmul.f32 %v498, %v498
  %v1072 = vmul.f32 %v503, %v503
  %v1073 = vmul.f32 %v506, %v506
  %v1074 = vmul.f32 %v511, %v511
  %v1075 = vmul.f32 %v514, %v514
  %v1076 = vmul.f32 %v519, %v519
  %v1077 = vmul.f32 %v522, %v522
  %v1078 = vmul.f32 %v527, %v527
  %v1079 = vmul.f32 %v530, %v530
  %v1080 = vmul.f32 %v535, %v535
  %v1081 = vmul.f32 %v538, %v538
  %v1082 = vmul.f32 %v543, %v543
  %v1083 = vmul.f32 %v546, %v546
  %v1084 = vmul.f32 %v551, %v551
  %v1085 = vmul.f32 %v554, %v554
  %v1086 = vmul.f32 %v559, %v559
  %v1087 = vmul.f32 %v562, %v562
  %v1088 = vmul.f32 %v567, %v567
  %v1089 = vmul.f32 %v570, %v570
  %v1090 = vmul.f32 %v575, %v575
  %v1091 = vmul.f32 %v578, %v578
  %v1092 = vmul.f32 %v583, %v583
  %v1093 = vmul.f32 %v586, %v586
  %v1094 = vmul.f32 %v591, %v591
  %v1095 = vmul.f32 %v594, %v594
  %v1096 = vmul.f32 %v599, %v599
  %v1097 = vmul.f32 %v602, %v602
  %v1098 = vmul.f32 %v607, %v607
  %v1099 = vmul.f32 %v610, %v610
  %v1100 = vmul.f32 %v615, %v615
  %v1101 = vmul.f32 %v618, %v618
  %v1102 = vmul.f32 %v623, %v623
  %v1103 = vmul.f32 %v626, %v626
  %v1104 = vmul.f32 %v631, %v631
  %v1105 = vmul.f32 %v634, %v634
  %v1106 = vmul.f32 %v639, %v639
  %v1107 = vmul.f32 %v642, %v642
  %v1108 = vmul.f32 %v647, %v647
  %v1109 = vmul.f32 %v650, %v650
  %v1110 = vadd.f32 %v1046, %v1047
  %v1111 = vadd.f32 %v1110, %v1048
  %v1112 = vadd.f32 %v1111, %v1049
  %v1113 = vadd.f32 %v1112, %v1050
  %v1114 = vadd.f32 %v1113, %v1051
  %v1115 = vadd.f32 %v1114, %v1052
  %v1116 = vadd.f32 %v1115, %v1053
  %v1117 = vadd.f32 %v1116, %v1054
  %v1118 = vadd.f32 %v1117, %v1055
  %v1119 = vadd.f32 %v1118, %v1056
  %v1120 = vadd.f32 %v1119, %v1057
  %v1121 = vadd.f32 %v1120, %v1058
  %v1122 = vadd.f32 %v1121, %v1059
  %v1123 = vadd.f32 %v1122, %v1060
  %v1124 = vadd.f32 %v1123, %v1061
  %v1125 = vadd.f32 %v1124, %v1062
  %v1126 = vadd.f32 %v1125, %v1063
  %v1127 = vadd.f32 %v1126, %v1064
  %v1128 = vadd.f32 %v1127, %v1065
  %v1129 = vadd.f32 %v1128, %v1066
  %v1130 = vadd.f32 %v1129, %v1067
  %v1131 = vadd.f32 %v1130, %v1068
  %v1132 = vadd.f32 %v1131, %v1069
  %v1133 = vadd.f32 %v1132, %v1070
  %v1134 = vadd.f32 %v1133, %v1071
  %v1135 = vadd.f32 %v1134, %v1072
  %v1136 = vadd.f32 %v1135, %v1073
  %v1137 = vadd.f32 %v1136, %v1074
  %v1138 = vadd.f32 %v1137, %v1075
  %v1139 = vadd.f32 %v1138, %v1076
  %v1140 = vadd.f32 %v1139, %v1077
  %v1141 = vadd.f32 %v1140, %v1078
  %v1142 = vadd.f32 %v1141, %v1079
  %v1143 = vadd.f32 %v1142, %v1080
  %v1144 = vadd.f32 %v1143, %v1081
  %v1145 = vadd.f32 %v1144, %v1082
  %v1146 = vadd.f32 %v1145, %v1083
  %v1147 = vadd.f32 %v1146, %v1084
  %v1148 = vadd.f32 %v1147, %v1085
  %v1149 = vadd.f32 %v1148, %v1086
  %v1150 = vadd.f32 %v1149, %v1087
  %v1151 = vadd.f32 %v1150, %v1088
  %v1152 = vadd.f32 %v1151, %v1089
  %v1153 = vadd.f32 %v1152, %v1090
  %v1154 = vadd.f32 %v1153, %v1091
  %v1155 = vadd.f32 %v1154, %v1092
  %v1156 = vadd.f32 %v1155, %v1093
  %v1157 = vadd.f32 %v1156, %v1094
  %v1158 = vadd.f32 %v1157, %v1095
  %v1159 = vadd.f32 %v1158, %v1096
  %v1160 = vadd.f32 %v1159, %v1097
  %v1161 = vadd.f32 %v1160, %v1098
  %v1162 = vadd.f32 %v1161, %v1099
  %v1163 = vadd.f32 %v1162, %v1100
  %v1164 = vadd.f32 %v1163, %v1101
  %v1165 = vadd.f32 %v1164, %v1102
  %v1166 = vadd.f32 %v1165, %v1103
  %v1167 = vadd.f32 %v1166, %v1104
  %v1168 = vadd.f32 %v1167, %v1105
  %v1169 = vadd.f32 %v1168, %v1106
  %v1170 = vadd.f32 %v1169, %v1107
  %v1171 = vadd.f32 %v1170, %v1108
  %v1172 = vadd.f32 %v1171, %v1109
  %v1173 = vrot.slane %v1172, 4
  %v1174 = vadd.f32 %v1172, %v1173
  %v1175 = vrot.slane %v1174, 2
  %v1176 = vadd.f32 %v1174, %v1175
  %v1177 = vrot.slane %v1176, 1
  %v1178 = vadd.f32 %v1176, %v1177
  %v1179 = vadd.f32 %v1045, %v1178
  %1180 = vst [vmem:[#allocation2 + $0x1] sm:$0x1] %v1179
  // Predicated region
  $region14: #{residual_block_forward.4} parent=0 // pred_check
    %p1181 = pneg %p14
  $region15: #{residual_block_forward.4} parent=0 // pred_check_branch
    %1183 = sbr.rel (%p1181) target = $region17
  $region16: #{residual_block_forward.4} parent=0 // pred_region
    %v1184 = vld [vmem:[#allocation2] sm:$0x3]
    %1185 = vst [vmem:[%s3] sm:$0x3] %v1184
  $region17: #{residual_block_forward.4} parent=0 // pred_fallthru
    _
  // Predicated region
  $region18: #{residual_block_forward.4} parent=0 // pred_check
    _
  $region19: #{residual_block_forward.4} parent=0 // pred_check_branch
    %1187 = sbr.rel (0) target = $region21
  $region20: #{residual_block_forward.4} parent=0 // pred_region
    _
  $region21: #{residual_block_forward.4} parent=0 // pred_fallthru
    _
  // Predicated region
  $region22: #{residual_block_forward.4} parent=0 // pred_check
    _
  $region23: #{residual_block_forward.4} parent=0 // pred_check_branch
    %1189 = sbr.rel (0) target = $region25
  $region24: #{residual_block_forward.4} parent=0 // pred_region
    _
  $region25: #{residual_block_forward.4} parent=0 // pred_fallthru
    _
  // Predicated region
  $region26: #{residual_block_forward.4} parent=0 // pred_check
    _
  $region27: #{residual_block_forward.4} parent=0 // pred_check_branch
    %1191 = sbr.rel (0) target = $region29
  $region28: #{residual_block_forward.4} parent=0 // pred_region
    _
  $region29: #{residual_block_forward.4} parent=0 // pred_fallthru
    _
  // Predicated region
  $region30: #{residual_block_forward.4} parent=0 // pred_check
    _
  $region31: #{residual_block_forward.4} parent=0 // pred_check_branch
    %1193 = sbr.rel (0) target = $region33
  $region32: #{residual_block_forward.4} parent=0 // pred_region
    _
  $region33: #{residual_block_forward.4} parent=0 // pred_fallthru
    _

// kernel: residual_block_forward.7
$region0: #{residual_block_forward.7}
  #allocation0 [shape = 'u32[]', space=smem, size = 0x4, offset = 0x4, fixed_abs, tag = 'smem constant byte address 0x4 - core index']
  #allocation1 [shape = 'u32[144,128]{1,0:T(1,128)}', space=vmem, size = 0x12000, scoped, tag = 'internal scratch']
  %s0 = inlined_call_operand.vmem [shape: bf16[128,128], index: 0, kind: input, shape index: {}]
  %s1 = inlined_call_operand.vmem [shape: bf16[128,128], index: 1, kind: input, shape index: {}]
  %s2 = inlined_call_operand.vmem [shape: f32[4,128], index: 2, kind: input, shape index: {}]
  %s3 = inlined_call_operand.vmem [shape: f32[1,128], index: 3, kind: input, shape index: {}]
  %s4 = inlined_call_operand.vmem [shape: f32[1,128], index: 4, kind: input, shape index: {}]
  %s5 = inlined_call_operand.vmem [shape: f32[1,128], index: 5, kind: input, shape index: {}]
  %s6 = inlined_call_operand.vmem [shape: f32[1,128], index: 6, kind: input, shape index: {}]
  %s7 = inlined_call_operand.vmem [shape: f32[128,128], index: 7, kind: output, shape index: {}]
  %s8 = sld [smem:[#allocation0]]
  $region38: #{residual_block_forward.7} parent=0
    _
  %s10 = ssub.s32 1, %s8
  %s11 = scalar_select 0, %s10, %s8
  // Predicated region
  $region2: #{residual_block_forward.7} parent=0 // pred_check
    _
  $region3: #{residual_block_forward.7} parent=0 // pred_check_branch
    %13 = sbr.rel (0) target = $region5
  $region4: #{residual_block_forward.7} parent=0 // pred_region
    _
  $region5: #{residual_block_forward.7} parent=0 // pred_fallthru
    _
  // Predicated region
  $region6: #{residual_block_forward.7} parent=0 // pred_check
    _
  $region7: #{residual_block_forward.7} parent=0 // pred_check_branch
    %15 = sbr.rel (0) target = $region9
  $region8: #{residual_block_forward.7} parent=0 // pred_region
    _
  $region9: #{residual_block_forward.7} parent=0 // pred_fallthru
    _
  // Predicated region
  $region10: #{residual_block_forward.7} parent=0 // pred_check
    _
  $region11: #{residual_block_forward.7} parent=0 // pred_check_branch
    %17 = sbr.rel (0) target = $region13
  $region12: #{residual_block_forward.7} parent=0 // pred_region
    _
  $region13: #{residual_block_forward.7} parent=0 // pred_fallthru
    _
  // Predicated region
  $region14: #{residual_block_forward.7} parent=0 // pred_check
    _
  $region15: #{residual_block_forward.7} parent=0 // pred_check_branch
    %19 = sbr.rel (0) target = $region17
  $region16: #{residual_block_forward.7} parent=0 // pred_region
    _
  $region17: #{residual_block_forward.7} parent=0 // pred_fallthru
    _
  // Predicated region
  $region18: #{residual_block_forward.7} parent=0 // pred_check
    _
  $region19: #{residual_block_forward.7} parent=0 // pred_check_branch
    %21 = sbr.rel (0) target = $region21
  $region20: #{residual_block_forward.7} parent=0 // pred_region
    _
  $region21: #{residual_block_forward.7} parent=0 // pred_fallthru
    _
  // Predicated region
  $region22: #{residual_block_forward.7} parent=0 // pred_check
    _
  $region23: #{residual_block_forward.7} parent=0 // pred_check_branch
    %23 = sbr.rel (0) target = $region25
  $region24: #{residual_block_forward.7} parent=0 // pred_region
    _
  $region25: #{residual_block_forward.7} parent=0 // pred_fallthru
    _
  // Predicated region
  $region26: #{residual_block_forward.7} parent=0 // pred_check
    _
  $region27: #{residual_block_forward.7} parent=0 // pred_check_branch
    %25 = sbr.rel (0) target = $region29
  $region28: #{residual_block_forward.7} parent=0 // pred_region
    _
  $region29: #{residual_block_forward.7} parent=0 // pred_fallthru
    _
  %v26 = vld [vmem:[%s2] sm:$0xf]
  %v27 = vmul.f32 %v26, 0.0078125
  %v28 = vmul.f32 %v27, %v27
  %v30 = vrot.slane %v28, 7
  %v32 = vsub.f32 %v27, %v30
  %v33 = vmax.f32 %v32, 0.0
  %v34 = vld [vmem:[%s3] sm:$0x1]
  %v35 = vadd.f32 %v33, 1e-05
  %v36 = vrsqrt.pop %v35
  %v39 = vunpack.c.l.s4 1966171168
  %v40 = vunpack.c.0.s8 %v39
  %v41 = vlaneseq
  %v42 = vshrl.u32 %v41, 7
  %v43 = vsub.s32 %v40, %v42
  %v44 = vrot.slane %v36, %v43
  %v45 = vcombine.high %v44, %v44
  %v47 = vunpack.c.l.s4 1966171168
  %v48 = vunpack.c.0.s8 %v47
  %v49 = vlaneseq
  %v50 = vshrl.u32 %v49, 7
  %v51 = vsub.s32 %v48, %v50
  %v52 = vrot.slane %v45, %v51
  %v54 = vmul.f32 %v34, %v52
  %v55 = vld [vmem:[%s4] sm:$0x1]
  %v56 = vmul.f32 %v27, %v54
  %v57 = vsub.f32 %v55, %v56
  %v58 = vld [vmem:[%s0] sm:$0xf]
  %v59 = vld [vmem:[%s0 + $0x4] sm:$0xf]
  %v60 = vld [vmem:[%s0 + $0x8] sm:$0xf]
  %v61 = vld [vmem:[%s0 + $0xc] sm:$0xf]
  %v62 = vld [vmem:[%s0 + $0x10] sm:$0xf]
  %v63 = vld [vmem:[%s0 + $0x14] sm:$0xf]
  %v64 = vld [vmem:[%s0 + $0x18] sm:$0xf]
  %v65 = vld [vmem:[%s0 + $0x1c] sm:$0xf]
  %v66 = vld [vmem:[%s0 + $0x20] sm:$0xf]
  %v67 = vld [vmem:[%s0 + $0x24] sm:$0xf]
  %v68 = vld [vmem:[%s0 + $0x28] sm:$0xf]
  %v69 = vld [vmem:[%s0 + $0x2c] sm:$0xf]
  %v70 = vld [vmem:[%s0 + $0x30] sm:$0xf]
  %v71 = vld [vmem:[%s0 + $0x34] sm:$0xf]
  %v72 = vld [vmem:[%s0 + $0x38] sm:$0xf]
  %v73 = vld [vmem:[%s0 + $0x3c] sm:$0xf]
  %v74 = vunpack.c.l.bf16 %v58
  %v75 = vunpack.c.l.bf16 %v59
  %v76 = vunpack.c.l.bf16 %v60
  %v77 = vunpack.c.l.bf16 %v61
  %v78 = vunpack.c.l.bf16 %v62
  %v79 = vunpack.c.l.bf16 %v63
  %v80 = vunpack.c.l.bf16 %v64
  %v81 = vunpack.c.l.bf16 %v65
  %v82 = vunpack.c.l.bf16 %v66
  %v83 = vunpack.c.l.bf16 %v67
  %v84 = vunpack.c.l.bf16 %v68
  %v85 = vunpack.c.l.bf16 %v69
  %v86 = vunpack.c.l.bf16 %v70
  %v87 = vunpack.c.l.bf16 %v71
  %v88 = vunpack.c.l.bf16 %v72
  %v89 = vunpack.c.l.bf16 %v73
  %v91 = vlaneseq
  %v92 = vshrl.u32 %v91, 7
  %v93 = vsub.s32 0, %v92
  %v94 = vrot.slane %v54, %v93
  %v96 = vmul.f32 %v74, %v94
  %v97 = vmul.f32 %v75, %v94
  %v98 = vmul.f32 %v76, %v94
  %v99 = vmul.f32 %v77, %v94
  %v100 = vmul.f32 %v78, %v94
  %v101 = vmul.f32 %v79, %v94
  %v102 = vmul.f32 %v80, %v94
  %v103 = vmul.f32 %v81, %v94
  %v104 = vmul.f32 %v82, %v94
  %v105 = vmul.f32 %v83, %v94
  %v106 = vmul.f32 %v84, %v94
  %v107 = vmul.f32 %v85, %v94
  %v108 = vmul.f32 %v86, %v94
  %v109 = vmul.f32 %v87, %v94
  %v110 = vmul.f32 %v88, %v94
  %v111 = vmul.f32 %v89, %v94
  %v113 = vlaneseq
  %v114 = vshrl.u32 %v113, 7
  %v115 = vsub.s32 0, %v114
  %v116 = vrot.slane %v57, %v115
  %v118 = vadd.f32 %v96, %v116
  %v119 = vadd.f32 %v97, %v116
  %v120 = vadd.f32 %v98, %v116
  %v121 = vadd.f32 %v99, %v116
  %v122 = vadd.f32 %v100, %v116
  %v123 = vadd.f32 %v101, %v116
  %v124 = vadd.f32 %v102, %v116
  %v125 = vadd.f32 %v103, %v116
  %v126 = vadd.f32 %v104, %v116
  %v127 = vadd.f32 %v105, %v116
  %v128 = vadd.f32 %v106, %v116
  %v129 = vadd.f32 %v107, %v116
  %v130 = vadd.f32 %v108, %v116
  %v131 = vadd.f32 %v109, %v116
  %v132 = vadd.f32 %v110, %v116
  %v133 = vadd.f32 %v111, %v116
  %v134 = vld [vmem:[%s5] sm:$0x1]
  %v135 = vcombine.high %v52, %v52
  %v137 = vmul.f32 %v134, %v135
  %v138 = vld [vmem:[%s6] sm:$0x1]
  %v140 = vlaneseq
  %v141 = vshrl.u32 %v140, 7
  %v142 = vsub.s32 0, %v141
  %v143 = vrot.slane %v137, %v142
  %v145 = vmul.f32 %v27, %v143
  %v148 = vunpack.c.l.s4 1966171168
  %v149 = vunpack.c.0.s8 %v148
  %v150 = vlaneseq
  %v151 = vshrl.u32 %v150, 7
  %v152 = vsub.s32 %v149, %v151
  %v153 = vrot.slane %v145, %v152
  %v155 = vunpack.c.l.s4 1966171168
  %v156 = vunpack.c.0.s8 %v155
  %v157 = vlaneseq
  %v158 = vshrl.u32 %v157, 7
  %v159 = vsub.s32 %v156, %v158
  %v160 = vrot.slane %v153, %v159
  %v161 = vcombine.high %v160, %v160
  %v163 = vsub.f32 %v138, %v161
  %v164 = vld [vmem:[%s1] sm:$0xf]
  %v165 = vld [vmem:[%s1 + $0x4] sm:$0xf]
  %v166 = vld [vmem:[%s1 + $0x8] sm:$0xf]
  %v167 = vld [vmem:[%s1 + $0xc] sm:$0xf]
  %v168 = vld [vmem:[%s1 + $0x10] sm:$0xf]
  %v169 = vld [vmem:[%s1 + $0x14] sm:$0xf]
  %v170 = vld [vmem:[%s1 + $0x18] sm:$0xf]
  %v171 = vld [vmem:[%s1 + $0x1c] sm:$0xf]
  %v172 = vld [vmem:[%s1 + $0x20] sm:$0xf]
  %v173 = vld [vmem:[%s1 + $0x24] sm:$0xf]
  %v174 = vld [vmem:[%s1 + $0x28] sm:$0xf]
  %v175 = vld [vmem:[%s1 + $0x2c] sm:$0xf]
  %v176 = vld [vmem:[%s1 + $0x30] sm:$0xf]
  %v177 = vld [vmem:[%s1 + $0x34] sm:$0xf]
  %v178 = vld [vmem:[%s1 + $0x38] sm:$0xf]
  %v179 = vld [vmem:[%s1 + $0x3c] sm:$0xf]
  %v180 = vunpack.c.l.bf16 %v164
  %v181 = vunpack.c.l.bf16 %v165
  %v182 = vunpack.c.l.bf16 %v166
  %v183 = vunpack.c.l.bf16 %v167
  %v184 = vunpack.c.l.bf16 %v168
  %v185 = vunpack.c.l.bf16 %v169
  %v186 = vunpack.c.l.bf16 %v170
  %v187 = vunpack.c.l.bf16 %v171
  %v188 = vunpack.c.l.bf16 %v172
  %v189 = vunpack.c.l.bf16 %v173
  %v190 = vunpack.c.l.bf16 %v174
  %v191 = vunpack.c.l.bf16 %v175
  %v192 = vunpack.c.l.bf16 %v176
  %v193 = vunpack.c.l.bf16 %v177
  %v194 = vunpack.c.l.bf16 %v178
  %v195 = vunpack.c.l.bf16 %v179
  %v196 = vmul.f32 %v180, %v143
  %v197 = vmul.f32 %v181, %v143
  %v198 = vmul.f32 %v182, %v143
  %v199 = vmul.f32 %v183, %v143
  %v200 = vmul.f32 %v184, %v143
  %v201 = vmul.f32 %v185, %v143
  %v202 = vmul.f32 %v186, %v143
  %v203 = vmul.f32 %v187, %v143
  %v204 = vmul.f32 %v188, %v143
  %v205 = vmul.f32 %v189, %v143
  %v206 = vmul.f32 %v190, %v143
  %v207 = vmul.f32 %v191, %v143
  %v208 = vmul.f32 %v192, %v143
  %v209 = vmul.f32 %v193, %v143
  %v210 = vmul.f32 %v194, %v143
  %v211 = vmul.f32 %v195, %v143
  %v212 = vadd.f32 %v118, %v196
  %v213 = vadd.f32 %v119, %v197
  %v214 = vadd.f32 %v120, %v198
  %v215 = vadd.f32 %v121, %v199
  %v216 = vadd.f32 %v122, %v200
  %v217 = vadd.f32 %v123, %v201
  %v218 = vadd.f32 %v124, %v202
  %v219 = vadd.f32 %v125, %v203
  %v220 = vadd.f32 %v126, %v204
  %v221 = vadd.f32 %v127, %v205
  %v222 = vadd.f32 %v128, %v206
  %v223 = vadd.f32 %v129, %v207
  %v224 = vadd.f32 %v130, %v208
  %v225 = vadd.f32 %v131, %v209
  %v226 = vadd.f32 %v132, %v210
  %v227 = vadd.f32 %v133, %v211
  %v229 = vlaneseq
  %v230 = vshrl.u32 %v229, 7
  %v231 = vsub.s32 0, %v230
  %v232 = vrot.slane %v163, %v231
  %v234 = vadd.f32 %v212, %v232
  %v235 = vadd.f32 %v213, %v232
  %v236 = vadd.f32 %v214, %v232
  %v237 = vadd.f32 %v215, %v232
  %v238 = vadd.f32 %v216, %v232
  %v239 = vadd.f32 %v217, %v232
  %v240 = vadd.f32 %v218, %v232
  %v241 = vadd.f32 %v219, %v232
  %v242 = vadd.f32 %v220, %v232
  %v243 = vadd.f32 %v221, %v232
  %v244 = vadd.f32 %v222, %v232
  %v245 = vadd.f32 %v223, %v232
  %v246 = vadd.f32 %v224, %v232
  %v247 = vadd.f32 %v225, %v232
  %v248 = vadd.f32 %v226, %v232
  %v249 = vadd.f32 %v227, %v232
  %v250 = vmax.f32 %v234, 0.0
  %v251 = vmax.f32 %v235, 0.0
  %v252 = vmax.f32 %v236, 0.0
  %v253 = vmax.f32 %v237, 0.0
  %v254 = vmax.f32 %v238, 0.0
  %v255 = vmax.f32 %v239, 0.0
  %v256 = vmax.f32 %v240, 0.0
  %v257 = vmax.f32 %v241, 0.0
  %v258 = vmax.f32 %v242, 0.0
  %v259 = vmax.f32 %v243, 0.0
  %v260 = vmax.f32 %v244, 0.0
  %v261 = vmax.f32 %v245, 0.0
  %v262 = vmax.f32 %v246, 0.0
  %v263 = vmax.f32 %v247, 0.0
  %v264 = vmax.f32 %v248, 0.0
  %v265 = vmax.f32 %v249, 0.0
  %266 = vst [vmem:[%s7] sm:$0xff] %v250
  %267 = vst [vmem:[%s7 + $0x8] sm:$0xff] %v251
  %268 = vst [vmem:[%s7 + $0x10] sm:$0xff] %v252
  %269 = vst [vmem:[%s7 + $0x18] sm:$0xff] %v253
  %270 = vst [vmem:[%s7 + $0x20] sm:$0xff] %v254
  %271 = vst [vmem:[%s7 + $0x28] sm:$0xff] %v255
  %272 = vst [vmem:[%s7 + $0x30] sm:$0xff] %v256
  %273 = vst [vmem:[%s7 + $0x38] sm:$0xff] %v257
  %274 = vst [vmem:[%s7 + $0x40] sm:$0xff] %v258
  %275 = vst [vmem:[%s7 + $0x48] sm:$0xff] %v259
  %276 = vst [vmem:[%s7 + $0x50] sm:$0xff] %v260
  %277 = vst [vmem:[%s7 + $0x58] sm:$0xff] %v261
  %278 = vst [vmem:[%s7 + $0x60] sm:$0xff] %v262
  %279 = vst [vmem:[%s7 + $0x68] sm:$0xff] %v263
  %280 = vst [vmem:[%s7 + $0x70] sm:$0xff] %v264
  %281 = vst [vmem:[%s7 + $0x78] sm:$0xff] %v265
  // Predicated region
  $region30: #{residual_block_forward.7} parent=0 // pred_check
    _
  $region31: #{residual_block_forward.7} parent=0 // pred_check_branch
    %283 = sbr.rel (0) target = $region33
  $region32: #{residual_block_forward.7} parent=0 // pred_region
    _
  $region33: #{residual_block_forward.7} parent=0 // pred_fallthru
    _
  // Predicated region
  $region34: #{residual_block_forward.7} parent=0 // pred_check
    _
  $region35: #{residual_block_forward.7} parent=0 // pred_check_branch
    %285 = sbr.rel (0) target = $region37
  $region36: #{residual_block_forward.7} parent=0 // pred_region
    _
  $region37: #{residual_block_forward.7} parent=0 // pred_fallthru
    _

// kernel: residual_block_forward.6
$region0: #{residual_block_forward.6}
  #allocation0 [shape = 'u32[]', space=smem, size = 0x4, offset = 0x4, fixed_abs, tag = 'smem constant byte address 0x4 - core index']
  #allocation1 [shape = 'u32[144,128]{1,0:T(1,128)}', space=vmem, size = 0x12000, scoped, tag = 'internal scratch']
  #allocation2 [shape = 'f32[4,128]{1,0:T(4,128)}', space=vmem, size = 0x800, scoped, tag = 'scratch operand']
  %s0 = inlined_call_operand.vmem [shape: bf16[128,72], index: 0, kind: input, shape index: {}]
  %s1 = inlined_call_operand.vmem [shape: bf16[72,128], index: 1, kind: input, shape index: {}]
  %s2 = inlined_call_operand.vmem [shape: bf16[128,4], index: 2, kind: input, shape index: {}]
  %s3 = inlined_call_operand.vmem [shape: bf16[4,128], index: 3, kind: input, shape index: {}]
  %s4 = inlined_call_operand.vmem [shape: bf16[128,128], index: 4, kind: output, shape index: {0}]
  %s5 = inlined_call_operand.vmem [shape: bf16[128,128], index: 5, kind: output, shape index: {1}]
  %s6 = inlined_call_operand.vmem [shape: f32[4,128], index: 6, kind: output, shape index: {2}]
  %7 = xla_tuple %s4, %s5, %s6
  %s8 = sld [smem:[#allocation0]]
  $region50: #{residual_block_forward.6} parent=0
    _
  %s10 = ssub.s32 1, %s8
  %s11 = scalar_select 0, %s10, %s8
  // Predicated region
  $region2: #{residual_block_forward.6} parent=0 // pred_check
    _
  $region3: #{residual_block_forward.6} parent=0 // pred_check_branch
    %13 = sbr.rel (0) target = $region5
  $region4: #{residual_block_forward.6} parent=0 // pred_region
    _
  $region5: #{residual_block_forward.6} parent=0 // pred_fallthru
    _
  // Predicated region
  $region6: #{residual_block_forward.6} parent=0 // pred_check
    _
  $region7: #{residual_block_forward.6} parent=0 // pred_check_branch
    %15 = sbr.rel (0) target = $region9
  $region8: #{residual_block_forward.6} parent=0 // pred_region
    _
  $region9: #{residual_block_forward.6} parent=0 // pred_fallthru
    _
  // Predicated region
  $region10: #{residual_block_forward.6} parent=0 // pred_check
    _
  $region11: #{residual_block_forward.6} parent=0 // pred_check_branch
    %17 = sbr.rel (0) target = $region13
  $region12: #{residual_block_forward.6} parent=0 // pred_region
    _
  $region13: #{residual_block_forward.6} parent=0 // pred_fallthru
    _
  // Predicated region
  $region14: #{residual_block_forward.6} parent=0 // pred_check
    _
  $region15: #{residual_block_forward.6} parent=0 // pred_check_branch
    %19 = sbr.rel (0) target = $region17
  $region16: #{residual_block_forward.6} parent=0 // pred_region
    _
  $region17: #{residual_block_forward.6} parent=0 // pred_fallthru
    _
  %p21 = scmp.eq.s32.totalorder 0, 0
  // Predicated region
  $region18: #{residual_block_forward.6} parent=0 // pred_check
    %p22 = pneg %p21
  $region19: #{residual_block_forward.6} parent=0 // pred_check_branch
    %24 = sbr.rel (%p22) target = $region21
  $region20: #{residual_block_forward.6} parent=0 // pred_region
    %25 = vst [vmem:[#allocation2] sm:$0xf] 0.0
  $region21: #{residual_block_forward.6} parent=0 // pred_fallthru
    _
  %v26 = vld [vmem:[%s0] sm:$0xf]
  %v27 = vld [vmem:[%s0 + $0x4] sm:$0xf]
  %v28 = vld [vmem:[%s0 + $0x8] sm:$0xf]
  %v29 = vld [vmem:[%s0 + $0xc] sm:$0xf]
  %v30 = vld [vmem:[%s0 + $0x10] sm:$0xf]
  %v31 = vld [vmem:[%s0 + $0x14] sm:$0xf]
  %v32 = vld [vmem:[%s0 + $0x18] sm:$0xf]
  %v33 = vld [vmem:[%s0 + $0x1c] sm:$0xf]
  %v34 = vld [vmem:[%s0 + $0x20] sm:$0xf]
  %v35 = vld [vmem:[%s0 + $0x24] sm:$0xf]
  %v36 = vld [vmem:[%s0 + $0x28] sm:$0xf]
  %v37 = vld [vmem:[%s0 + $0x2c] sm:$0xf]
  %v38 = vld [vmem:[%s0 + $0x30] sm:$0xf]
  %v39 = vld [vmem:[%s0 + $0x34] sm:$0xf]
  %v40 = vld [vmem:[%s0 + $0x38] sm:$0xf]
  %v41 = vld [vmem:[%s0 + $0x3c] sm:$0xf]
  %v42 = vld [vmem:[%s1] sm:$0xf]
  %v43 = vld [vmem:[%s1 + $0x4] sm:$0xf]
  %v44 = vld [vmem:[%s1 + $0x8] sm:$0xf]
  %v45 = vld [vmem:[%s1 + $0xc] sm:$0xf]
  %v46 = vld [vmem:[%s1 + $0x10] sm:$0xf]
  %v47 = vld [vmem:[%s1 + $0x14] sm:$0xf]
  %v48 = vld [vmem:[%s1 + $0x18] sm:$0xf]
  %v49 = vld [vmem:[%s1 + $0x1c] sm:$0xf]
  %v50 = vld [vmem:[%s1 + $0x20] sm:$0xf]
  %v67 = vunpack.c.l.b16 %v26
  %v68 = vunpack.c.l.b16 %v27
  %v69 = vunpack.c.l.b16 %v28
  %v70 = vunpack.c.l.b16 %v29
  %v71 = vunpack.c.l.b16 %v30
  %v72 = vunpack.c.l.b16 %v31
  %v73 = vunpack.c.l.b16 %v32
  %v74 = vunpack.c.l.b16 %v33
  %v75 = vunpack.c.l.b16 %v34
  %v76 = vunpack.c.l.b16 %v35
  %v77 = vunpack.c.l.b16 %v36
  %v78 = vunpack.c.l.b16 %v37
  %v79 = vunpack.c.l.b16 %v38
  %v80 = vunpack.c.l.b16 %v39
  %v81 = vunpack.c.l.b16 %v40
  %v82 = vunpack.c.l.b16 %v41
  %v83 = vpack.c.b16 %v68, %v67
  %v84 = vpack.c.b16 %v70, %v69
  %v85 = vpack.c.b16 %v72, %v71
  %v86 = vpack.c.b16 %v74, %v73
  %v87 = vpack.c.b16 %v76, %v75
  %v88 = vpack.c.b16 %v78, %v77
  %v89 = vpack.c.b16 %v80, %v79
  %v90 = vpack.c.b16 %v82, %v81
  %v100 = vunpack.c.l.b16 %v42
  %v101 = vunpack.c.l.b16 %v43
  %v102 = vunpack.c.l.b16 %v44
  %v103 = vunpack.c.l.b16 %v45
  %v104 = vunpack.c.l.b16 %v46
  %v105 = vunpack.c.l.b16 %v47
  %v106 = vunpack.c.l.b16 %v48
  %v107 = vunpack.c.l.b16 %v49
  %v108 = vunpack.c.l.b16 %v50
  %v109 = vpack.c.b16 %v101, %v100
  %v110 = vpack.c.b16 %v103, %v102
  %v111 = vpack.c.b16 %v105, %v104
  %v112 = vpack.c.b16 %v107, %v106
  %v113 = vpack.c.b16 %v108, %v108
  %vm118 = vcmask 588800
  %v120 = vsel %vm118, %v83, 0
  %v123 = vsel %vm118, %v84, 0
  %v126 = vsel %vm118, %v85, 0
  %v129 = vsel %vm118, %v86, 0
  %v132 = vsel %vm118, %v87, 0
  %v135 = vsel %vm118, %v88, 0
  %v138 = vsel %vm118, %v89, 0
  %v141 = vsel %vm118, %v90, 0
  %vm143 = vcmask 1043456
  %v145 = vsel %vm143, %v113, 0
  %147 = vmatprep.subr.bf16.mxu0 0
  %148 = vmatpush1.bf16.msra.mxu0 %v109
  %149 = vmatprep.subr.bf16.mxu0 0
  %150 = vmatpush1.bf16.msra.mxu0 %v110
  %151 = vmatprep.subr.bf16.mxu0 0
  %152 = vmatpush1.bf16.msra.mxu0 %v111
  %153 = vmatprep.subr.bf16.mxu0 0
  %154 = vmatpush1.bf16.msra.mxu0 %v112
  %155 = vmatprep.subr.bf16.mxu0 0
  %156 = vmatpush1.bf16.msra.mxu0 %v145
  %157 = vmatprep.subr.bf16.mxu0 0
  %158 = vmatpush1.bf16.msra.mxu0 0
  %159 = vmatprep.subr.bf16.mxu0 0
  %160 = vmatpush1.bf16.msra.mxu0 0
  %161 = vmatprep.subr.bf16.mxu0 0
  %162 = vmatpush1.bf16.msra.mxu0 0
  %163 = vmatprep.subr.bf16.mxu0 0
  %164 = vmatpush1.bf16.msra.mxu0 0
  %165 = vmatprep.subr.bf16.mxu0 0
  %166 = vmatpush1.bf16.msra.mxu0 0
  %167 = vmatprep.subr.bf16.mxu0 0
  %168 = vmatpush1.bf16.msra.mxu0 0
  %169 = vmatprep.subr.bf16.mxu0 0
  %170 = vmatpush1.bf16.msra.mxu0 0
  %171 = vmatprep.subr.bf16.mxu0 0
  %172 = vmatpush1.bf16.msra.mxu0 0
  %173 = vmatprep.subr.bf16.mxu0 0
  %174 = vmatpush1.bf16.msra.mxu0 0
  %175 = vmatprep.subr.bf16.mxu0 0
  %176 = vmatpush1.bf16.msra.mxu0 0
  %177 = vmatprep.subr.bf16.mxu0 0
  %178 = vmatpush1.bf16.msra.mxu0 0
  %179 = vmatprep.mubr.bf16.mxu0 0
  %180 = vmatmul.mubr.bf16.gmra.mrb[0].mxu0 %v120
  %v181 = vpop.f32.mrb[0].mxu0
  %v182 = vadd.f32 0.0, %v181
  %v183 = vpop.f32.mrb[0].mxu0
  %v184 = vpop.f32.mrb[0].mxu0
  %v185 = vadd.f32 0.0, %v184
  %v186 = vpop.f32.mrb[0].mxu0
  %187 = vmatprep.mubr.bf16.mxu0 0
  %188 = vmatmul.mubr.bf16.gmra.mrb[0].mxu0 %v123
  %v189 = vpop.f32.mrb[0].mxu0
  %v190 = vadd.f32 0.0, %v189
  %v191 = vpop.f32.mrb[0].mxu0
  %v192 = vpop.f32.mrb[0].mxu0
  %v193 = vadd.f32 0.0, %v192
  %v194 = vpop.f32.mrb[0].mxu0
  %195 = vmatprep.mubr.bf16.mxu0 0
  %196 = vmatmul.mubr.bf16.gmra.mrb[0].mxu0 %v126
  %v197 = vpop.f32.mrb[0].mxu0
  %v198 = vadd.f32 0.0, %v197
  %v199 = vpop.f32.mrb[0].mxu0
  %v200 = vpop.f32.mrb[0].mxu0
  %v201 = vadd.f32 0.0, %v200
  %v202 = vpop.f32.mrb[0].mxu0
  %203 = vmatprep.mubr.bf16.mxu0 0
  %204 = vmatmul.mubr.bf16.gmra.mrb[0].mxu0 %v129
  %v205 = vpop.f32.mrb[0].mxu0
  %v206 = vadd.f32 0.0, %v205
  %v207 = vpop.f32.mrb[0].mxu0
  %v208 = vpop.f32.mrb[0].mxu0
  %v209 = vadd.f32 0.0, %v208
  %v210 = vpop.f32.mrb[0].mxu0
  %211 = vmatprep.mubr.bf16.mxu0 0
  %212 = vmatmul.mubr.bf16.gmra.mrb[0].mxu0 %v132
  %v213 = vpop.f32.mrb[0].mxu0
  %v214 = vadd.f32 0.0, %v213
  %v215 = vpop.f32.mrb[0].mxu0
  %v216 = vpop.f32.mrb[0].mxu0
  %v217 = vadd.f32 0.0, %v216
  %v218 = vpop.f32.mrb[0].mxu0
  %219 = vmatprep.mubr.bf16.mxu0 0
  %220 = vmatmul.mubr.bf16.gmra.mrb[0].mxu0 %v135
  %v221 = vpop.f32.mrb[0].mxu0
  %v222 = vadd.f32 0.0, %v221
  %v223 = vpop.f32.mrb[0].mxu0
  %v224 = vpop.f32.mrb[0].mxu0
  %v225 = vadd.f32 0.0, %v224
  %v226 = vpop.f32.mrb[0].mxu0
  %227 = vmatprep.mubr.bf16.mxu0 0
  %228 = vmatmul.mubr.bf16.gmra.mrb[0].mxu0 %v138
  %v229 = vpop.f32.mrb[0].mxu0
  %v230 = vadd.f32 0.0, %v229
  %v231 = vpop.f32.mrb[0].mxu0
  %v232 = vpop.f32.mrb[0].mxu0
  %v233 = vadd.f32 0.0, %v232
  %v234 = vpop.f32.mrb[0].mxu0
  %235 = vmatprep.mubr.bf16.mxu0 0
  %236 = vmatmul.mubr.bf16.gmra.mrb[0].mxu0 %v141
  %v237 = vpop.f32.mrb[0].mxu0
  %v238 = vadd.f32 0.0, %v237
  %v239 = vpop.f32.mrb[0].mxu0
  %v240 = vpop.f32.mrb[0].mxu0
  %v241 = vadd.f32 0.0, %v240
  %v242 = vpop.f32.mrb[0].mxu0
  %243 = vdwg.mxu0
  %v244 = vld [vmem:[%s2] sm:$0xf]
  %v245 = vld [vmem:[%s2 + $0x4] sm:$0xf]
  %v246 = vld [vmem:[%s2 + $0x8] sm:$0xf]
  %v247 = vld [vmem:[%s2 + $0xc] sm:$0xf]
  %v248 = vld [vmem:[%s2 + $0x10] sm:$0xf]
  %v249 = vld [vmem:[%s2 + $0x14] sm:$0xf]
  %v250 = vld [vmem:[%s2 + $0x18] sm:$0xf]
  %v251 = vld [vmem:[%s2 + $0x1c] sm:$0xf]
  %v252 = vld [vmem:[%s2 + $0x20] sm:$0xf]
  %v253 = vld [vmem:[%s2 + $0x24] sm:$0xf]
  %v254 = vld [vmem:[%s2 + $0x28] sm:$0xf]
  %v255 = vld [vmem:[%s2 + $0x2c] sm:$0xf]
  %v256 = vld [vmem:[%s2 + $0x30] sm:$0xf]
  %v257 = vld [vmem:[%s2 + $0x34] sm:$0xf]
  %v258 = vld [vmem:[%s2 + $0x38] sm:$0xf]
  %v259 = vld [vmem:[%s2 + $0x3c] sm:$0xf]
  %v260 = vld [vmem:[%s3] sm:$0x3]
  %v277 = vunpack.c.l.b16 %v244
  %v278 = vunpack.c.l.b16 %v245
  %v279 = vunpack.c.l.b16 %v246
  %v280 = vunpack.c.l.b16 %v247
  %v281 = vunpack.c.l.b16 %v248
  %v282 = vunpack.c.l.b16 %v249
  %v283 = vunpack.c.l.b16 %v250
  %v284 = vunpack.c.l.b16 %v251
  %v285 = vunpack.c.l.b16 %v252
  %v286 = vunpack.c.l.b16 %v253
  %v287 = vunpack.c.l.b16 %v254
  %v288 = vunpack.c.l.b16 %v255
  %v289 = vunpack.c.l.b16 %v256
  %v290 = vunpack.c.l.b16 %v257
  %v291 = vunpack.c.l.b16 %v258
  %v292 = vunpack.c.l.b16 %v259
  %v293 = vpack.c.b16 %v278, %v277
  %v294 = vpack.c.b16 %v280, %v279
  %v295 = vpack.c.b16 %v282, %v281
  %v296 = vpack.c.b16 %v284, %v283
  %v297 = vpack.c.b16 %v286, %v285
  %v298 = vpack.c.b16 %v288, %v287
  %v299 = vpack.c.b16 %v290, %v289
  %v300 = vpack.c.b16 %v292, %v291
  %vm301 = vcmask 31744
  %v303 = vsel %vm301, %v293, 0
  %v306 = vsel %vm301, %v294, 0
  %v309 = vsel %vm301, %v295, 0
  %v312 = vsel %vm301, %v296, 0
  %v315 = vsel %vm301, %v297, 0
  %v318 = vsel %vm301, %v298, 0
  %v321 = vsel %vm301, %v299, 0
  %v324 = vsel %vm301, %v300, 0
  %vm326 = vcmask 1041408
  %v328 = vsel %vm326, %v260, 0
  %330 = vmatprep.subr.bf16.mxu0 0
  %331 = vmatpush1.bf16.msra.mxu0 %v328
  %332 = vmatprep.subr.bf16.mxu0 0
  %333 = vmatpush1.bf16.msra.mxu0 0
  %334 = vmatprep.subr.bf16.mxu0 0
  %335 = vmatpush1.bf16.msra.mxu0 0
  %336 = vmatprep.subr.bf16.mxu0 0
  %337 = vmatpush1.bf16.msra.mxu0 0
  %338 = vmatprep.subr.bf16.mxu0 0
  %339 = vmatpush1.bf16.msra.mxu0 0
  %340 = vmatprep.subr.bf16.mxu0 0
  %341 = vmatpush1.bf16.msra.mxu0 0
  %342 = vmatprep.subr.bf16.mxu0 0
  %343 = vmatpush1.bf16.msra.mxu0 0
  %344 = vmatprep.subr.bf16.mxu0 0
  %345 = vmatpush1.bf16.msra.mxu0 0
  %346 = vmatprep.subr.bf16.mxu0 0
  %347 = vmatpush1.bf16.msra.mxu0 0
  %348 = vmatprep.subr.bf16.mxu0 0
  %349 = vmatpush1.bf16.msra.mxu0 0
  %350 = vmatprep.subr.bf16.mxu0 0
  %351 = vmatpush1.bf16.msra.mxu0 0
  %352 = vmatprep.subr.bf16.mxu0 0
  %353 = vmatpush1.bf16.msra.mxu0 0
  %354 = vmatprep.subr.bf16.mxu0 0
  %355 = vmatpush1.bf16.msra.mxu0 0
  %356 = vmatprep.subr.bf16.mxu0 0
  %357 = vmatpush1.bf16.msra.mxu0 0
  %358 = vmatprep.subr.bf16.mxu0 0
  %359 = vmatpush1.bf16.msra.mxu0 0
  %360 = vmatprep.subr.bf16.mxu0 0
  %361 = vmatpush1.bf16.msra.mxu0 0
  %362 = vmatprep.mubr.bf16.mxu0 0
  %363 = vmatmul.mubr.bf16.gmra.mrb[0].mxu0 %v303
  %v364 = vpop.f32.mrb[0].mxu0
  %v365 = vadd.f32 0.0, %v364
  %v366 = vpop.f32.mrb[0].mxu0
  %v367 = vpop.f32.mrb[0].mxu0
  %v368 = vadd.f32 0.0, %v367
  %v369 = vpop.f32.mrb[0].mxu0
  %370 = vmatprep.mubr.bf16.mxu0 0
  %371 = vmatmul.mubr.bf16.gmra.mrb[0].mxu0 %v306
  %v372 = vpop.f32.mrb[0].mxu0
  %v373 = vadd.f32 0.0, %v372
  %v374 = vpop.f32.mrb[0].mxu0
  %v375 = vpop.f32.mrb[0].mxu0
  %v376 = vadd.f32 0.0, %v375
  %v377 = vpop.f32.mrb[0].mxu0
  %378 = vmatprep.mubr.bf16.mxu0 0
  %379 = vmatmul.mubr.bf16.gmra.mrb[0].mxu0 %v309
  %v380 = vpop.f32.mrb[0].mxu0
  %v381 = vadd.f32 0.0, %v380
  %v382 = vpop.f32.mrb[0].mxu0
  %v383 = vpop.f32.mrb[0].mxu0
  %v384 = vadd.f32 0.0, %v383
  %v385 = vpop.f32.mrb[0].mxu0
  %386 = vmatprep.mubr.bf16.mxu0 0
  %387 = vmatmul.mubr.bf16.gmra.mrb[0].mxu0 %v312
  %v388 = vpop.f32.mrb[0].mxu0
  %v389 = vadd.f32 0.0, %v388
  %v390 = vpop.f32.mrb[0].mxu0
  %v391 = vpop.f32.mrb[0].mxu0
  %v392 = vadd.f32 0.0, %v391
  %v393 = vpop.f32.mrb[0].mxu0
  %394 = vmatprep.mubr.bf16.mxu0 0
  %395 = vmatmul.mubr.bf16.gmra.mrb[0].mxu0 %v315
  %v396 = vpop.f32.mrb[0].mxu0
  %v397 = vadd.f32 0.0, %v396
  %v398 = vpop.f32.mrb[0].mxu0
  %v399 = vpop.f32.mrb[0].mxu0
  %v400 = vadd.f32 0.0, %v399
  %v401 = vpop.f32.mrb[0].mxu0
  %402 = vmatprep.mubr.bf16.mxu0 0
  %403 = vmatmul.mubr.bf16.gmra.mrb[0].mxu0 %v318
  %v404 = vpop.f32.mrb[0].mxu0
  %v405 = vadd.f32 0.0, %v404
  %v406 = vpop.f32.mrb[0].mxu0
  %v407 = vpop.f32.mrb[0].mxu0
  %v408 = vadd.f32 0.0, %v407
  %v409 = vpop.f32.mrb[0].mxu0
  %410 = vmatprep.mubr.bf16.mxu0 0
  %411 = vmatmul.mubr.bf16.gmra.mrb[0].mxu0 %v321
  %v412 = vpop.f32.mrb[0].mxu0
  %v413 = vadd.f32 0.0, %v412
  %v414 = vpop.f32.mrb[0].mxu0
  %v415 = vpop.f32.mrb[0].mxu0
  %v416 = vadd.f32 0.0, %v415
  %v417 = vpop.f32.mrb[0].mxu0
  %418 = vmatprep.mubr.bf16.mxu0 0
  %419 = vmatmul.mubr.bf16.gmra.mrb[0].mxu0 %v324
  %v420 = vpop.f32.mrb[0].mxu0
  %v421 = vadd.f32 0.0, %v420
  %v422 = vpop.f32.mrb[0].mxu0
  %v423 = vpop.f32.mrb[0].mxu0
  %v424 = vadd.f32 0.0, %v423
  %v425 = vpop.f32.mrb[0].mxu0
  %426 = vdwg.mxu0
  %v427 = vpack.c.bf16 %v185, %v182
  %v428 = vpack.c.bf16 %v193, %v190
  %v429 = vpack.c.bf16 %v201, %v198
  %v430 = vpack.c.bf16 %v209, %v206
  %v431 = vpack.c.bf16 %v217, %v214
  %v432 = vpack.c.bf16 %v225, %v222
  %v433 = vpack.c.bf16 %v233, %v230
  %v434 = vpack.c.bf16 %v241, %v238
  %v443 = vunpack.c.l.b16 %v427
  %v444 = vunpack.c.h.b16 %v427
  %v445 = vunpack.c.l.b16 %v428
  %v446 = vunpack.c.h.b16 %v428
  %v447 = vunpack.c.l.b16 %v429
  %v448 = vunpack.c.h.b16 %v429
  %v449 = vunpack.c.l.b16 %v430
  %v450 = vunpack.c.h.b16 %v430
  %v451 = vunpack.c.l.b16 %v431
  %v452 = vunpack.c.h.b16 %v431
  %v453 = vunpack.c.l.b16 %v432
  %v454 = vunpack.c.h.b16 %v432
  %v455 = vunpack.c.l.b16 %v433
  %v456 = vunpack.c.h.b16 %v433
  %v457 = vunpack.c.l.b16 %v434
  %v458 = vunpack.c.h.b16 %v434
  %v459 = vpack.c.b16 %v443, %v443
  %v460 = vpack.c.b16 %v444, %v444
  %v461 = vpack.c.b16 %v445, %v445
  %v462 = vpack.c.b16 %v446, %v446
  %v463 = vpack.c.b16 %v447, %v447
  %v464 = vpack.c.b16 %v448, %v448
  %v465 = vpack.c.b16 %v449, %v449
  %v466 = vpack.c.b16 %v450, %v450
  %v467 = vpack.c.b16 %v451, %v451
  %v468 = vpack.c.b16 %v452, %v452
  %v469 = vpack.c.b16 %v453, %v453
  %v470 = vpack.c.b16 %v454, %v454
  %v471 = vpack.c.b16 %v455, %v455
  %v472 = vpack.c.b16 %v456, %v456
  %v473 = vpack.c.b16 %v457, %v457
  %v474 = vpack.c.b16 %v458, %v458
  %491 = vst [vmem:[%s4] sm:$0xf] %v459
  %492 = vst [vmem:[%s4 + $0x4] sm:$0xf] %v460
  %493 = vst [vmem:[%s4 + $0x8] sm:$0xf] %v461
  %494 = vst [vmem:[%s4 + $0xc] sm:$0xf] %v462
  %495 = vst [vmem:[%s4 + $0x10] sm:$0xf] %v463
  %496 = vst [vmem:[%s4 + $0x14] sm:$0xf] %v464
  %497 = vst [vmem:[%s4 + $0x18] sm:$0xf] %v465
  %498 = vst [vmem:[%s4 + $0x1c] sm:$0xf] %v466
  %499 = vst [vmem:[%s4 + $0x20] sm:$0xf] %v467
  %500 = vst [vmem:[%s4 + $0x24] sm:$0xf] %v468
  %501 = vst [vmem:[%s4 + $0x28] sm:$0xf] %v469
  %502 = vst [vmem:[%s4 + $0x2c] sm:$0xf] %v470
  %503 = vst [vmem:[%s4 + $0x30] sm:$0xf] %v471
  %504 = vst [vmem:[%s4 + $0x34] sm:$0xf] %v472
  %505 = vst [vmem:[%s4 + $0x38] sm:$0xf] %v473
  %506 = vst [vmem:[%s4 + $0x3c] sm:$0xf] %v474
  %v507 = vpack.c.bf16 %v368, %v365
  %v508 = vpack.c.bf16 %v376, %v373
  %v509 = vpack.c.bf16 %v384, %v381
  %v510 = vpack.c.bf16 %v392, %v389
  %v511 = vpack.c.bf16 %v400, %v397
  %v512 = vpack.c.bf16 %v408, %v405
  %v513 = vpack.c.bf16 %v416, %v413
  %v514 = vpack.c.bf16 %v424, %v421
  %v523 = vunpack.c.l.b16 %v507
  %v524 = vunpack.c.h.b16 %v507
  %v525 = vunpack.c.l.b16 %v508
  %v526 = vunpack.c.h.b16 %v508
  %v527 = vunpack.c.l.b16 %v509
  %v528 = vunpack.c.h.b16 %v509
  %v529 = vunpack.c.l.b16 %v510
  %v530 = vunpack.c.h.b16 %v510
  %v531 = vunpack.c.l.b16 %v511
  %v532 = vunpack.c.h.b16 %v511
  %v533 = vunpack.c.l.b16 %v512
  %v534 = vunpack.c.h.b16 %v512
  %v535 = vunpack.c.l.b16 %v513
  %v536 = vunpack.c.h.b16 %v513
  %v537 = vunpack.c.l.b16 %v514
  %v538 = vunpack.c.h.b16 %v514
  %v539 = vpack.c.b16 %v523, %v523
  %v540 = vpack.c.b16 %v524, %v524
  %v541 = vpack.c.b16 %v525, %v525
  %v542 = vpack.c.b16 %v526, %v526
  %v543 = vpack.c.b16 %v527, %v527
  %v544 = vpack.c.b16 %v528, %v528
  %v545 = vpack.c.b16 %v529, %v529
  %v546 = vpack.c.b16 %v530, %v530
  %v547 = vpack.c.b16 %v531, %v531
  %v548 = vpack.c.b16 %v532, %v532
  %v549 = vpack.c.b16 %v533, %v533
  %v550 = vpack.c.b16 %v534, %v534
  %v551 = vpack.c.b16 %v535, %v535
  %v552 = vpack.c.b16 %v536, %v536
  %v553 = vpack.c.b16 %v537, %v537
  %v554 = vpack.c.b16 %v538, %v538
  %571 = vst [vmem:[%s5] sm:$0xf] %v539
  %572 = vst [vmem:[%s5 + $0x4] sm:$0xf] %v540
  %573 = vst [vmem:[%s5 + $0x8] sm:$0xf] %v541
  %574 = vst [vmem:[%s5 + $0xc] sm:$0xf] %v542
  %575 = vst [vmem:[%s5 + $0x10] sm:$0xf] %v543
  %576 = vst [vmem:[%s5 + $0x14] sm:$0xf] %v544
  %577 = vst [vmem:[%s5 + $0x18] sm:$0xf] %v545
  %578 = vst [vmem:[%s5 + $0x1c] sm:$0xf] %v546
  %579 = vst [vmem:[%s5 + $0x20] sm:$0xf] %v547
  %580 = vst [vmem:[%s5 + $0x24] sm:$0xf] %v548
  %581 = vst [vmem:[%s5 + $0x28] sm:$0xf] %v549
  %582 = vst [vmem:[%s5 + $0x2c] sm:$0xf] %v550
  %583 = vst [vmem:[%s5 + $0x30] sm:$0xf] %v551
  %584 = vst [vmem:[%s5 + $0x34] sm:$0xf] %v552
  %585 = vst [vmem:[%s5 + $0x38] sm:$0xf] %v553
  %586 = vst [vmem:[%s5 + $0x3c] sm:$0xf] %v554
  %v587 = vld [vmem:[#allocation2] sm:$0x1]
  %v588 = vadd.f32 %v182, %v185
  %v589 = vadd.f32 %v588, %v190
  %v590 = vadd.f32 %v589, %v193
  %v591 = vadd.f32 %v590, %v198
  %v592 = vadd.f32 %v591, %v201
  %v593 = vadd.f32 %v592, %v206
  %v594 = vadd.f32 %v593, %v209
  %v595 = vadd.f32 %v594, %v214
  %v596 = vadd.f32 %v595, %v217
  %v597 = vadd.f32 %v596, %v222
  %v598 = vadd.f32 %v597, %v225
  %v599 = vadd.f32 %v598, %v230
  %v600 = vadd.f32 %v599, %v233
  %v601 = vadd.f32 %v600, %v238
  %v602 = vadd.f32 %v601, %v241
  %v603 = vrot.slane %v602, 4
  %v604 = vadd.f32 %v602, %v603
  %v605 = vrot.slane %v604, 2
  %v606 = vadd.f32 %v604, %v605
  %v607 = vrot.slane %v606, 1
  %v608 = vadd.f32 %v606, %v607
  %v609 = vadd.f32 %v587, %v608
  %610 = vst [vmem:[#allocation2] sm:$0x1] %v609
  %v611 = vld [vmem:[#allocation2 + $0x1] sm:$0x1]
  %v612 = vmul.f32 %v182, %v182
  %v613 = vmul.f32 %v185, %v185
  %v614 = vmul.f32 %v190, %v190
  %v615 = vmul.f32 %v193, %v193
  %v616 = vmul.f32 %v198, %v198
  %v617 = vmul.f32 %v201, %v201
  %v618 = vmul.f32 %v206, %v206
  %v619 = vmul.f32 %v209, %v209
  %v620 = vmul.f32 %v214, %v214
  %v621 = vmul.f32 %v217, %v217
  %v622 = vmul.f32 %v222, %v222
  %v623 = vmul.f32 %v225, %v225
  %v624 = vmul.f32 %v230, %v230
  %v625 = vmul.f32 %v233, %v233
  %v626 = vmul.f32 %v238, %v238
  %v627 = vmul.f32 %v241, %v241
  %v628 = vadd.f32 %v612, %v613
  %v629 = vadd.f32 %v628, %v614
  %v630 = vadd.f32 %v629, %v615
  %v631 = vadd.f32 %v630, %v616
  %v632 = vadd.f32 %v631, %v617
  %v633 = vadd.f32 %v632, %v618
  %v634 = vadd.f32 %v633, %v619
  %v635 = vadd.f32 %v634, %v620
  %v636 = vadd.f32 %v635, %v621
  %v637 = vadd.f32 %v636, %v622
  %v638 = vadd.f32 %v637, %v623
  %v639 = vadd.f32 %v638, %v624
  %v640 = vadd.f32 %v639, %v625
  %v641 = vadd.f32 %v640, %v626
  %v642 = vadd.f32 %v641, %v627
  %v643 = vrot.slane %v642, 4
  %v644 = vadd.f32 %v642, %v643
  %v645 = vrot.slane %v644, 2
  %v646 = vadd.f32 %v644, %v645
  %v647 = vrot.slane %v646, 1
  %v648 = vadd.f32 %v646, %v647
  %v649 = vadd.f32 %v611, %v648
  %650 = vst [vmem:[#allocation2 + $0x1] sm:$0x1] %v649
  %v651 = vld [vmem:[#allocation2 + $0x2] sm:$0x1]
  %v652 = vadd.f32 %v365, %v368
  %v653 = vadd.f32 %v652, %v373
  %v654 = vadd.f32 %v653, %v376
  %v655 = vadd.f32 %v654, %v381
  %v656 = vadd.f32 %v655, %v384
  %v657 = vadd.f32 %v656, %v389
  %v658 = vadd.f32 %v657, %v392
  %v659 = vadd.f32 %v658, %v397
  %v660 = vadd.f32 %v659, %v400
  %v661 = vadd.f32 %v660, %v405
  %v662 = vadd.f32 %v661, %v408
  %v663 = vadd.f32 %v662, %v413
  %v664 = vadd.f32 %v663, %v416
  %v665 = vadd.f32 %v664, %v421
  %v666 = vadd.f32 %v665, %v424
  %v667 = vrot.slane %v666, 4
  %v668 = vadd.f32 %v666, %v667
  %v669 = vrot.slane %v668, 2
  %v670 = vadd.f32 %v668, %v669
  %v671 = vrot.slane %v670, 1
  %v672 = vadd.f32 %v670, %v671
  %v673 = vadd.f32 %v651, %v672
  %674 = vst [vmem:[#allocation2 + $0x2] sm:$0x1] %v673
  %v675 = vld [vmem:[#allocation2 + $0x3] sm:$0x1]
  %v676 = vmul.f32 %v365, %v365
  %v677 = vmul.f32 %v368, %v368
  %v678 = vmul.f32 %v373, %v373
  %v679 = vmul.f32 %v376, %v376
  %v680 = vmul.f32 %v381, %v381
  %v681 = vmul.f32 %v384, %v384
  %v682 = vmul.f32 %v389, %v389
  %v683 = vmul.f32 %v392, %v392
  %v684 = vmul.f32 %v397, %v397
  %v685 = vmul.f32 %v400, %v400
  %v686 = vmul.f32 %v405, %v405
  %v687 = vmul.f32 %v408, %v408
  %v688 = vmul.f32 %v413, %v413
  %v689 = vmul.f32 %v416, %v416
  %v690 = vmul.f32 %v421, %v421
  %v691 = vmul.f32 %v424, %v424
  %v692 = vadd.f32 %v676, %v677
  %v693 = vadd.f32 %v692, %v678
  %v694 = vadd.f32 %v693, %v679
  %v695 = vadd.f32 %v694, %v680
  %v696 = vadd.f32 %v695, %v681
  %v697 = vadd.f32 %v696, %v682
  %v698 = vadd.f32 %v697, %v683
  %v699 = vadd.f32 %v698, %v684
  %v700 = vadd.f32 %v699, %v685
  %v701 = vadd.f32 %v700, %v686
  %v702 = vadd.f32 %v701, %v687
  %v703 = vadd.f32 %v702, %v688
  %v704 = vadd.f32 %v703, %v689
  %v705 = vadd.f32 %v704, %v690
  %v706 = vadd.f32 %v705, %v691
  %v707 = vrot.slane %v706, 4
  %v708 = vadd.f32 %v706, %v707
  %v709 = vrot.slane %v708, 2
  %v710 = vadd.f32 %v708, %v709
  %v711 = vrot.slane %v710, 1
  %v712 = vadd.f32 %v710, %v711
  %v713 = vadd.f32 %v675, %v712
  %714 = vst [vmem:[#allocation2 + $0x3] sm:$0x1] %v713
  // Predicated region
  $region22: #{residual_block_forward.6} parent=0 // pred_check
    %p715 = pneg %p21
  $region23: #{residual_block_forward.6} parent=0 // pred_check_branch
    %717 = sbr.rel (%p715) target = $region25
  $region24: #{residual_block_forward.6} parent=0 // pred_region
    %v718 = vld [vmem:[#allocation2] sm:$0xf]
    %719 = vst [vmem:[%s6] sm:$0xf] %v718
  $region25: #{residual_block_forward.6} parent=0 // pred_fallthru
    _
  // Predicated region
  $region26: #{residual_block_forward.6} parent=0 // pred_check
    _
  $region27: #{residual_block_forward.6} parent=0 // pred_check_branch
    %721 = sbr.rel (0) target = $region29
  $region28: #{residual_block_forward.6} parent=0 // pred_region
    _
  $region29: #{residual_block_forward.6} parent=0 // pred_fallthru
    _
  // Predicated region
  $region30: #{residual_block_forward.6} parent=0 // pred_check
    _
  $region31: #{residual_block_forward.6} parent=0 // pred_check_branch
    %723 = sbr.rel (0) target = $region33
  $region32: #{residual_block_forward.6} parent=0 // pred_region
    _
  $region33: #{residual_block_forward.6} parent=0 // pred_fallthru
    _
  // Predicated region
  $region34: #{residual_block_forward.6} parent=0 // pred_check
    _
  $region35: #{residual_block_forward.6} parent=0 // pred_check_branch
    %725 = sbr.rel (0) target = $region37
  $region36: #{residual_block_forward.6} parent=0 // pred_region
    _
  $region37: #{residual_block_forward.6} parent=0 // pred_fallthru
    _
  // Predicated region
  $region38: #{residual_block_forward.6} parent=0 // pred_check
    _
  $region39: #{residual_block_forward.6} parent=0 // pred_check_branch
    %727 = sbr.rel (0) target = $region41
  $region40: #{residual_block_forward.6} parent=0 // pred_region
    _
  $region41: #{residual_block_forward.6} parent=0 // pred_fallthru
    _
  // Predicated region
  $region42: #{residual_block_forward.6} parent=0 // pred_check
    _
  $region43: #{residual_block_forward.6} parent=0 // pred_check_branch
    %729 = sbr.rel (0) target = $region45
  $region44: #{residual_block_forward.6} parent=0 // pred_region
    _
  $region45: #{residual_block_forward.6} parent=0 // pred_fallthru
    _
  // Predicated region
  $region46: #{residual_block_forward.6} parent=0 // pred_check
    _
  $region47: #{residual_block_forward.6} parent=0 // pred_check_branch
    %731 = sbr.rel (0) target = $region49
  $region48: #{residual_block_forward.6} parent=0 // pred_region
    _
  $region49: #{residual_block_forward.6} parent=0 // pred_fallthru
    _

</llo_original>
